<compile_context>
chip_gen: v5e
topology: v5e:2x2
jax: 0.10.0
libtpu: 0.0.40
codegen_flags: <defaults>
</compile_context>

<pallas_src>
import jax
import jax.numpy as jnp
from jax import lax
from jax.experimental import pallas as pl
from jax.experimental.pallas import tpu as pltpu

_BN_EPS = 1e-5


def _round_up(n, m):
    return ((n + m - 1) // m) * m


# ------------------------------- BN folding --------------------------------- #

def _fold_bn(bn):
    # eval-mode BN folded into per-channel affine: y = x*scale + shift
    scale = bn["gamma"] / jnp.sqrt(bn["var"] + _BN_EPS)
    shift = bn["beta"] - bn["mean"] * scale
    return scale, shift


def svd_weight(N, C, Sigma, out_c, in_c, k):
    """SVD_Conv2d ('channel') effective weight: N @ diag(|Sigma|) @ C -> OIHW."""
    W = (N * jnp.abs(Sigma)[None, :]) @ C
    return W.reshape(out_c, in_c, k, k)


# ------------------------------- JAX wrapper -------------------------------- #

def bottleneck_forward(x_nchw, params, stride=1):
    Nb, Cin, H, W = x_nchw.shape
    C1 = params["W1"].shape[0]          # planes
    C2 = params["W2"].shape[0]          # planes
    C3 = params["W3"].shape[0]          # planes * 4
    assert stride == 1 and Cin == C3, \
        "downsample=None requires stride=1 and inplanes == planes*4"
    # TODO(synk): stride!=1 / downsample / 'spatial' decompose not implemented.

    Cin_p, C1p, C2p, C3p = (_round_up(c, 128) for c in (Cin, C1, C2, C3))
    assert Cin_p == C3p
    HW = H * W
    # Scratch width: 8-col left halo (store alignment), 1-col right halo, col 7
    # is the 3x3 conv's left zero pad, interior at cols [8, 8+W).
    Wp = _round_up(W + 9, 8)

    s1, t1 = _fold_bn(params["bn1"])
    s2, t2 = _fold_bn(params["bn2"])
    s3, t3 = _fold_bn(params["bn3"])

    # conv1: OIHW (C1,Cin,1,1) -> (Cin_p, C1p), BN scale folded, bf16.
    w1 = (params["W1"].reshape(C1, Cin) * s1[:, None]).T
    w1 = jnp.pad(w1, ((0, Cin_p - Cin), (0, C1p - C1))).astype(jnp.bfloat16)
    b1 = jnp.pad(t1, (0, C1p - C1)).reshape(1, C1p).astype(jnp.float32)

    # conv2: OIHW (C2,C1,3,3) -> (9, C1p, C2p), tap index t = kh*3 + kw.
    w2 = jnp.transpose(params["W2"] * s2[:, None, None, None], (2, 3, 1, 0))
    w2 = w2.reshape(9, C1, C2)
    w2 = jnp.pad(w2, ((0, 0), (0, C1p - C1), (0, C2p - C2))).astype(jnp.bfloat16)
    b2 = jnp.pad(t2, (0, C2p - C2)).reshape(1, C2p).astype(jnp.float32)

    # conv3: OIHW (C3,C2,1,1) -> (C2p, C3p).
    w3 = (params["W3"].reshape(C3, C2) * s3[:, None]).T
    w3 = jnp.pad(w3, ((0, C2p - C2), (0, C3p - C3))).astype(jnp.bfloat16)
    b3 = jnp.pad(t3, (0, C3p - C3)).reshape(1, C3p).astype(jnp.float32)

    # Activations: NCHW -> (Nb, H*W, Cin_p), lane-dense channels, bf16.
    x_nhwc = jnp.transpose(x_nchw, (0, 2, 3, 1))
    xp = jnp.pad(x_nhwc, ((0, 0), (0, 0), (0, 0), (0, Cin_p - Cin)))
    xp = xp.reshape(Nb, HW, Cin_p).astype(jnp.bfloat16)

    # ---------------------------- fused kernel ------------------------------ #
    def kernel(x_ref, w1_ref, b1_ref, w2_ref, b2_ref, w3_ref, b3_ref,
               o_ref, h1_ref):
        # Zero only the halo border (rows 0 / H+1 over cols [7, 9+W), and the
        # two pad columns 7 and 8+W).  Interior is fully rewritten below, so
        # this is correct regardless of how the grid is scheduled (megacore).
        zrow = jnp.zeros((W + 2, C1p), dtype=h1_ref.dtype)
        h1_ref[0, pl.ds(7, W + 2), :] = zrow
        h1_ref[H + 1, pl.ds(7, W + 2), :] = zrow
        zcol = jnp.zeros((H, 1, C1p), dtype=h1_ref.dtype)
        h1_ref[pl.ds(1, H), pl.ds(7, 1), :] = zcol
        h1_ref[pl.ds(1, H), pl.ds(8 + W, 1), :] = zcol

        # ---- conv1 (1x1) + bn1 + relu: one (H*W, Cin_p)@(Cin_p, C1p) matmul --
        y1 = jnp.dot(x_ref[0], w1_ref[...], preferred_element_type=jnp.float32)
        y1 = jnp.maximum(y1 + b1_ref[...], 0.0)
        # Aligned writeback into the halo scratch (interior starts at column 8).
        h1_ref[pl.ds(1, H), pl.ds(8, W), :] = (
            y1.astype(h1_ref.dtype).reshape(H, W, C1p))

        # ---- conv2 (3x3, pad=1) + bn2: 9 accumulating per-tap dots ----------
        # output(i, j) = sum_{kh,kw} h1_pad[i+kh, j+kw] @ W2[kh, kw]
        # h1_pad[p, q] lives at scratch[p, q + 7].
        y2 = None
        for t in range(9):
            kh, kw = divmod(t, 3)
            tap = h1_ref[pl.ds(kh, H), pl.ds(7 + kw, W), :].reshape(HW, C1p)
            d = jnp.dot(tap, w2_ref[t], preferred_element_type=jnp.float32)
            y2 = d if y2 is None else y2 + d
        y2 = y2 + b2_ref[...]

        # ---- conv3 (1x1) + bn3 + residual + relu -----------------------------
        # NOTE: no ReLU between bn2 and conv3 (matches the reference module).
        y3 = jnp.dot(y2.astype(jnp.bfloat16), w3_ref[...],
                     preferred_element_type=jnp.float32) + b3_ref[...]
        res = x_ref[0].astype(jnp.float32)      # identity residual (Cin == 4*planes)
        o_ref[0] = jnp.maximum(y3 + res, 0.0).astype(o_ref.dtype)

    # Cost / VMEM sizing.
    flops = 2 * Nb * HW * (Cin_p * C1p + 9 * C1p * C2p + C2p * C3p)
    bytes_accessed = (Nb * HW * Cin_p * 2            # input  (bf16)
                      + Nb * HW * C3p * 2            # output (bf16)
                      + (Cin_p * C1p + 9 * C1p * C2p + C2p * C3p) * 2
                      + (C1p + C2p + C3p) * 4)
    wbytes = ((Cin_p * C1p + 9 * C1p * C2p + C2p * C3p) * 2
              + (C1p + C2p + C3p) * 4)
    io_bytes = 2 * HW * (Cin_p + C3p) * 2 * 2        # double-buffered bf16 in/out
    scr_bytes = (H + 2) * Wp * C1p * 2
    tmp_bytes = 2 * HW * (C1p + C2p + C3p) * 4       # f32 intermediates headroom
    vmem_limit = int(min(64 << 20,
                         max(32 << 20,
                             2 * (2 * wbytes + io_bytes + scr_bytes + tmp_bytes))))

    out = pl.pallas_call(
        kernel,
        out_shape=jax.ShapeDtypeStruct((Nb, HW, C3p), jnp.bfloat16),
        grid=(Nb,),
        in_specs=[
            pl.BlockSpec((1, HW, Cin_p), lambda n: (n, 0, 0)),
            pl.BlockSpec((Cin_p, C1p), lambda n: (0, 0)),
            pl.BlockSpec((1, C1p), lambda n: (0, 0)),
            pl.BlockSpec((9, C1p, C2p), lambda n: (0, 0, 0)),
            pl.BlockSpec((1, C2p), lambda n: (0, 0)),
            pl.BlockSpec((C2p, C3p), lambda n: (0, 0)),
            pl.BlockSpec((1, C3p), lambda n: (0, 0)),
        ],
        out_specs=pl.BlockSpec((1, HW, C3p), lambda n: (n, 0, 0)),
        scratch_shapes=[pltpu.VMEM((H + 2, Wp, C1p), jnp.bfloat16)],
        compiler_params=pltpu.CompilerParams(
            dimension_semantics=("parallel",),
            vmem_limit_bytes=vmem_limit),
        cost_estimate=pl.CostEstimate(flops=flops, transcendentals=0,
                                      bytes_accessed=bytes_accessed),
    )(xp, w1, b1, w2, b2, w3, b3)

    out = out.reshape(Nb, H, W, C3p)[..., :C3]
    return jnp.transpose(out, (0, 3, 1, 2)).astype(jnp.float32)


# ------------------------------- reference ---------------------------------- #

def _ref_conv(x, w, stride, pad):
    return lax.conv_general_dilated(
        x, w, (stride, stride), [(pad, pad), (pad, pad)],
        dimension_numbers=("NCHW", "OIHW", "NCHW"))


def reference_bottleneck(x, params, stride=1):
    """Same folded-BN / bf16-quantized math as the kernel, via lax.conv."""
    bf = lambda a: a.astype(jnp.bfloat16).astype(jnp.float32)
    s1, t1 = _fold_bn(params["bn1"])
    s2, t2 = _fold_bn(params["bn2"])
    s3, t3 = _fold_bn(params["bn3"])
    W1 = bf(params["W1"] * s1[:, None, None, None])
    W2 = bf(params["W2"] * s2[:, None, None, None])
    W3 = bf(params["W3"] * s3[:, None, None, None])
    xb = bf(x)
    h = jax.nn.relu(_ref_conv(xb, W1, 1, 0) + t1[None, :, None, None])
    h = bf(h)
    h = _ref_conv(h, W2, stride, 1) + t2[None, :, None, None]
    h = bf(h)
    h = _ref_conv(h, W3, 1, 0) + t3[None, :, None, None]
    return bf(jax.nn.relu(h + xb))     # kernel emits bf16 output


# ------------------------------ init / main --------------------------------- #

def _kaiming(key, shape):
    return jax.random.normal(key, shape, jnp.float32) * jnp.sqrt(2.0 / shape[1])


def init_params(key, inplanes, planes):
    ks = jax.random.split(key, 12)

    def svd_params(k0, k1, k2, out_c, in_c, ksz):
        r = min(out_c, in_c * ksz * ksz)
        N = _kaiming(k0, (out_c, r))
        C = _kaiming(k1, (r, in_c * ksz * ksz))
        Sigma = jax.random.normal(k2, (r,), jnp.float32)
        return svd_weight(N, C, Sigma, out_c, in_c, ksz)

    def bn_params(k, c):   # randomized running stats to exercise BN folding
        k1, k2, k3, k4 = jax.random.split(k, 4)
        return dict(gamma=jax.random.uniform(k1, (c,), jnp.float32, 0.5, 1.5),
                    beta=0.1 * jax.random.normal(k2, (c,), jnp.float32),
                    mean=0.1 * jax.random.normal(k3, (c,), jnp.float32),
                    var=jax.random.uniform(k4, (c,), jnp.float32, 0.5, 1.5))

    return dict(
        W1=svd_params(ks[0], ks[1], ks[2], planes, inplanes, 1),
        W2=svd_params(ks[3], ks[4], ks[5], planes, planes, 3),
        W3=svd_params(ks[6], ks[7], ks[8], planes * 4, planes, 1),
        bn1=bn_params(ks[9], planes),
        bn2=bn_params(ks[10], planes),
        bn3=bn_params(ks[11], planes * 4),
    )


if __name__ == "__main__":
    key = jax.random.PRNGKey(0)
    k_x, k_p = jax.random.split(key)

    planes = 4
    inplanes = planes * 4          # downsample=None => inplanes == planes*expansion
    Nb, H, W = 2, 16, 16

    x = jax.random.normal(k_x, (Nb, inplanes, H, W), jnp.float32)
    params = init_params(k_p, inplanes, planes)

    fwd = jax.jit(bottleneck_forward)
    y = jax.block_until_ready(fwd(x, params))

    y_ref = reference_bottleneck(x, params)
    assert y.shape == (Nb, planes * 4, H, W), y.shape
    err = jnp.abs(y - y_ref)
    tol = 5e-2 + 2.5e-2 * jnp.abs(y_ref)   # abs + rel (covers bf16 output rounding)
    assert bool(jnp.all(err <= tol)), \
        f"mismatch vs reference, worst excess = {float(jnp.max(err - tol))}"

    print("KERNEL_OK")
</pallas_src>

<mosaic_0001>
module attributes {stable_mosaic.version = 11 : i64} {
  func.func @kernel(%arg0: i32, %arg1: memref<1x256x128xbf16, #tpu.memory_space<vmem>>, %arg2: memref<128x128xbf16, #tpu.memory_space<vmem>>, %arg3: memref<1x128xf32, #tpu.memory_space<vmem>>, %arg4: memref<9x128x128xbf16, #tpu.memory_space<vmem>>, %arg5: memref<1x128xf32, #tpu.memory_space<vmem>>, %arg6: memref<128x128xbf16, #tpu.memory_space<vmem>>, %arg7: memref<1x128xf32, #tpu.memory_space<vmem>>, %arg8: memref<1x256x128xbf16, #tpu.memory_space<vmem>>, %arg9: memref<18x32x128xbf16, #tpu.memory_space<vmem>>) attributes {dimension_semantics = [#tpu.dimension_semantics<parallel>], iteration_bounds = array<i64: 2>, scalar_prefetch = 0 : i64, scratch_operands = 1 : i64, tpu.core_type = #tpu.core_type<tc>, window_params = [{transform_indices = @transform_0, window_bounds = array<i64: 1, 256, 128>}, {pipeline_mode = #tpu.pipeline_mode<synchronous>, transform_indices = @transform_1, window_bounds = array<i64: 128, 128>}, {pipeline_mode = #tpu.pipeline_mode<synchronous>, transform_indices = @transform_2, window_bounds = array<i64: 1, 128>}, {pipeline_mode = #tpu.pipeline_mode<synchronous>, transform_indices = @transform_3, window_bounds = array<i64: 9, 128, 128>}, {pipeline_mode = #tpu.pipeline_mode<synchronous>, transform_indices = @transform_4, window_bounds = array<i64: 1, 128>}, {pipeline_mode = #tpu.pipeline_mode<synchronous>, transform_indices = @transform_5, window_bounds = array<i64: 128, 128>}, {pipeline_mode = #tpu.pipeline_mode<synchronous>, transform_indices = @transform_6, window_bounds = array<i64: 1, 128>}, {transform_indices = @transform_7, window_bounds = array<i64: 1, 256, 128>}]} {
    %cst = arith.constant 0.000000e+00 : bf16
    %0 = vector.broadcast %cst : bf16 to vector<18x128xbf16>
    %c0 = arith.constant 0 : index
    %c7 = arith.constant 7 : index
    %c0_0 = arith.constant 0 : index
    %1 = vector.load %arg9[%c0, %c7, %c0_0] : memref<18x32x128xbf16, #tpu.memory_space<vmem>>, vector<1x18x128xbf16>
    %2 = vector.shape_cast %1 : vector<1x18x128xbf16> to vector<18x128xbf16>
    %3 = vector.shape_cast %0 : vector<18x128xbf16> to vector<1x18x128xbf16>
    tpu.vector_store %arg9[%c0, %c7, %c0_0], %3 {strides = array<i32>} : memref<18x32x128xbf16, #tpu.memory_space<vmem>>, vector<1x18x128xbf16>,
    %c17 = arith.constant 17 : index
    %c7_1 = arith.constant 7 : index
    %c0_2 = arith.constant 0 : index
    %4 = vector.load %arg9[%c17, %c7_1, %c0_2] : memref<18x32x128xbf16, #tpu.memory_space<vmem>>, vector<1x18x128xbf16>
    %5 = vector.shape_cast %4 : vector<1x18x128xbf16> to vector<18x128xbf16>
    %6 = vector.shape_cast %0 : vector<18x128xbf16> to vector<1x18x128xbf16>
    tpu.vector_store %arg9[%c17, %c7_1, %c0_2], %6 {strides = array<i32>} : memref<18x32x128xbf16, #tpu.memory_space<vmem>>, vector<1x18x128xbf16>,
    %cst_3 = arith.constant 0.000000e+00 : bf16
    %7 = vector.broadcast %cst_3 : bf16 to vector<16x1x128xbf16>
    %c1 = arith.constant 1 : index
    %c7_4 = arith.constant 7 : index
    %c0_5 = arith.constant 0 : index
    %8 = vector.load %arg9[%c1, %c7_4, %c0_5] : memref<18x32x128xbf16, #tpu.memory_space<vmem>>, vector<16x1x128xbf16>
    tpu.vector_store %arg9[%c1, %c7_4, %c0_5], %7 {strides = array<i32>} : memref<18x32x128xbf16, #tpu.memory_space<vmem>>, vector<16x1x128xbf16>,
    %c1_6 = arith.constant 1 : index
    %c24 = arith.constant 24 : index
    %c0_7 = arith.constant 0 : index
    %9 = vector.load %arg9[%c1_6, %c24, %c0_7] : memref<18x32x128xbf16, #tpu.memory_space<vmem>>, vector<16x1x128xbf16>
    tpu.vector_store %arg9[%c1_6, %c24, %c0_7], %7 {strides = array<i32>} : memref<18x32x128xbf16, #tpu.memory_space<vmem>>, vector<16x1x128xbf16>,
    %c0_8 = arith.constant 0 : index
    %c0_9 = arith.constant 0 : index
    %c0_10 = arith.constant 0 : index
    %10 = vector.load %arg1[%c0_8, %c0_9, %c0_10] : memref<1x256x128xbf16, #tpu.memory_space<vmem>>, vector<1x256x128xbf16>
    %11 = vector.shape_cast %10 : vector<1x256x128xbf16> to vector<256x128xbf16>
    %c0_11 = arith.constant 0 : index
    %c0_12 = arith.constant 0 : index
    %12 = vector.load %arg2[%c0_11, %c0_12] : memref<128x128xbf16, #tpu.memory_space<vmem>>, vector<128x128xbf16>
    %cst_13 = arith.constant dense<0.000000e+00> : vector<256x128xf32>
    %13 = tpu.matmul %11, %12, %cst_13 {dimension_numbers = #tpu.dot_dimension_numbers<[1], [0], [0], [1], [0, 0, 1, 1], [], []>} : vector<256x128xbf16>, vector<128x128xbf16>, vector<256x128xf32> -> vector<256x128xf32>
    %c0_14 = arith.constant 0 : index
    %c0_15 = arith.constant 0 : index
    %14 = vector.load %arg3[%c0_14, %c0_15] : memref<1x128xf32, #tpu.memory_space<vmem>>, vector<1x128xf32>
    %15 = vector.broadcast %14 : vector<1x128xf32> to vector<256x128xf32>
    %16 = arith.addf %13, %15 : vector<256x128xf32>
    %cst_16 = arith.constant 0.000000e+00 : f32
    %17 = vector.broadcast %cst_16 : f32 to vector<256x128xf32>
    %18 = arith.maximumf %16, %17 : vector<256x128xf32>
    %19 = arith.truncf %18 : vector<256x128xf32> to vector<256x128xbf16>
    %20 = vector.shape_cast %19 : vector<256x128xbf16> to vector<16x16x128xbf16>
    %c1_17 = arith.constant 1 : index
    %c8 = arith.constant 8 : index
    %c0_18 = arith.constant 0 : index
    %21 = vector.load %arg9[%c1_17, %c8, %c0_18] : memref<18x32x128xbf16, #tpu.memory_space<vmem>>, vector<16x16x128xbf16>
    tpu.vector_store %arg9[%c1_17, %c8, %c0_18], %20 {strides = array<i32>} : memref<18x32x128xbf16, #tpu.memory_space<vmem>>, vector<16x16x128xbf16>,
    %c0_19 = arith.constant 0 : index
    %c7_20 = arith.constant 7 : index
    %c0_21 = arith.constant 0 : index
    %22 = vector.load %arg9[%c0_19, %c7_20, %c0_21] : memref<18x32x128xbf16, #tpu.memory_space<vmem>>, vector<16x16x128xbf16>
    %23 = vector.shape_cast %22 : vector<16x16x128xbf16> to vector<256x128xbf16>
    %c0_22 = arith.constant 0 : index
    %c0_23 = arith.constant 0 : index
    %c0_24 = arith.constant 0 : index
    %24 = vector.load %arg4[%c0_22, %c0_23, %c0_24] : memref<9x128x128xbf16, #tpu.memory_space<vmem>>, vector<1x128x128xbf16>
    %25 = vector.shape_cast %24 : vector<1x128x128xbf16> to vector<128x128xbf16>
    %cst_25 = arith.constant dense<0.000000e+00> : vector<256x128xf32>
    %26 = tpu.matmul %23, %25, %cst_25 {dimension_numbers = #tpu.dot_dimension_numbers<[1], [0], [0], [1], [0, 0, 1, 1], [], []>} : vector<256x128xbf16>, vector<128x128xbf16>, vector<256x128xf32> -> vector<256x128xf32>
    %c0_26 = arith.constant 0 : index
    %c8_27 = arith.constant 8 : index
    %c0_28 = arith.constant 0 : index
    %27 = vector.load %arg9[%c0_26, %c8_27, %c0_28] : memref<18x32x128xbf16, #tpu.memory_space<vmem>>, vector<16x16x128xbf16>
    %28 = vector.shape_cast %27 : vector<16x16x128xbf16> to vector<256x128xbf16>
    %c1_29 = arith.constant 1 : index
    %c0_30 = arith.constant 0 : index
    %c0_31 = arith.constant 0 : index
    %29 = vector.load %arg4[%c1_29, %c0_30, %c0_31] : memref<9x128x128xbf16, #tpu.memory_space<vmem>>, vector<1x128x128xbf16>
    %30 = vector.shape_cast %29 : vector<1x128x128xbf16> to vector<128x128xbf16>
    %cst_32 = arith.constant dense<0.000000e+00> : vector<256x128xf32>
    %31 = tpu.matmul %28, %30, %cst_32 {dimension_numbers = #tpu.dot_dimension_numbers<[1], [0], [0], [1], [0, 0, 1, 1], [], []>} : vector<256x128xbf16>, vector<128x128xbf16>, vector<256x128xf32> -> vector<256x128xf32>
    %32 = arith.addf %26, %31 : vector<256x128xf32>
    %c0_33 = arith.constant 0 : index
    %c9 = arith.constant 9 : index
    %c0_34 = arith.constant 0 : index
    %33 = vector.load %arg9[%c0_33, %c9, %c0_34] : memref<18x32x128xbf16, #tpu.memory_space<vmem>>, vector<16x16x128xbf16>
    %34 = vector.shape_cast %33 : vector<16x16x128xbf16> to vector<256x128xbf16>
    %c2 = arith.constant 2 : index
    %c0_35 = arith.constant 0 : index
    %c0_36 = arith.constant 0 : index
    %35 = vector.load %arg4[%c2, %c0_35, %c0_36] : memref<9x128x128xbf16, #tpu.memory_space<vmem>>, vector<1x128x128xbf16>
    %36 = vector.shape_cast %35 : vector<1x128x128xbf16> to vector<128x128xbf16>
    %cst_37 = arith.constant dense<0.000000e+00> : vector<256x128xf32>
    %37 = tpu.matmul %34, %36, %cst_37 {dimension_numbers = #tpu.dot_dimension_numbers<[1], [0], [0], [1], [0, 0, 1, 1], [], []>} : vector<256x128xbf16>, vector<128x128xbf16>, vector<256x128xf32> -> vector<256x128xf32>
    %38 = arith.addf %32, %37 : vector<256x128xf32>
    %c1_38 = arith.constant 1 : index
    %c7_39 = arith.constant 7 : index
    %c0_40 = arith.constant 0 : index
    %39 = vector.load %arg9[%c1_38, %c7_39, %c0_40] : memref<18x32x128xbf16, #tpu.memory_space<vmem>>, vector<16x16x128xbf16>
    %40 = vector.shape_cast %39 : vector<16x16x128xbf16> to vector<256x128xbf16>
    %c3 = arith.constant 3 : index
    %c0_41 = arith.constant 0 : index
    %c0_42 = arith.constant 0 : index
    %41 = vector.load %arg4[%c3, %c0_41, %c0_42] : memref<9x128x128xbf16, #tpu.memory_space<vmem>>, vector<1x128x128xbf16>
    %42 = vector.shape_cast %41 : vector<1x128x128xbf16> to vector<128x128xbf16>
    %cst_43 = arith.constant dense<0.000000e+00> : vector<256x128xf32>
    %43 = tpu.matmul %40, %42, %cst_43 {dimension_numbers = #tpu.dot_dimension_numbers<[1], [0], [0], [1], [0, 0, 1, 1], [], []>} : vector<256x128xbf16>, vector<128x128xbf16>, vector<256x128xf32> -> vector<256x128xf32>
    %44 = arith.addf %38, %43 : vector<256x128xf32>
    %c1_44 = arith.constant 1 : index
    %c8_45 = arith.constant 8 : index
    %c0_46 = arith.constant 0 : index
    %45 = vector.load %arg9[%c1_44, %c8_45, %c0_46] : memref<18x32x128xbf16, #tpu.memory_space<vmem>>, vector<16x16x128xbf16>
    %46 = vector.shape_cast %45 : vector<16x16x128xbf16> to vector<256x128xbf16>
    %c4 = arith.constant 4 : index
    %c0_47 = arith.constant 0 : index
    %c0_48 = arith.constant 0 : index
    %47 = vector.load %arg4[%c4, %c0_47, %c0_48] : memref<9x128x128xbf16, #tpu.memory_space<vmem>>, vector<1x128x128xbf16>
    %48 = vector.shape_cast %47 : vector<1x128x128xbf16> to vector<128x128xbf16>
    %cst_49 = arith.constant dense<0.000000e+00> : vector<256x128xf32>
    %49 = tpu.matmul %46, %48, %cst_49 {dimension_numbers = #tpu.dot_dimension_numbers<[1], [0], [0], [1], [0, 0, 1, 1], [], []>} : vector<256x128xbf16>, vector<128x128xbf16>, vector<256x128xf32> -> vector<256x128xf32>
    %50 = arith.addf %44, %49 : vector<256x128xf32>
    %c1_50 = arith.constant 1 : index
    %c9_51 = arith.constant 9 : index
    %c0_52 = arith.constant 0 : index
    %51 = vector.load %arg9[%c1_50, %c9_51, %c0_52] : memref<18x32x128xbf16, #tpu.memory_space<vmem>>, vector<16x16x128xbf16>
    %52 = vector.shape_cast %51 : vector<16x16x128xbf16> to vector<256x128xbf16>
    %c5 = arith.constant 5 : index
    %c0_53 = arith.constant 0 : index
    %c0_54 = arith.constant 0 : index
    %53 = vector.load %arg4[%c5, %c0_53, %c0_54] : memref<9x128x128xbf16, #tpu.memory_space<vmem>>, vector<1x128x128xbf16>
    %54 = vector.shape_cast %53 : vector<1x128x128xbf16> to vector<128x128xbf16>
    %cst_55 = arith.constant dense<0.000000e+00> : vector<256x128xf32>
    %55 = tpu.matmul %52, %54, %cst_55 {dimension_numbers = #tpu.dot_dimension_numbers<[1], [0], [0], [1], [0, 0, 1, 1], [], []>} : vector<256x128xbf16>, vector<128x128xbf16>, vector<256x128xf32> -> vector<256x128xf32>
    %56 = arith.addf %50, %55 : vector<256x128xf32>
    %c2_56 = arith.constant 2 : index
    %c7_57 = arith.constant 7 : index
    %c0_58 = arith.constant 0 : index
    %57 = vector.load %arg9[%c2_56, %c7_57, %c0_58] : memref<18x32x128xbf16, #tpu.memory_space<vmem>>, vector<16x16x128xbf16>
    %58 = vector.shape_cast %57 : vector<16x16x128xbf16> to vector<256x128xbf16>
    %c6 = arith.constant 6 : index
    %c0_59 = arith.constant 0 : index
    %c0_60 = arith.constant 0 : index
    %59 = vector.load %arg4[%c6, %c0_59, %c0_60] : memref<9x128x128xbf16, #tpu.memory_space<vmem>>, vector<1x128x128xbf16>
    %60 = vector.shape_cast %59 : vector<1x128x128xbf16> to vector<128x128xbf16>
    %cst_61 = arith.constant dense<0.000000e+00> : vector<256x128xf32>
    %61 = tpu.matmul %58, %60, %cst_61 {dimension_numbers = #tpu.dot_dimension_numbers<[1], [0], [0], [1], [0, 0, 1, 1], [], []>} : vector<256x128xbf16>, vector<128x128xbf16>, vector<256x128xf32> -> vector<256x128xf32>
    %62 = arith.addf %56, %61 : vector<256x128xf32>
    %c2_62 = arith.constant 2 : index
    %c8_63 = arith.constant 8 : index
    %c0_64 = arith.constant 0 : index
    %63 = vector.load %arg9[%c2_62, %c8_63, %c0_64] : memref<18x32x128xbf16, #tpu.memory_space<vmem>>, vector<16x16x128xbf16>
    %64 = vector.shape_cast %63 : vector<16x16x128xbf16> to vector<256x128xbf16>
    %c7_65 = arith.constant 7 : index
    %c0_66 = arith.constant 0 : index
    %c0_67 = arith.constant 0 : index
    %65 = vector.load %arg4[%c7_65, %c0_66, %c0_67] : memref<9x128x128xbf16, #tpu.memory_space<vmem>>, vector<1x128x128xbf16>
    %66 = vector.shape_cast %65 : vector<1x128x128xbf16> to vector<128x128xbf16>
    %cst_68 = arith.constant dense<0.000000e+00> : vector<256x128xf32>
    %67 = tpu.matmul %64, %66, %cst_68 {dimension_numbers = #tpu.dot_dimension_numbers<[1], [0], [0], [1], [0, 0, 1, 1], [], []>} : vector<256x128xbf16>, vector<128x128xbf16>, vector<256x128xf32> -> vector<256x128xf32>
    %68 = arith.addf %62, %67 : vector<256x128xf32>
    %c2_69 = arith.constant 2 : index
    %c9_70 = arith.constant 9 : index
    %c0_71 = arith.constant 0 : index
    %69 = vector.load %arg9[%c2_69, %c9_70, %c0_71] : memref<18x32x128xbf16, #tpu.memory_space<vmem>>, vector<16x16x128xbf16>
    %70 = vector.shape_cast %69 : vector<16x16x128xbf16> to vector<256x128xbf16>
    %c8_72 = arith.constant 8 : index
    %c0_73 = arith.constant 0 : index
    %c0_74 = arith.constant 0 : index
    %71 = vector.load %arg4[%c8_72, %c0_73, %c0_74] : memref<9x128x128xbf16, #tpu.memory_space<vmem>>, vector<1x128x128xbf16>
    %72 = vector.shape_cast %71 : vector<1x128x128xbf16> to vector<128x128xbf16>
    %cst_75 = arith.constant dense<0.000000e+00> : vector<256x128xf32>
    %73 = tpu.matmul %70, %72, %cst_75 {dimension_numbers = #tpu.dot_dimension_numbers<[1], [0], [0], [1], [0, 0, 1, 1], [], []>} : vector<256x128xbf16>, vector<128x128xbf16>, vector<256x128xf32> -> vector<256x128xf32>
    %74 = arith.addf %68, %73 : vector<256x128xf32>
    %c0_76 = arith.constant 0 : index
    %c0_77 = arith.constant 0 : index
    %75 = vector.load %arg5[%c0_76, %c0_77] : memref<1x128xf32, #tpu.memory_space<vmem>>, vector<1x128xf32>
    %76 = vector.broadcast %75 : vector<1x128xf32> to vector<256x128xf32>
    %77 = arith.addf %74, %76 : vector<256x128xf32>
    %78 = arith.truncf %77 : vector<256x128xf32> to vector<256x128xbf16>
    %c0_78 = arith.constant 0 : index
    %c0_79 = arith.constant 0 : index
    %79 = vector.load %arg6[%c0_78, %c0_79] : memref<128x128xbf16, #tpu.memory_space<vmem>>, vector<128x128xbf16>
    %cst_80 = arith.constant dense<0.000000e+00> : vector<256x128xf32>
    %80 = tpu.matmul %78, %79, %cst_80 {dimension_numbers = #tpu.dot_dimension_numbers<[1], [0], [0], [1], [0, 0, 1, 1], [], []>} : vector<256x128xbf16>, vector<128x128xbf16>, vector<256x128xf32> -> vector<256x128xf32>
    %c0_81 = arith.constant 0 : index
    %c0_82 = arith.constant 0 : index
    %81 = vector.load %arg7[%c0_81, %c0_82] : memref<1x128xf32, #tpu.memory_space<vmem>>, vector<1x128xf32>
    %82 = vector.broadcast %81 : vector<1x128xf32> to vector<256x128xf32>
    %83 = arith.addf %80, %82 : vector<256x128xf32>
    %c0_83 = arith.constant 0 : index
    %c0_84 = arith.constant 0 : index
    %c0_85 = arith.constant 0 : index
    %84 = vector.load %arg1[%c0_83, %c0_84, %c0_85] : memref<1x256x128xbf16, #tpu.memory_space<vmem>>, vector<1x256x128xbf16>
    %85 = vector.shape_cast %84 : vector<1x256x128xbf16> to vector<256x128xbf16>
    %86 = arith.extf %85 : vector<256x128xbf16> to vector<256x128xf32>
    %87 = arith.addf %83, %86 : vector<256x128xf32>
    %cst_86 = arith.constant 0.000000e+00 : f32
    %88 = vector.broadcast %cst_86 : f32 to vector<256x128xf32>
    %89 = arith.maximumf %87, %88 : vector<256x128xf32>
    %90 = arith.truncf %89 : vector<256x128xf32> to vector<256x128xbf16>
    %c0_87 = arith.constant 0 : index
    %c0_88 = arith.constant 0 : index
    %c0_89 = arith.constant 0 : index
    %91 = vector.load %arg8[%c0_87, %c0_88, %c0_89] : memref<1x256x128xbf16, #tpu.memory_space<vmem>>, vector<1x256x128xbf16>
    %92 = vector.shape_cast %91 : vector<1x256x128xbf16> to vector<256x128xbf16>
    %93 = vector.shape_cast %90 : vector<256x128xbf16> to vector<1x256x128xbf16>
    tpu.vector_store %arg8[%c0_87, %c0_88, %c0_89], %93 {strides = array<i32>} : memref<1x256x128xbf16, #tpu.memory_space<vmem>>, vector<1x256x128xbf16>,
    return
  }
  func.func @transform_0(%arg0: i32) -> (i32, i32, i32) {
    %c0_i32 = arith.constant 0 : i32
    %c0_i32_0 = arith.constant 0 : i32
    %c0_i32_1 = arith.constant 0 : i32
    return %arg0, %c0_i32, %c0_i32_0 : i32, i32, i32
  }
  func.func @transform_1(%arg0: i32) -> (i32, i32) {
    %c0_i32 = arith.constant 0 : i32
    %c0_i32_0 = arith.constant 0 : i32
    %c0_i32_1 = arith.constant 0 : i32
    return %c0_i32, %c0_i32_0 : i32, i32
  }
  func.func @transform_2(%arg0: i32) -> (i32, i32) {
    %c0_i32 = arith.constant 0 : i32
    %c0_i32_0 = arith.constant 0 : i32
    %c0_i32_1 = arith.constant 0 : i32
    return %c0_i32, %c0_i32_0 : i32, i32
  }
  func.func @transform_3(%arg0: i32) -> (i32, i32, i32) {
    %c0_i32 = arith.constant 0 : i32
    %c0_i32_0 = arith.constant 0 : i32
    %c0_i32_1 = arith.constant 0 : i32
    %c0_i32_2 = arith.constant 0 : i32
    return %c0_i32, %c0_i32_0, %c0_i32_1 : i32, i32, i32
  }
  func.func @transform_4(%arg0: i32) -> (i32, i32) {
    %c0_i32 = arith.constant 0 : i32
    %c0_i32_0 = arith.constant 0 : i32
    %c0_i32_1 = arith.constant 0 : i32
    return %c0_i32, %c0_i32_0 : i32, i32
  }
  func.func @transform_5(%arg0: i32) -> (i32, i32) {
    %c0_i32 = arith.constant 0 : i32
    %c0_i32_0 = arith.constant 0 : i32
    %c0_i32_1 = arith.constant 0 : i32
    return %c0_i32, %c0_i32_0 : i32, i32
  }
  func.func @transform_6(%arg0: i32) -> (i32, i32) {
    %c0_i32 = arith.constant 0 : i32
    %c0_i32_0 = arith.constant 0 : i32
    %c0_i32_1 = arith.constant 0 : i32
    return %c0_i32, %c0_i32_0 : i32, i32
  }
  func.func @transform_7(%arg0: i32) -> (i32, i32, i32) {
    %c0_i32 = arith.constant 0 : i32
    %c0_i32_0 = arith.constant 0 : i32
    %c0_i32_1 = arith.constant 0 : i32
    return %arg0, %c0_i32, %c0_i32_0 : i32, i32, i32
  }
}

</mosaic_0001>

<llo_original>
// kernel: bottleneck_forward.1
$region0: #{bottleneck_forward.1}
  #allocation0 [shape = 'u32[]', space=smem, size = 0x4, offset = 0x4, fixed_abs, tag = 'smem constant byte address 0x4 - core index']
  #allocation1 [shape = 'u32[72,128]{1,0:T(1,128)}', space=vmem, size = 0x9000, scoped, tag = 'internal scratch']
  #allocation2 [shape = 'bf16[18,32,128]{2,1,0:T(8,128)(2,1)}', space=vmem, size = 0x24000, scoped, tag = 'scratch operand']
  %s0 = inlined_call_operand.vmem [shape: bf16[2,256,128], index: 0, kind: input, shape index: {}]
  %s1 = inlined_call_operand.vmem [shape: bf16[128,128], index: 1, kind: input, shape index: {}]
  %s2 = inlined_call_operand.vmem [shape: f32[1,128], index: 2, kind: input, shape index: {}]
  %s3 = inlined_call_operand.vmem [shape: bf16[9,128,128], index: 3, kind: input, shape index: {}]
  %s4 = inlined_call_operand.vmem [shape: f32[1,128], index: 4, kind: input, shape index: {}]
  %s5 = inlined_call_operand.vmem [shape: bf16[128,128], index: 5, kind: input, shape index: {}]
  %s6 = inlined_call_operand.vmem [shape: f32[1,128], index: 6, kind: input, shape index: {}]
  %s7 = inlined_call_operand.vmem [shape: bf16[2,256,128], index: 7, kind: output, shape index: {}]
  %s8 = sld [smem:[#allocation0]]
  $region61: #{bottleneck_forward.1} parent=0
    _
  %s10 = ssub.s32 1, %s8
  %s11 = scalar_select 0, %s10, %s8
  loop: start=0, step=1, limit=4
  $region2: #{bottleneck_forward.1} parent=0 // loop_pre_header
    _
  $region3: #{bottleneck_forward.1} parent=0 // loop_header
    %s13 = sphi 0, %s17
    %p14 = scmp.ge.s32.totalorder %s13, 4
    %s23 = sphi 0, %s25
    %s26 = sphi 0, %s23
    %s27 = sphi 0, %s26
    %s43 = sphi 0, %s27
    %s47 = sphi 0, %s47
    %s49 = sphi 0, %s47
    %s50 = sphi 0, %s49
    %s64 = sphi 0, %s50
    %s68 = sphi 0, %s68
    %s70 = sphi 0, %s68
    %s71 = sphi 0, %s70
    %s85 = sphi 0, %s71
    %s89 = sphi 0, %s89
    %s91 = sphi 0, %s89
    %s92 = sphi 0, %s91
    %s106 = sphi 0, %s92
    %s110 = sphi 0, %s110
    %s112 = sphi 0, %s110
    %s113 = sphi 0, %s112
    %s127 = sphi 0, %s113
    %s131 = sphi 0, %s131
    %s133 = sphi 0, %s131
    %s134 = sphi 0, %s133
    %s148 = sphi 0, %s134
    %s152 = sphi 0, %s152
    %s154 = sphi 0, %s152
    %s155 = sphi 0, %s154
    %s169 = sphi 0, %s155
    %s175 = sphi 0, %s177
    %s178 = sphi 0, %s175
    %s179 = sphi 0, %s178
    %s195 = sphi 0, %s179
  $region4: #{bottleneck_forward.1} parent=0 // loop_header_branch
    %16 = sbr.rel (%p14) target = $region8
  $region5: #{bottleneck_forward.1} parent=0 // loop_body
    %s18 = ssub.s32 %s13, 1
    %s19 = ssub.s32 %s13, 2
    %s20 = sadd.s32 %s13, 1
    %s21 = ssub.s32 %s13, %s20
    %p22 = scmp.eq.s32.totalorder %s21, 0
    %s24 = sadd.s32 %s23, 1
    %s25 = scalar_select %p22, %s23, %s24
    %p28 = pneg %p22
    %p29 = scmp.eq.s32.totalorder %s13, 1
    %p30 = por %p28, %p29
    %p31 = scmp.ne.s32.totalorder %s23, %s26
    %p32 = scmp.eq.s32.totalorder %s13, 0
    %p33 = por %p31, %p32
    %p34 = scmp.ne.s32.totalorder %s23, %s26
    %p35 = scmp.eq.s32.totalorder %s18, 1
    %p36 = por %p34, %p35
    %p37 = scmp.ne.s32.totalorder %s26, %s27
    %p38 = scmp.eq.s32.totalorder %s18, 0
    %p39 = por %p37, %p38
    %p40 = scmp.ne.s32.totalorder %s26, %s27
    %p41 = scmp.eq.s32.totalorder %s19, 1
    %p42 = por %p40, %p41
    %p44 = scmp.ne.s32.totalorder %s27, %s43
    %p45 = scmp.eq.s32.totalorder %s19, 0
    %p46 = por %p44, %p45
    %s48 = sadd.s32 %s47, 1
    %p51 = scmp.eq.s32.totalorder %s13, 1
    %p52 = scmp.ne.s32.totalorder %s47, %s49
    %p53 = scmp.eq.s32.totalorder %s13, 0
    %p54 = por %p52, %p53
    %p55 = scmp.ne.s32.totalorder %s47, %s49
    %p56 = scmp.eq.s32.totalorder %s18, 1
    %p57 = por %p55, %p56
    %p58 = scmp.ne.s32.totalorder %s49, %s50
    %p59 = scmp.eq.s32.totalorder %s18, 0
    %p60 = por %p58, %p59
    %p61 = scmp.ne.s32.totalorder %s49, %s50
    %p62 = scmp.eq.s32.totalorder %s19, 1
    %p63 = por %p61, %p62
    %p65 = scmp.ne.s32.totalorder %s50, %s64
    %p66 = scmp.eq.s32.totalorder %s19, 0
    %p67 = por %p65, %p66
    %s69 = sadd.s32 %s68, 1
    %p72 = scmp.eq.s32.totalorder %s13, 1
    %p73 = scmp.ne.s32.totalorder %s68, %s70
    %p74 = scmp.eq.s32.totalorder %s13, 0
    %p75 = por %p73, %p74
    %p76 = scmp.ne.s32.totalorder %s68, %s70
    %p77 = scmp.eq.s32.totalorder %s18, 1
    %p78 = por %p76, %p77
    %p79 = scmp.ne.s32.totalorder %s70, %s71
    %p80 = scmp.eq.s32.totalorder %s18, 0
    %p81 = por %p79, %p80
    %p82 = scmp.ne.s32.totalorder %s70, %s71
    %p83 = scmp.eq.s32.totalorder %s19, 1
    %p84 = por %p82, %p83
    %p86 = scmp.ne.s32.totalorder %s71, %s85
    %p87 = scmp.eq.s32.totalorder %s19, 0
    %p88 = por %p86, %p87
    %s90 = sadd.s32 %s89, 1
    %p93 = scmp.eq.s32.totalorder %s13, 1
    %p94 = scmp.ne.s32.totalorder %s89, %s91
    %p95 = scmp.eq.s32.totalorder %s13, 0
    %p96 = por %p94, %p95
    %p97 = scmp.ne.s32.totalorder %s89, %s91
    %p98 = scmp.eq.s32.totalorder %s18, 1
    %p99 = por %p97, %p98
    %p100 = scmp.ne.s32.totalorder %s91, %s92
    %p101 = scmp.eq.s32.totalorder %s18, 0
    %p102 = por %p100, %p101
    %p103 = scmp.ne.s32.totalorder %s91, %s92
    %p104 = scmp.eq.s32.totalorder %s19, 1
    %p105 = por %p103, %p104
    %p107 = scmp.ne.s32.totalorder %s92, %s106
    %p108 = scmp.eq.s32.totalorder %s19, 0
    %p109 = por %p107, %p108
    %s111 = sadd.s32 %s110, 1
    %p114 = scmp.eq.s32.totalorder %s13, 1
    %p115 = scmp.ne.s32.totalorder %s110, %s112
    %p116 = scmp.eq.s32.totalorder %s13, 0
    %p117 = por %p115, %p116
    %p118 = scmp.ne.s32.totalorder %s110, %s112
    %p119 = scmp.eq.s32.totalorder %s18, 1
    %p120 = por %p118, %p119
    %p121 = scmp.ne.s32.totalorder %s112, %s113
    %p122 = scmp.eq.s32.totalorder %s18, 0
    %p123 = por %p121, %p122
    %p124 = scmp.ne.s32.totalorder %s112, %s113
    %p125 = scmp.eq.s32.totalorder %s19, 1
    %p126 = por %p124, %p125
    %p128 = scmp.ne.s32.totalorder %s113, %s127
    %p129 = scmp.eq.s32.totalorder %s19, 0
    %p130 = por %p128, %p129
    %s132 = sadd.s32 %s131, 1
    %p135 = scmp.eq.s32.totalorder %s13, 1
    %p136 = scmp.ne.s32.totalorder %s131, %s133
    %p137 = scmp.eq.s32.totalorder %s13, 0
    %p138 = por %p136, %p137
    %p139 = scmp.ne.s32.totalorder %s131, %s133
    %p140 = scmp.eq.s32.totalorder %s18, 1
    %p141 = por %p139, %p140
    %p142 = scmp.ne.s32.totalorder %s133, %s134
    %p143 = scmp.eq.s32.totalorder %s18, 0
    %p144 = por %p142, %p143
    %p145 = scmp.ne.s32.totalorder %s133, %s134
    %p146 = scmp.eq.s32.totalorder %s19, 1
    %p147 = por %p145, %p146
    %p149 = scmp.ne.s32.totalorder %s134, %s148
    %p150 = scmp.eq.s32.totalorder %s19, 0
    %p151 = por %p149, %p150
    %s153 = sadd.s32 %s152, 1
    %p156 = scmp.eq.s32.totalorder %s13, 1
    %p157 = scmp.ne.s32.totalorder %s152, %s154
    %p158 = scmp.eq.s32.totalorder %s13, 0
    %p159 = por %p157, %p158
    %p160 = scmp.ne.s32.totalorder %s152, %s154
    %p161 = scmp.eq.s32.totalorder %s18, 1
    %p162 = por %p160, %p161
    %p163 = scmp.ne.s32.totalorder %s154, %s155
    %p164 = scmp.eq.s32.totalorder %s18, 0
    %p165 = por %p163, %p164
    %p166 = scmp.ne.s32.totalorder %s154, %s155
    %p167 = scmp.eq.s32.totalorder %s19, 1
    %p168 = por %p166, %p167
    %p170 = scmp.ne.s32.totalorder %s155, %s169
    %p171 = scmp.eq.s32.totalorder %s19, 0
    %p172 = por %p170, %p171
    %s173 = ssub.s32 %s13, %s20
    %p174 = scmp.eq.s32.totalorder %s173, 0
    %s176 = sadd.s32 %s175, 1
    %s177 = scalar_select %p174, %s175, %s176
    %p180 = pneg %p174
    %p181 = scmp.eq.s32.totalorder %s13, 1
    %p182 = por %p180, %p181
    %p183 = scmp.ne.s32.totalorder %s175, %s178
    %p184 = scmp.eq.s32.totalorder %s13, 0
    %p185 = por %p183, %p184
    %p186 = scmp.ne.s32.totalorder %s175, %s178
    %p187 = scmp.eq.s32.totalorder %s18, 1
    %p188 = por %p186, %p187
    %p189 = scmp.ne.s32.totalorder %s178, %s179
    %p190 = scmp.eq.s32.totalorder %s18, 0
    %p191 = por %p189, %p190
    %p192 = scmp.ne.s32.totalorder %s178, %s179
    %p193 = scmp.eq.s32.totalorder %s19, 1
    %p194 = por %p192, %p193
    %p196 = scmp.ne.s32.totalorder %s179, %s195
    %p197 = scmp.eq.s32.totalorder %s19, 0
    %p198 = por %p196, %p197
    %p199 = scmp.le.s32.totalorder 1, %s13
    %p200 = scmp.lt.s32.totalorder %s13, 3
    %p201 = pnand %p199, %p200
    %p202 = pneg %p201
    // Predicated region
    $region9: #{bottleneck_forward.1} parent=5 // pred_check
      _
    $region10: #{bottleneck_forward.1} parent=5 // pred_check_branch
      %204 = sbr.rel (%p201) target = $region12
    $region11: #{bottleneck_forward.1} parent=5 // pred_region
      %s205 = ssub.s32 %s13, 1
      // Predicated region
      $region13: #{bottleneck_forward.1} parent=11 // pred_check
        %p206 = pneg %p60
      $region14: #{bottleneck_forward.1} parent=11 // pred_check_branch
        %208 = sbr.rel (%p206) target = $region16
      $region15: #{bottleneck_forward.1} parent=11 // pred_region
        _
      $region16: #{bottleneck_forward.1} parent=11 // pred_fallthru
        _
      // Predicated region
      $region17: #{bottleneck_forward.1} parent=11 // pred_check
        %p209 = pneg %p81
      $region18: #{bottleneck_forward.1} parent=11 // pred_check_branch
        %211 = sbr.rel (%p209) target = $region20
      $region19: #{bottleneck_forward.1} parent=11 // pred_region
        _
      $region20: #{bottleneck_forward.1} parent=11 // pred_fallthru
        _
      // Predicated region
      $region21: #{bottleneck_forward.1} parent=11 // pred_check
        %p212 = pneg %p102
      $region22: #{bottleneck_forward.1} parent=11 // pred_check_branch
        %214 = sbr.rel (%p212) target = $region24
      $region23: #{bottleneck_forward.1} parent=11 // pred_region
        _
      $region24: #{bottleneck_forward.1} parent=11 // pred_fallthru
        _
      // Predicated region
      $region25: #{bottleneck_forward.1} parent=11 // pred_check
        %p215 = pneg %p123
      $region26: #{bottleneck_forward.1} parent=11 // pred_check_branch
        %217 = sbr.rel (%p215) target = $region28
      $region27: #{bottleneck_forward.1} parent=11 // pred_region
        _
      $region28: #{bottleneck_forward.1} parent=11 // pred_fallthru
        _
      // Predicated region
      $region29: #{bottleneck_forward.1} parent=11 // pred_check
        %p218 = pneg %p144
      $region30: #{bottleneck_forward.1} parent=11 // pred_check_branch
        %220 = sbr.rel (%p218) target = $region32
      $region31: #{bottleneck_forward.1} parent=11 // pred_region
        _
      $region32: #{bottleneck_forward.1} parent=11 // pred_fallthru
        _
      // Predicated region
      $region33: #{bottleneck_forward.1} parent=11 // pred_check
        %p221 = pneg %p165
      $region34: #{bottleneck_forward.1} parent=11 // pred_check_branch
        %223 = sbr.rel (%p221) target = $region36
      $region35: #{bottleneck_forward.1} parent=11 // pred_region
        _
      $region36: #{bottleneck_forward.1} parent=11 // pred_fallthru
        _
    $region12: #{bottleneck_forward.1} parent=5 // pred_fallthru
      _
    %p224 = scmp.lt.s32.totalorder %s13, 2
    // Predicated region
    $region37: #{bottleneck_forward.1} parent=5 // pred_check
      %p225 = pneg %p224
    $region38: #{bottleneck_forward.1} parent=5 // pred_check_branch
      %227 = sbr.rel (%p225) target = $region40
    $region39: #{bottleneck_forward.1} parent=5 // pred_region
      // Predicated region
      $region41: #{bottleneck_forward.1} parent=39 // pred_check
        %p228 = pneg %p33
      $region42: #{bottleneck_forward.1} parent=39 // pred_check_branch
        %230 = sbr.rel (%p228) target = $region44
      $region43: #{bottleneck_forward.1} parent=39 // pred_region
        %p231 = scmp.lt.s32.totalorder %s13, 1
        %s232 = scalar_select %p231, %s13, 1
        %s233 = smul.addr %s232, 32
        %s234 = smul.addr %s233, 4
        %s235 = scalar_lea.vmem %s0, %s234
      $region44: #{bottleneck_forward.1} parent=39 // pred_fallthru
        _
    $region40: #{bottleneck_forward.1} parent=5 // pred_fallthru
      _
    %p236 = scmp.le.s32.totalorder 1, %s13
    %p237 = scmp.lt.s32.totalorder %s13, 3
    %p238 = pnand %p236, %p237
    %p239 = pneg %p238
    // Predicated region
    $region45: #{bottleneck_forward.1} parent=5 // pred_check
      _
    $region46: #{bottleneck_forward.1} parent=5 // pred_check_branch
      %241 = sbr.rel (%p238) target = $region48
    $region47: #{bottleneck_forward.1} parent=5 // pred_region
      %s242 = ssub.s32 %s13, 1
      %p243 = scmp.lt.s32.totalorder %s18, 1
      %s244 = scalar_select %p243, %s18, 1
      %s245 = smul.addr %s244, 32
      %s246 = smul.addr %s245, 4
      %s247 = scalar_lea.vmem %s0, %s246
      %p248 = pneg %p39
      %p249 = pneg %p36
      %p250 = pneg %p60
      %p251 = pneg %p57
      %p252 = pneg %p81
      %p253 = pneg %p78
      %p254 = pneg %p102
      %p255 = pneg %p99
      %p256 = pneg %p123
      %p257 = pneg %p120
      %p258 = pneg %p144
      %p259 = pneg %p141
      %p260 = pneg %p165
      %p261 = pneg %p162
      %p262 = pneg %p191
      %p263 = pneg %p188
      %p264 = scmp.lt.s32.totalorder %s18, 1
      %s265 = scalar_select %p264, %s18, 1
      %s266 = smul.addr %s265, 32
      %s267 = smul.addr %s266, 4
      %s268 = scalar_lea.vmem %s7, %s267
      %p269 = scmp.lt.s32.totalorder %s18, 1
      %s270 = scalar_select %p269, %s18, 1
      %s271 = smul.addr %s270, 32
      %s272 = smul.addr %s271, 4
      %s273 = scalar_lea.vmem %s0, %s272
      %p274 = scmp.lt.s32.totalorder %s18, 1
      %s275 = scalar_select %p274, %s18, 1
      %s276 = smul.addr %s275, 32
      %s277 = smul.addr %s276, 4
      %s278 = scalar_lea.vmem %s7, %s277
      %vm280 = vcmask 1043459
      %vm281 = vsmask.f32 7950
      %vm282 = vmand %vm280, %vm281
      %v283 = vld [vmem:[#allocation2] sm:$0x8]
      %v284 = vsel %vm282, 0, %v283
      %285 = vst [vmem:[#allocation2] sm:$0x8] %v284
      %286 = vst [vmem:[#allocation2 + $0x4] sm:$0xf] 0
      %287 = vst [vmem:[#allocation2 + $0x8] sm:$0xf] 0
      %vm288 = vcmask 1040384
      %vm289 = vsmask.f32 256
      %vm290 = vmand %vm288, %vm289
      %v291 = vld [vmem:[#allocation2 + $0xc] sm:$0x1]
      %v292 = vsel %vm290, 0, %v291
      %293 = vst [vmem:[#allocation2 + $0xc] sm:$0x1] %v292
      %s294 = scalar_lea.vmem [#allocation2], 272
      %v295 = vld [vmem:[%s294] sm:$0x8]
      %v296 = vsel %vm282, 0, %v295
      %297 = vst [vmem:[%s294] sm:$0x8] %v296
      %298 = vst [vmem:[%s294 + $0x4] sm:$0xf] 0
      %299 = vst [vmem:[%s294 + $0x8] sm:$0xf] 0
      %v300 = vld [vmem:[%s294 + $0xc] sm:$0x1]
      %v301 = vsel %vm290, 0, %v300
      %302 = vst [vmem:[%s294 + $0xc] sm:$0x1] %v301
      %s303 = scalar_lea.vmem [#allocation2], 16
      %v304 = vld [vmem:[%s303] sm:$0x8]
      %v305 = vsel %vm282, 0, %v304
      %306 = vst [vmem:[%s303] sm:$0x8] %v305
      %v307 = vld [vmem:[%s303 + $0x10] sm:$0x8]
      %v308 = vsel %vm282, 0, %v307
      %309 = vst [vmem:[%s303 + $0x10] sm:$0x8] %v308
      %v310 = vld [vmem:[%s303 + $0x20] sm:$0x8]
      %v311 = vsel %vm282, 0, %v310
      %312 = vst [vmem:[%s303 + $0x20] sm:$0x8] %v311
      %v313 = vld [vmem:[%s303 + $0x30] sm:$0x8]
      %v314 = vsel %vm282, 0, %v313
      %315 = vst [vmem:[%s303 + $0x30] sm:$0x8] %v314
      %v316 = vld [vmem:[%s303 + $0x40] sm:$0x8]
      %v317 = vsel %vm282, 0, %v316
      %318 = vst [vmem:[%s303 + $0x40] sm:$0x8] %v317
      %v319 = vld [vmem:[%s303 + $0x50] sm:$0x8]
      %v320 = vsel %vm282, 0, %v319
      %321 = vst [vmem:[%s303 + $0x50] sm:$0x8] %v320
      %v322 = vld [vmem:[%s303 + $0x60] sm:$0x8]
      %v323 = vsel %vm282, 0, %v322
      %324 = vst [vmem:[%s303 + $0x60] sm:$0x8] %v323
      %v325 = vld [vmem:[%s303 + $0x70] sm:$0x8]
      %v326 = vsel %vm282, 0, %v325
      %327 = vst [vmem:[%s303 + $0x70] sm:$0x8] %v326
      %v328 = vld [vmem:[%s303 + $0x80] sm:$0x8]
      %v329 = vsel %vm282, 0, %v328
      %330 = vst [vmem:[%s303 + $0x80] sm:$0x8] %v329
      %v331 = vld [vmem:[%s303 + $0x90] sm:$0x8]
      %v332 = vsel %vm282, 0, %v331
      %333 = vst [vmem:[%s303 + $0x90] sm:$0x8] %v332
      %v334 = vld [vmem:[%s303 + $0xa0] sm:$0x8]
      %v335 = vsel %vm282, 0, %v334
      %336 = vst [vmem:[%s303 + $0xa0] sm:$0x8] %v335
      %v337 = vld [vmem:[%s303 + $0xb0] sm:$0x8]
      %v338 = vsel %vm282, 0, %v337
      %339 = vst [vmem:[%s303 + $0xb0] sm:$0x8] %v338
      %v340 = vld [vmem:[%s303 + $0xc0] sm:$0x8]
      %v341 = vsel %vm282, 0, %v340
      %342 = vst [vmem:[%s303 + $0xc0] sm:$0x8] %v341
      %v343 = vld [vmem:[%s303 + $0xd0] sm:$0x8]
      %v344 = vsel %vm282, 0, %v343
      %345 = vst [vmem:[%s303 + $0xd0] sm:$0x8] %v344
      %v346 = vld [vmem:[%s303 + $0xe0] sm:$0x8]
      %v347 = vsel %vm282, 0, %v346
      %348 = vst [vmem:[%s303 + $0xe0] sm:$0x8] %v347
      %v349 = vld [vmem:[%s303 + $0xf0] sm:$0x8]
      %v350 = vsel %vm282, 0, %v349
      %351 = vst [vmem:[%s303 + $0xf0] sm:$0x8] %v350
      %v352 = vld [vmem:[%s303 + $0xc] sm:$0x1]
      %v353 = vsel %vm290, 0, %v352
      %354 = vst [vmem:[%s303 + $0xc] sm:$0x1] %v353
      %v355 = vld [vmem:[%s303 + $0x1c] sm:$0x1]
      %v356 = vsel %vm290, 0, %v355
      %357 = vst [vmem:[%s303 + $0x1c] sm:$0x1] %v356
      %v358 = vld [vmem:[%s303 + $0x2c] sm:$0x1]
      %v359 = vsel %vm290, 0, %v358
      %360 = vst [vmem:[%s303 + $0x2c] sm:$0x1] %v359
      %v361 = vld [vmem:[%s303 + $0x3c] sm:$0x1]
      %v362 = vsel %vm290, 0, %v361
      %363 = vst [vmem:[%s303 + $0x3c] sm:$0x1] %v362
      %v364 = vld [vmem:[%s303 + $0x4c] sm:$0x1]
      %v365 = vsel %vm290, 0, %v364
      %366 = vst [vmem:[%s303 + $0x4c] sm:$0x1] %v365
      %v367 = vld [vmem:[%s303 + $0x5c] sm:$0x1]
      %v368 = vsel %vm290, 0, %v367
      %369 = vst [vmem:[%s303 + $0x5c] sm:$0x1] %v368
      %v370 = vld [vmem:[%s303 + $0x6c] sm:$0x1]
      %v371 = vsel %vm290, 0, %v370
      %372 = vst [vmem:[%s303 + $0x6c] sm:$0x1] %v371
      %v373 = vld [vmem:[%s303 + $0x7c] sm:$0x1]
      %v374 = vsel %vm290, 0, %v373
      %375 = vst [vmem:[%s303 + $0x7c] sm:$0x1] %v374
      %v376 = vld [vmem:[%s303 + $0x8c] sm:$0x1]
      %v377 = vsel %vm290, 0, %v376
      %378 = vst [vmem:[%s303 + $0x8c] sm:$0x1] %v377
      %v379 = vld [vmem:[%s303 + $0x9c] sm:$0x1]
      %v380 = vsel %vm290, 0, %v379
      %381 = vst [vmem:[%s303 + $0x9c] sm:$0x1] %v380
      %v382 = vld [vmem:[%s303 + $0xac] sm:$0x1]
      %v383 = vsel %vm290, 0, %v382
      %384 = vst [vmem:[%s303 + $0xac] sm:$0x1] %v383
      %v385 = vld [vmem:[%s303 + $0xbc] sm:$0x1]
      %v386 = vsel %vm290, 0, %v385
      %387 = vst [vmem:[%s303 + $0xbc] sm:$0x1] %v386
      %v388 = vld [vmem:[%s303 + $0xcc] sm:$0x1]
      %v389 = vsel %vm290, 0, %v388
      %390 = vst [vmem:[%s303 + $0xcc] sm:$0x1] %v389
      %v391 = vld [vmem:[%s303 + $0xdc] sm:$0x1]
      %v392 = vsel %vm290, 0, %v391
      %393 = vst [vmem:[%s303 + $0xdc] sm:$0x1] %v392
      %v394 = vld [vmem:[%s303 + $0xec] sm:$0x1]
      %v395 = vsel %vm290, 0, %v394
      %396 = vst [vmem:[%s303 + $0xec] sm:$0x1] %v395
      %v397 = vld [vmem:[%s303 + $0xfc] sm:$0x1]
      %v398 = vsel %vm290, 0, %v397
      %399 = vst [vmem:[%s303 + $0xfc] sm:$0x1] %v398
      %v400 = vld [vmem:[%s273] sm:$0xf]
      %v401 = vld [vmem:[%s273 + $0x4] sm:$0xf]
      %v402 = vld [vmem:[%s273 + $0x8] sm:$0xf]
      %v403 = vld [vmem:[%s273 + $0xc] sm:$0xf]
      %v404 = vld [vmem:[%s273 + $0x10] sm:$0xf]
      %v405 = vld [vmem:[%s273 + $0x14] sm:$0xf]
      %v406 = vld [vmem:[%s273 + $0x18] sm:$0xf]
      %v407 = vld [vmem:[%s273 + $0x1c] sm:$0xf]
      %v408 = vld [vmem:[%s273 + $0x20] sm:$0xf]
      %v409 = vld [vmem:[%s273 + $0x24] sm:$0xf]
      %v410 = vld [vmem:[%s273 + $0x28] sm:$0xf]
      %v411 = vld [vmem:[%s273 + $0x2c] sm:$0xf]
      %v412 = vld [vmem:[%s273 + $0x30] sm:$0xf]
      %v413 = vld [vmem:[%s273 + $0x34] sm:$0xf]
      %v414 = vld [vmem:[%s273 + $0x38] sm:$0xf]
      %v415 = vld [vmem:[%s273 + $0x3c] sm:$0xf]
      %v416 = vld [vmem:[%s273 + $0x40] sm:$0xf]
      %v417 = vld [vmem:[%s273 + $0x44] sm:$0xf]
      %v418 = vld [vmem:[%s273 + $0x48] sm:$0xf]
      %v419 = vld [vmem:[%s273 + $0x4c] sm:$0xf]
      %v420 = vld [vmem:[%s273 + $0x50] sm:$0xf]
      %v421 = vld [vmem:[%s273 + $0x54] sm:$0xf]
      %v422 = vld [vmem:[%s273 + $0x58] sm:$0xf]
      %v423 = vld [vmem:[%s273 + $0x5c] sm:$0xf]
      %v424 = vld [vmem:[%s273 + $0x60] sm:$0xf]
      %v425 = vld [vmem:[%s273 + $0x64] sm:$0xf]
      %v426 = vld [vmem:[%s273 + $0x68] sm:$0xf]
      %v427 = vld [vmem:[%s273 + $0x6c] sm:$0xf]
      %v428 = vld [vmem:[%s273 + $0x70] sm:$0xf]
      %v429 = vld [vmem:[%s273 + $0x74] sm:$0xf]
      %v430 = vld [vmem:[%s273 + $0x78] sm:$0xf]
      %v431 = vld [vmem:[%s273 + $0x7c] sm:$0xf]
      %v432 = vld [vmem:[%s1] sm:$0xf]
      %v433 = vld [vmem:[%s1 + $0x4] sm:$0xf]
      %v434 = vld [vmem:[%s1 + $0x8] sm:$0xf]
      %v435 = vld [vmem:[%s1 + $0xc] sm:$0xf]
      %v436 = vld [vmem:[%s1 + $0x10] sm:$0xf]
      %v437 = vld [vmem:[%s1 + $0x14] sm:$0xf]
      %v438 = vld [vmem:[%s1 + $0x18] sm:$0xf]
      %v439 = vld [vmem:[%s1 + $0x1c] sm:$0xf]
      %v440 = vld [vmem:[%s1 + $0x20] sm:$0xf]
      %v441 = vld [vmem:[%s1 + $0x24] sm:$0xf]
      %v442 = vld [vmem:[%s1 + $0x28] sm:$0xf]
      %v443 = vld [vmem:[%s1 + $0x2c] sm:$0xf]
      %v444 = vld [vmem:[%s1 + $0x30] sm:$0xf]
      %v445 = vld [vmem:[%s1 + $0x34] sm:$0xf]
      %v446 = vld [vmem:[%s1 + $0x38] sm:$0xf]
      %v447 = vld [vmem:[%s1 + $0x3c] sm:$0xf]
      %v448 = vld [vmem:[%s2] sm:$0x1]
      %v450 = vperm.slane %v448, 0
      %v484 = vunpack.c.l.b16 %v400
      %v485 = vunpack.c.l.b16 %v401
      %v486 = vunpack.c.l.b16 %v402
      %v487 = vunpack.c.l.b16 %v403
      %v488 = vunpack.c.l.b16 %v404
      %v489 = vunpack.c.l.b16 %v405
      %v490 = vunpack.c.l.b16 %v406
      %v491 = vunpack.c.l.b16 %v407
      %v492 = vunpack.c.l.b16 %v408
      %v493 = vunpack.c.l.b16 %v409
      %v494 = vunpack.c.l.b16 %v410
      %v495 = vunpack.c.l.b16 %v411
      %v496 = vunpack.c.l.b16 %v412
      %v497 = vunpack.c.l.b16 %v413
      %v498 = vunpack.c.l.b16 %v414
      %v499 = vunpack.c.l.b16 %v415
      %v500 = vunpack.c.l.b16 %v416
      %v501 = vunpack.c.l.b16 %v417
      %v502 = vunpack.c.l.b16 %v418
      %v503 = vunpack.c.l.b16 %v419
      %v504 = vunpack.c.l.b16 %v420
      %v505 = vunpack.c.l.b16 %v421
      %v506 = vunpack.c.l.b16 %v422
      %v507 = vunpack.c.l.b16 %v423
      %v508 = vunpack.c.l.b16 %v424
      %v509 = vunpack.c.l.b16 %v425
      %v510 = vunpack.c.l.b16 %v426
      %v511 = vunpack.c.l.b16 %v427
      %v512 = vunpack.c.l.b16 %v428
      %v513 = vunpack.c.l.b16 %v429
      %v514 = vunpack.c.l.b16 %v430
      %v515 = vunpack.c.l.b16 %v431
      %v516 = vpack.c.b16 %v485, %v484
      %v517 = vpack.c.b16 %v487, %v486
      %v518 = vpack.c.b16 %v489, %v488
      %v519 = vpack.c.b16 %v491, %v490
      %v520 = vpack.c.b16 %v493, %v492
      %v521 = vpack.c.b16 %v495, %v494
      %v522 = vpack.c.b16 %v497, %v496
      %v523 = vpack.c.b16 %v499, %v498
      %v524 = vpack.c.b16 %v501, %v500
      %v525 = vpack.c.b16 %v503, %v502
      %v526 = vpack.c.b16 %v505, %v504
      %v527 = vpack.c.b16 %v507, %v506
      %v528 = vpack.c.b16 %v509, %v508
      %v529 = vpack.c.b16 %v511, %v510
      %v530 = vpack.c.b16 %v513, %v512
      %v531 = vpack.c.b16 %v515, %v514
      %v564 = vunpack.c.l.b16 %v432
      %v565 = vunpack.c.l.b16 %v433
      %v566 = vunpack.c.l.b16 %v434
      %v567 = vunpack.c.l.b16 %v435
      %v568 = vunpack.c.l.b16 %v436
      %v569 = vunpack.c.l.b16 %v437
      %v570 = vunpack.c.l.b16 %v438
      %v571 = vunpack.c.l.b16 %v439
      %v572 = vunpack.c.l.b16 %v440
      %v573 = vunpack.c.l.b16 %v441
      %v574 = vunpack.c.l.b16 %v442
      %v575 = vunpack.c.l.b16 %v443
      %v576 = vunpack.c.l.b16 %v444
      %v577 = vunpack.c.l.b16 %v445
      %v578 = vunpack.c.l.b16 %v446
      %v579 = vunpack.c.l.b16 %v447
      %v580 = vpack.c.b16 %v565, %v564
      %v581 = vpack.c.b16 %v567, %v566
      %v582 = vpack.c.b16 %v569, %v568
      %v583 = vpack.c.b16 %v571, %v570
      %v584 = vpack.c.b16 %v573, %v572
      %v585 = vpack.c.b16 %v575, %v574
      %v586 = vpack.c.b16 %v577, %v576
      %v587 = vpack.c.b16 %v579, %v578
      %596 = vmatpush.bf16.msra.mxu0 %v587
      %597 = vmatpush.bf16.msra.mxu0 %v586
      %598 = vmatpush.bf16.msra.mxu0 %v585
      %599 = vmatpush.bf16.msra.mxu0 %v584
      %600 = vmatpush.bf16.msra.mxu0 %v583
      %601 = vmatpush.bf16.msra.mxu0 %v582
      %602 = vmatpush.bf16.msra.mxu0 %v581
      %603 = vmatpush.bf16.msra.mxu0 %v580
      %604 = vmatmul.bf16.gmra.mxu0 %v516
      %v605 = vpop.f32.mrf.mxu0
      %v606 = vadd.f32 %v450, %v605
      %v607 = vpop.f32.mrf.mxu0
      %v608 = vadd.f32 %v450, %v607
      %609 = vmatmul.bf16.gmra.mxu0 %v517
      %v610 = vpop.f32.mrf.mxu0
      %v611 = vadd.f32 %v450, %v610
      %v612 = vpop.f32.mrf.mxu0
      %v613 = vadd.f32 %v450, %v612
      %614 = vmatmul.bf16.gmra.mxu0 %v518
      %v615 = vpop.f32.mrf.mxu0
      %v616 = vadd.f32 %v450, %v615
      %v617 = vpop.f32.mrf.mxu0
      %v618 = vadd.f32 %v450, %v617
      %619 = vmatmul.bf16.gmra.mxu0 %v519
      %v620 = vpop.f32.mrf.mxu0
      %v621 = vadd.f32 %v450, %v620
      %v622 = vpop.f32.mrf.mxu0
      %v623 = vadd.f32 %v450, %v622
      %624 = vmatmul.bf16.gmra.mxu0 %v520
      %v625 = vpop.f32.mrf.mxu0
      %v626 = vadd.f32 %v450, %v625
      %v627 = vpop.f32.mrf.mxu0
      %v628 = vadd.f32 %v450, %v627
      %629 = vmatmul.bf16.gmra.mxu0 %v521
      %v630 = vpop.f32.mrf.mxu0
      %v631 = vadd.f32 %v450, %v630
      %v632 = vpop.f32.mrf.mxu0
      %v633 = vadd.f32 %v450, %v632
      %634 = vmatmul.bf16.gmra.mxu0 %v522
      %v635 = vpop.f32.mrf.mxu0
      %v636 = vadd.f32 %v450, %v635
      %v637 = vpop.f32.mrf.mxu0
      %v638 = vadd.f32 %v450, %v637
      %639 = vmatmul.bf16.gmra.mxu0 %v523
      %v640 = vpop.f32.mrf.mxu0
      %v641 = vadd.f32 %v450, %v640
      %v642 = vpop.f32.mrf.mxu0
      %v643 = vadd.f32 %v450, %v642
      %644 = vmatmul.bf16.gmra.mxu0 %v524
      %v645 = vpop.f32.mrf.mxu0
      %v646 = vadd.f32 %v450, %v645
      %v647 = vpop.f32.mrf.mxu0
      %v648 = vadd.f32 %v450, %v647
      %649 = vmatmul.bf16.gmra.mxu0 %v525
      %v650 = vpop.f32.mrf.mxu0
      %v651 = vadd.f32 %v450, %v650
      %v652 = vpop.f32.mrf.mxu0
      %v653 = vadd.f32 %v450, %v652
      %654 = vmatmul.bf16.gmra.mxu0 %v526
      %v655 = vpop.f32.mrf.mxu0
      %v656 = vadd.f32 %v450, %v655
      %v657 = vpop.f32.mrf.mxu0
      %v658 = vadd.f32 %v450, %v657
      %659 = vmatmul.bf16.gmra.mxu0 %v527
      %v660 = vpop.f32.mrf.mxu0
      %v661 = vadd.f32 %v450, %v660
      %v662 = vpop.f32.mrf.mxu0
      %v663 = vadd.f32 %v450, %v662
      %664 = vmatmul.bf16.gmra.mxu0 %v528
      %v665 = vpop.f32.mrf.mxu0
      %v666 = vadd.f32 %v450, %v665
      %v667 = vpop.f32.mrf.mxu0
      %v668 = vadd.f32 %v450, %v667
      %669 = vmatmul.bf16.gmra.mxu0 %v529
      %v670 = vpop.f32.mrf.mxu0
      %v671 = vadd.f32 %v450, %v670
      %v672 = vpop.f32.mrf.mxu0
      %v673 = vadd.f32 %v450, %v672
      %674 = vmatmul.bf16.gmra.mxu0 %v530
      %v675 = vpop.f32.mrf.mxu0
      %v676 = vadd.f32 %v450, %v675
      %v677 = vpop.f32.mrf.mxu0
      %v678 = vadd.f32 %v450, %v677
      %679 = vmatmul.bf16.gmra.mxu0 %v531
      %v680 = vpop.f32.mrf.mxu0
      %v681 = vadd.f32 %v450, %v680
      %v682 = vpop.f32.mrf.mxu0
      %v683 = vadd.f32 %v450, %v682
      %684 = vdwg.mxu0
      %v685 = vmax.f32 %v606, 0.0
      %v686 = vmax.f32 %v608, 0.0
      %v687 = vmax.f32 %v611, 0.0
      %v688 = vmax.f32 %v613, 0.0
      %v689 = vmax.f32 %v616, 0.0
      %v690 = vmax.f32 %v618, 0.0
      %v691 = vmax.f32 %v621, 0.0
      %v692 = vmax.f32 %v623, 0.0
      %v693 = vmax.f32 %v626, 0.0
      %v694 = vmax.f32 %v628, 0.0
      %v695 = vmax.f32 %v631, 0.0
      %v696 = vmax.f32 %v633, 0.0
      %v697 = vmax.f32 %v636, 0.0
      %v698 = vmax.f32 %v638, 0.0
      %v699 = vmax.f32 %v641, 0.0
      %v700 = vmax.f32 %v643, 0.0
      %v701 = vmax.f32 %v646, 0.0
      %v702 = vmax.f32 %v648, 0.0
      %v703 = vmax.f32 %v651, 0.0
      %v704 = vmax.f32 %v653, 0.0
      %v705 = vmax.f32 %v656, 0.0
      %v706 = vmax.f32 %v658, 0.0
      %v707 = vmax.f32 %v661, 0.0
      %v708 = vmax.f32 %v663, 0.0
      %v709 = vmax.f32 %v666, 0.0
      %v710 = vmax.f32 %v668, 0.0
      %v711 = vmax.f32 %v671, 0.0
      %v712 = vmax.f32 %v673, 0.0
      %v713 = vmax.f32 %v676, 0.0
      %v714 = vmax.f32 %v678, 0.0
      %v715 = vmax.f32 %v681, 0.0
      %v716 = vmax.f32 %v683, 0.0
      %v717 = vpack.c.bf16 %v685, %v685
      %v718 = vpack.c.bf16 %v686, %v686
      %v719 = vpack.c.bf16 %v687, %v687
      %v720 = vpack.c.bf16 %v688, %v688
      %v721 = vpack.c.bf16 %v689, %v689
      %v722 = vpack.c.bf16 %v690, %v690
      %v723 = vpack.c.bf16 %v691, %v691
      %v724 = vpack.c.bf16 %v692, %v692
      %v725 = vpack.c.bf16 %v693, %v693
      %v726 = vpack.c.bf16 %v694, %v694
      %v727 = vpack.c.bf16 %v695, %v695
      %v728 = vpack.c.bf16 %v696, %v696
      %v729 = vpack.c.bf16 %v697, %v697
      %v730 = vpack.c.bf16 %v698, %v698
      %v731 = vpack.c.bf16 %v699, %v699
      %v732 = vpack.c.bf16 %v700, %v700
      %v733 = vpack.c.bf16 %v701, %v701
      %v734 = vpack.c.bf16 %v702, %v702
      %v735 = vpack.c.bf16 %v703, %v703
      %v736 = vpack.c.bf16 %v704, %v704
      %v737 = vpack.c.bf16 %v705, %v705
      %v738 = vpack.c.bf16 %v706, %v706
      %v739 = vpack.c.bf16 %v707, %v707
      %v740 = vpack.c.bf16 %v708, %v708
      %v741 = vpack.c.bf16 %v709, %v709
      %v742 = vpack.c.bf16 %v710, %v710
      %v743 = vpack.c.bf16 %v711, %v711
      %v744 = vpack.c.bf16 %v712, %v712
      %v745 = vpack.c.bf16 %v713, %v713
      %v746 = vpack.c.bf16 %v714, %v714
      %v747 = vpack.c.bf16 %v715, %v715
      %v748 = vpack.c.bf16 %v716, %v716
      %749 = vst [vmem:[%s303 + $0x4] sm:$0xf] %v717
      %750 = vst [vmem:[%s303 + $0x8] sm:$0xf] %v718
      %751 = vst [vmem:[%s303 + $0x14] sm:$0xf] %v719
      %752 = vst [vmem:[%s303 + $0x18] sm:$0xf] %v720
      %753 = vst [vmem:[%s303 + $0x24] sm:$0xf] %v721
      %754 = vst [vmem:[%s303 + $0x28] sm:$0xf] %v722
      %755 = vst [vmem:[%s303 + $0x34] sm:$0xf] %v723
      %756 = vst [vmem:[%s303 + $0x38] sm:$0xf] %v724
      %757 = vst [vmem:[%s303 + $0x44] sm:$0xf] %v725
      %758 = vst [vmem:[%s303 + $0x48] sm:$0xf] %v726
      %759 = vst [vmem:[%s303 + $0x54] sm:$0xf] %v727
      %760 = vst [vmem:[%s303 + $0x58] sm:$0xf] %v728
      %761 = vst [vmem:[%s303 + $0x64] sm:$0xf] %v729
      %762 = vst [vmem:[%s303 + $0x68] sm:$0xf] %v730
      %763 = vst [vmem:[%s303 + $0x74] sm:$0xf] %v731
      %764 = vst [vmem:[%s303 + $0x78] sm:$0xf] %v732
      %765 = vst [vmem:[%s303 + $0x84] sm:$0xf] %v733
      %766 = vst [vmem:[%s303 + $0x88] sm:$0xf] %v734
      %767 = vst [vmem:[%s303 + $0x94] sm:$0xf] %v735
      %768 = vst [vmem:[%s303 + $0x98] sm:$0xf] %v736
      %769 = vst [vmem:[%s303 + $0xa4] sm:$0xf] %v737
      %770 = vst [vmem:[%s303 + $0xa8] sm:$0xf] %v738
      %771 = vst [vmem:[%s303 + $0xb4] sm:$0xf] %v739
      %772 = vst [vmem:[%s303 + $0xb8] sm:$0xf] %v740
      %773 = vst [vmem:[%s303 + $0xc4] sm:$0xf] %v741
      %774 = vst [vmem:[%s303 + $0xc8] sm:$0xf] %v742
      %775 = vst [vmem:[%s303 + $0xd4] sm:$0xf] %v743
      %776 = vst [vmem:[%s303 + $0xd8] sm:$0xf] %v744
      %777 = vst [vmem:[%s303 + $0xe4] sm:$0xf] %v745
      %778 = vst [vmem:[%s303 + $0xe8] sm:$0xf] %v746
      %779 = vst [vmem:[%s303 + $0xf4] sm:$0xf] %v747
      %780 = vst [vmem:[%s303 + $0xf8] sm:$0xf] %v748
      %v781 = vld [vmem:[#allocation2] sm:$0x8]
      %v782 = vld [vmem:[#allocation2 + $0x4] sm:$0xf]
      %v783 = vld [vmem:[#allocation2 + $0x8] sm:$0xf]
      %v784 = vld [vmem:[#allocation2 + $0x10] sm:$0x8]
      %v785 = vld [vmem:[#allocation2 + $0x14] sm:$0xf]
      %v786 = vld [vmem:[#allocation2 + $0x18] sm:$0xf]
      %v787 = vld [vmem:[#allocation2 + $0x20] sm:$0x8]
      %v788 = vld [vmem:[#allocation2 + $0x24] sm:$0xf]
      %v789 = vld [vmem:[#allocation2 + $0x28] sm:$0xf]
      %v790 = vld [vmem:[#allocation2 + $0x30] sm:$0x8]
      %v791 = vld [vmem:[#allocation2 + $0x34] sm:$0xf]
      %v792 = vld [vmem:[#allocation2 + $0x38] sm:$0xf]
      %v793 = vld [vmem:[#allocation2 + $0x40] sm:$0x8]
      %v794 = vld [vmem:[#allocation2 + $0x44] sm:$0xf]
      %v795 = vld [vmem:[#allocation2 + $0x48] sm:$0xf]
      %v796 = vld [vmem:[#allocation2 + $0x50] sm:$0x8]
      %v797 = vld [vmem:[#allocation2 + $0x54] sm:$0xf]
      %v798 = vld [vmem:[#allocation2 + $0x58] sm:$0xf]
      %v799 = vld [vmem:[#allocation2 + $0x60] sm:$0x8]
      %v800 = vld [vmem:[#allocation2 + $0x64] sm:$0xf]
      %v801 = vld [vmem:[#allocation2 + $0x68] sm:$0xf]
      %v802 = vld [vmem:[#allocation2 + $0x70] sm:$0x8]
      %v803 = vld [vmem:[#allocation2 + $0x74] sm:$0xf]
      %v804 = vld [vmem:[#allocation2 + $0x78] sm:$0xf]
      %v805 = vld [vmem:[#allocation2 + $0x80] sm:$0x8]
      %v806 = vld [vmem:[#allocation2 + $0x84] sm:$0xf]
      %v807 = vld [vmem:[#allocation2 + $0x88] sm:$0xf]
      %v808 = vld [vmem:[#allocation2 + $0x90] sm:$0x8]
      %v809 = vld [vmem:[#allocation2 + $0x94] sm:$0xf]
      %v810 = vld [vmem:[#allocation2 + $0x98] sm:$0xf]
      %v811 = vld [vmem:[#allocation2 + $0xa0] sm:$0x8]
      %v812 = vld [vmem:[#allocation2 + $0xa4] sm:$0xf]
      %v813 = vld [vmem:[#allocation2 + $0xa8] sm:$0xf]
      %v814 = vld [vmem:[#allocation2 + $0xb0] sm:$0x8]
      %v815 = vld [vmem:[#allocation2 + $0xb4] sm:$0xf]
      %v816 = vld [vmem:[#allocation2 + $0xb8] sm:$0xf]
      %v817 = vld [vmem:[#allocation2 + $0xc0] sm:$0x8]
      %v818 = vld [vmem:[#allocation2 + $0xc4] sm:$0xf]
      %v819 = vld [vmem:[#allocation2 + $0xc8] sm:$0xf]
      %v820 = vld [vmem:[#allocation2 + $0xd0] sm:$0x8]
      %v821 = vld [vmem:[#allocation2 + $0xd4] sm:$0xf]
      %v822 = vld [vmem:[#allocation2 + $0xd8] sm:$0xf]
      %v823 = vld [vmem:[#allocation2 + $0xe0] sm:$0x8]
      %v824 = vld [vmem:[#allocation2 + $0xe4] sm:$0xf]
      %v825 = vld [vmem:[#allocation2 + $0xe8] sm:$0xf]
      %v826 = vld [vmem:[#allocation2 + $0xf0] sm:$0x8]
      %v827 = vld [vmem:[#allocation2 + $0xf4] sm:$0xf]
      %v828 = vld [vmem:[#allocation2 + $0xf8] sm:$0xf]
      %vm829 = vsmask.f32 4368
      %vm830 = vmor %vm289, %vm829
      %v832 = vshrl.u32 %v781, 16
      %v834 = vrot.slane %v832, 7
      %v835 = vrot.slane %v834, 4
      %v837 = vshrl.u32 %v782, 16
      %v839 = vrot.slane %v837, 7
      %v840 = vshll.u32 %v782, 16
      %v842 = vor.u32 %v839, %v840
      %v843 = vsel %vm830, %v835, %v842
      %v844 = vrot.slane %v839, 4
      %v846 = vshrl.u32 %v783, 16
      %v848 = vrot.slane %v846, 7
      %v849 = vshll.u32 %v783, 16
      %v851 = vor.u32 %v848, %v849
      %v852 = vsel %vm830, %v844, %v851
      %v854 = vshrl.u32 %v784, 16
      %v856 = vrot.slane %v854, 7
      %v857 = vrot.slane %v856, 4
      %v859 = vshrl.u32 %v785, 16
      %v861 = vrot.slane %v859, 7
      %v862 = vshll.u32 %v785, 16
      %v864 = vor.u32 %v861, %v862
      %v865 = vsel %vm830, %v857, %v864
      %v866 = vrot.slane %v861, 4
      %v868 = vshrl.u32 %v786, 16
      %v870 = vrot.slane %v868, 7
      %v871 = vshll.u32 %v786, 16
      %v873 = vor.u32 %v870, %v871
      %v874 = vsel %vm830, %v866, %v873
      %v876 = vshrl.u32 %v787, 16
      %v878 = vrot.slane %v876, 7
      %v879 = vrot.slane %v878, 4
      %v881 = vshrl.u32 %v788, 16
      %v883 = vrot.slane %v881, 7
      %v884 = vshll.u32 %v788, 16
      %v886 = vor.u32 %v883, %v884
      %v887 = vsel %vm830, %v879, %v886
      %v888 = vrot.slane %v883, 4
      %v890 = vshrl.u32 %v789, 16
      %v892 = vrot.slane %v890, 7
      %v893 = vshll.u32 %v789, 16
      %v895 = vor.u32 %v892, %v893
      %v896 = vsel %vm830, %v888, %v895
      %v898 = vshrl.u32 %v790, 16
      %v900 = vrot.slane %v898, 7
      %v901 = vrot.slane %v900, 4
      %v903 = vshrl.u32 %v791, 16
      %v905 = vrot.slane %v903, 7
      %v906 = vshll.u32 %v791, 16
      %v908 = vor.u32 %v905, %v906
      %v909 = vsel %vm830, %v901, %v908
      %v910 = vrot.slane %v905, 4
      %v912 = vshrl.u32 %v792, 16
      %v914 = vrot.slane %v912, 7
      %v915 = vshll.u32 %v792, 16
      %v917 = vor.u32 %v914, %v915
      %v918 = vsel %vm830, %v910, %v917
      %v920 = vshrl.u32 %v793, 16
      %v922 = vrot.slane %v920, 7
      %v923 = vrot.slane %v922, 4
      %v925 = vshrl.u32 %v794, 16
      %v927 = vrot.slane %v925, 7
      %v928 = vshll.u32 %v794, 16
      %v930 = vor.u32 %v927, %v928
      %v931 = vsel %vm830, %v923, %v930
      %v932 = vrot.slane %v927, 4
      %v934 = vshrl.u32 %v795, 16
      %v936 = vrot.slane %v934, 7
      %v937 = vshll.u32 %v795, 16
      %v939 = vor.u32 %v936, %v937
      %v940 = vsel %vm830, %v932, %v939
      %v942 = vshrl.u32 %v796, 16
      %v944 = vrot.slane %v942, 7
      %v945 = vrot.slane %v944, 4
      %v947 = vshrl.u32 %v797, 16
      %v949 = vrot.slane %v947, 7
      %v950 = vshll.u32 %v797, 16
      %v952 = vor.u32 %v949, %v950
      %v953 = vsel %vm830, %v945, %v952
      %v954 = vrot.slane %v949, 4
      %v956 = vshrl.u32 %v798, 16
      %v958 = vrot.slane %v956, 7
      %v959 = vshll.u32 %v798, 16
      %v961 = vor.u32 %v958, %v959
      %v962 = vsel %vm830, %v954, %v961
      %v964 = vshrl.u32 %v799, 16
      %v966 = vrot.slane %v964, 7
      %v967 = vrot.slane %v966, 4
      %v969 = vshrl.u32 %v800, 16
      %v971 = vrot.slane %v969, 7
      %v972 = vshll.u32 %v800, 16
      %v974 = vor.u32 %v971, %v972
      %v975 = vsel %vm830, %v967, %v974
      %v976 = vrot.slane %v971, 4
      %v978 = vshrl.u32 %v801, 16
      %v980 = vrot.slane %v978, 7
      %v981 = vshll.u32 %v801, 16
      %v983 = vor.u32 %v980, %v981
      %v984 = vsel %vm830, %v976, %v983
      %v986 = vshrl.u32 %v802, 16
      %v988 = vrot.slane %v986, 7
      %v989 = vrot.slane %v988, 4
      %v991 = vshrl.u32 %v803, 16
      %v993 = vrot.slane %v991, 7
      %v994 = vshll.u32 %v803, 16
      %v996 = vor.u32 %v993, %v994
      %v997 = vsel %vm830, %v989, %v996
      %v998 = vrot.slane %v993, 4
      %v1000 = vshrl.u32 %v804, 16
      %v1002 = vrot.slane %v1000, 7
      %v1003 = vshll.u32 %v804, 16
      %v1005 = vor.u32 %v1002, %v1003
      %v1006 = vsel %vm830, %v998, %v1005
      %v1008 = vshrl.u32 %v805, 16
      %v1010 = vrot.slane %v1008, 7
      %v1011 = vrot.slane %v1010, 4
      %v1013 = vshrl.u32 %v806, 16
      %v1015 = vrot.slane %v1013, 7
      %v1016 = vshll.u32 %v806, 16
      %v1018 = vor.u32 %v1015, %v1016
      %v1019 = vsel %vm830, %v1011, %v1018
      %v1020 = vrot.slane %v1015, 4
      %v1022 = vshrl.u32 %v807, 16
      %v1024 = vrot.slane %v1022, 7
      %v1025 = vshll.u32 %v807, 16
      %v1027 = vor.u32 %v1024, %v1025
      %v1028 = vsel %vm830, %v1020, %v1027
      %v1030 = vshrl.u32 %v808, 16
      %v1032 = vrot.slane %v1030, 7
      %v1033 = vrot.slane %v1032, 4
      %v1035 = vshrl.u32 %v809, 16
      %v1037 = vrot.slane %v1035, 7
      %v1038 = vshll.u32 %v809, 16
      %v1040 = vor.u32 %v1037, %v1038
      %v1041 = vsel %vm830, %v1033, %v1040
      %v1042 = vrot.slane %v1037, 4
      %v1044 = vshrl.u32 %v810, 16
      %v1046 = vrot.slane %v1044, 7
      %v1047 = vshll.u32 %v810, 16
      %v1049 = vor.u32 %v1046, %v1047
      %v1050 = vsel %vm830, %v1042, %v1049
      %v1052 = vshrl.u32 %v811, 16
      %v1054 = vrot.slane %v1052, 7
      %v1055 = vrot.slane %v1054, 4
      %v1057 = vshrl.u32 %v812, 16
      %v1059 = vrot.slane %v1057, 7
      %v1060 = vshll.u32 %v812, 16
      %v1062 = vor.u32 %v1059, %v1060
      %v1063 = vsel %vm830, %v1055, %v1062
      %v1064 = vrot.slane %v1059, 4
      %v1066 = vshrl.u32 %v813, 16
      %v1068 = vrot.slane %v1066, 7
      %v1069 = vshll.u32 %v813, 16
      %v1071 = vor.u32 %v1068, %v1069
      %v1072 = vsel %vm830, %v1064, %v1071
      %v1074 = vshrl.u32 %v814, 16
      %v1076 = vrot.slane %v1074, 7
      %v1077 = vrot.slane %v1076, 4
      %v1079 = vshrl.u32 %v815, 16
      %v1081 = vrot.slane %v1079, 7
      %v1082 = vshll.u32 %v815, 16
      %v1084 = vor.u32 %v1081, %v1082
      %v1085 = vsel %vm830, %v1077, %v1084
      %v1086 = vrot.slane %v1081, 4
      %v1088 = vshrl.u32 %v816, 16
      %v1090 = vrot.slane %v1088, 7
      %v1091 = vshll.u32 %v816, 16
      %v1093 = vor.u32 %v1090, %v1091
      %v1094 = vsel %vm830, %v1086, %v1093
      %v1096 = vshrl.u32 %v817, 16
      %v1098 = vrot.slane %v1096, 7
      %v1099 = vrot.slane %v1098, 4
      %v1101 = vshrl.u32 %v818, 16
      %v1103 = vrot.slane %v1101, 7
      %v1104 = vshll.u32 %v818, 16
      %v1106 = vor.u32 %v1103, %v1104
      %v1107 = vsel %vm830, %v1099, %v1106
      %v1108 = vrot.slane %v1103, 4
      %v1110 = vshrl.u32 %v819, 16
      %v1112 = vrot.slane %v1110, 7
      %v1113 = vshll.u32 %v819, 16
      %v1115 = vor.u32 %v1112, %v1113
      %v1116 = vsel %vm830, %v1108, %v1115
      %v1118 = vshrl.u32 %v820, 16
      %v1120 = vrot.slane %v1118, 7
      %v1121 = vrot.slane %v1120, 4
      %v1123 = vshrl.u32 %v821, 16
      %v1125 = vrot.slane %v1123, 7
      %v1126 = vshll.u32 %v821, 16
      %v1128 = vor.u32 %v1125, %v1126
      %v1129 = vsel %vm830, %v1121, %v1128
      %v1130 = vrot.slane %v1125, 4
      %v1132 = vshrl.u32 %v822, 16
      %v1134 = vrot.slane %v1132, 7
      %v1135 = vshll.u32 %v822, 16
      %v1137 = vor.u32 %v1134, %v1135
      %v1138 = vsel %vm830, %v1130, %v1137
      %v1140 = vshrl.u32 %v823, 16
      %v1142 = vrot.slane %v1140, 7
      %v1143 = vrot.slane %v1142, 4
      %v1145 = vshrl.u32 %v824, 16
      %v1147 = vrot.slane %v1145, 7
      %v1148 = vshll.u32 %v824, 16
      %v1150 = vor.u32 %v1147, %v1148
      %v1151 = vsel %vm830, %v1143, %v1150
      %v1152 = vrot.slane %v1147, 4
      %v1154 = vshrl.u32 %v825, 16
      %v1156 = vrot.slane %v1154, 7
      %v1157 = vshll.u32 %v825, 16
      %v1159 = vor.u32 %v1156, %v1157
      %v1160 = vsel %vm830, %v1152, %v1159
      %v1162 = vshrl.u32 %v826, 16
      %v1164 = vrot.slane %v1162, 7
      %v1165 = vrot.slane %v1164, 4
      %v1167 = vshrl.u32 %v827, 16
      %v1169 = vrot.slane %v1167, 7
      %v1170 = vshll.u32 %v827, 16
      %v1172 = vor.u32 %v1169, %v1170
      %v1173 = vsel %vm830, %v1165, %v1172
      %v1174 = vrot.slane %v1169, 4
      %v1176 = vshrl.u32 %v828, 16
      %v1178 = vrot.slane %v1176, 7
      %v1179 = vshll.u32 %v828, 16
      %v1181 = vor.u32 %v1178, %v1179
      %v1182 = vsel %vm830, %v1174, %v1181
      %v1183 = vld [vmem:[%s3] sm:$0xf]
      %v1184 = vld [vmem:[%s3 + $0x4] sm:$0xf]
      %v1185 = vld [vmem:[%s3 + $0x8] sm:$0xf]
      %v1186 = vld [vmem:[%s3 + $0xc] sm:$0xf]
      %v1187 = vld [vmem:[%s3 + $0x10] sm:$0xf]
      %v1188 = vld [vmem:[%s3 + $0x14] sm:$0xf]
      %v1189 = vld [vmem:[%s3 + $0x18] sm:$0xf]
      %v1190 = vld [vmem:[%s3 + $0x1c] sm:$0xf]
      %v1191 = vld [vmem:[%s3 + $0x20] sm:$0xf]
      %v1192 = vld [vmem:[%s3 + $0x24] sm:$0xf]
      %v1193 = vld [vmem:[%s3 + $0x28] sm:$0xf]
      %v1194 = vld [vmem:[%s3 + $0x2c] sm:$0xf]
      %v1195 = vld [vmem:[%s3 + $0x30] sm:$0xf]
      %v1196 = vld [vmem:[%s3 + $0x34] sm:$0xf]
      %v1197 = vld [vmem:[%s3 + $0x38] sm:$0xf]
      %v1198 = vld [vmem:[%s3 + $0x3c] sm:$0xf]
      %s1199 = scalar_lea.vmem %s3, 64
      %v1200 = vld [vmem:[%s1199] sm:$0xf]
      %v1201 = vld [vmem:[%s1199 + $0x4] sm:$0xf]
      %v1202 = vld [vmem:[%s1199 + $0x8] sm:$0xf]
      %v1203 = vld [vmem:[%s1199 + $0xc] sm:$0xf]
      %v1204 = vld [vmem:[%s1199 + $0x10] sm:$0xf]
      %v1205 = vld [vmem:[%s1199 + $0x14] sm:$0xf]
      %v1206 = vld [vmem:[%s1199 + $0x18] sm:$0xf]
      %v1207 = vld [vmem:[%s1199 + $0x1c] sm:$0xf]
      %v1208 = vld [vmem:[%s1199 + $0x20] sm:$0xf]
      %v1209 = vld [vmem:[%s1199 + $0x24] sm:$0xf]
      %v1210 = vld [vmem:[%s1199 + $0x28] sm:$0xf]
      %v1211 = vld [vmem:[%s1199 + $0x2c] sm:$0xf]
      %v1212 = vld [vmem:[%s1199 + $0x30] sm:$0xf]
      %v1213 = vld [vmem:[%s1199 + $0x34] sm:$0xf]
      %v1214 = vld [vmem:[%s1199 + $0x38] sm:$0xf]
      %v1215 = vld [vmem:[%s1199 + $0x3c] sm:$0xf]
      %v1248 = vunpack.c.l.b16 %v782
      %v1249 = vunpack.c.l.b16 %v783
      %v1250 = vunpack.c.l.b16 %v785
      %v1251 = vunpack.c.l.b16 %v786
      %v1252 = vunpack.c.l.b16 %v788
      %v1253 = vunpack.c.l.b16 %v789
      %v1254 = vunpack.c.l.b16 %v791
      %v1255 = vunpack.c.l.b16 %v792
      %v1256 = vunpack.c.l.b16 %v794
      %v1257 = vunpack.c.l.b16 %v795
      %v1258 = vunpack.c.l.b16 %v797
      %v1259 = vunpack.c.l.b16 %v798
      %v1260 = vunpack.c.l.b16 %v800
      %v1261 = vunpack.c.l.b16 %v801
      %v1262 = vunpack.c.l.b16 %v803
      %v1263 = vunpack.c.l.b16 %v804
      %v1264 = vunpack.c.l.b16 %v806
      %v1265 = vunpack.c.l.b16 %v807
      %v1266 = vunpack.c.l.b16 %v809
      %v1267 = vunpack.c.l.b16 %v810
      %v1268 = vunpack.c.l.b16 %v812
      %v1269 = vunpack.c.l.b16 %v813
      %v1270 = vunpack.c.l.b16 %v815
      %v1271 = vunpack.c.l.b16 %v816
      %v1272 = vunpack.c.l.b16 %v818
      %v1273 = vunpack.c.l.b16 %v819
      %v1274 = vunpack.c.l.b16 %v821
      %v1275 = vunpack.c.l.b16 %v822
      %v1276 = vunpack.c.l.b16 %v824
      %v1277 = vunpack.c.l.b16 %v825
      %v1278 = vunpack.c.l.b16 %v827
      %v1279 = vunpack.c.l.b16 %v828
      %v1280 = vpack.c.b16 %v1249, %v1248
      %v1281 = vpack.c.b16 %v1251, %v1250
      %v1282 = vpack.c.b16 %v1253, %v1252
      %v1283 = vpack.c.b16 %v1255, %v1254
      %v1284 = vpack.c.b16 %v1257, %v1256
      %v1285 = vpack.c.b16 %v1259, %v1258
      %v1286 = vpack.c.b16 %v1261, %v1260
      %v1287 = vpack.c.b16 %v1263, %v1262
      %v1288 = vpack.c.b16 %v1265, %v1264
      %v1289 = vpack.c.b16 %v1267, %v1266
      %v1290 = vpack.c.b16 %v1269, %v1268
      %v1291 = vpack.c.b16 %v1271, %v1270
      %v1292 = vpack.c.b16 %v1273, %v1272
      %v1293 = vpack.c.b16 %v1275, %v1274
      %v1294 = vpack.c.b16 %v1277, %v1276
      %v1295 = vpack.c.b16 %v1279, %v1278
      %v1328 = vunpack.c.l.b16 %v1200
      %v1329 = vunpack.c.l.b16 %v1201
      %v1330 = vunpack.c.l.b16 %v1202
      %v1331 = vunpack.c.l.b16 %v1203
      %v1332 = vunpack.c.l.b16 %v1204
      %v1333 = vunpack.c.l.b16 %v1205
      %v1334 = vunpack.c.l.b16 %v1206
      %v1335 = vunpack.c.l.b16 %v1207
      %v1336 = vunpack.c.l.b16 %v1208
      %v1337 = vunpack.c.l.b16 %v1209
      %v1338 = vunpack.c.l.b16 %v1210
      %v1339 = vunpack.c.l.b16 %v1211
      %v1340 = vunpack.c.l.b16 %v1212
      %v1341 = vunpack.c.l.b16 %v1213
      %v1342 = vunpack.c.l.b16 %v1214
      %v1343 = vunpack.c.l.b16 %v1215
      %v1344 = vpack.c.b16 %v1329, %v1328
      %v1345 = vpack.c.b16 %v1331, %v1330
      %v1346 = vpack.c.b16 %v1333, %v1332
      %v1347 = vpack.c.b16 %v1335, %v1334
      %v1348 = vpack.c.b16 %v1337, %v1336
      %v1349 = vpack.c.b16 %v1339, %v1338
      %v1350 = vpack.c.b16 %v1341, %v1340
      %v1351 = vpack.c.b16 %v1343, %v1342
      %1360 = vmatpush.bf16.msra.mxu0 %v1351
      %1361 = vmatpush.bf16.msra.mxu0 %v1350
      %1362 = vmatpush.bf16.msra.mxu0 %v1349
      %1363 = vmatpush.bf16.msra.mxu0 %v1348
      %1364 = vmatpush.bf16.msra.mxu0 %v1347
      %1365 = vmatpush.bf16.msra.mxu0 %v1346
      %1366 = vmatpush.bf16.msra.mxu0 %v1345
      %1367 = vmatpush.bf16.msra.mxu0 %v1344
      %1368 = vmatmul.bf16.gmra.mxu0 %v1280
      %v1369 = vpop.f32.mrf.mxu0
      %v1370 = vadd.f32 0.0, %v1369
      %v1371 = vpop.f32.mrf.mxu0
      %v1372 = vadd.f32 0.0, %v1371
      %1373 = vmatmul.bf16.gmra.mxu0 %v1281
      %v1374 = vpop.f32.mrf.mxu0
      %v1375 = vadd.f32 0.0, %v1374
      %v1376 = vpop.f32.mrf.mxu0
      %v1377 = vadd.f32 0.0, %v1376
      %1378 = vmatmul.bf16.gmra.mxu0 %v1282
      %v1379 = vpop.f32.mrf.mxu0
      %v1380 = vadd.f32 0.0, %v1379
      %v1381 = vpop.f32.mrf.mxu0
      %v1382 = vadd.f32 0.0, %v1381
      %1383 = vmatmul.bf16.gmra.mxu0 %v1283
      %v1384 = vpop.f32.mrf.mxu0
      %v1385 = vadd.f32 0.0, %v1384
      %v1386 = vpop.f32.mrf.mxu0
      %v1387 = vadd.f32 0.0, %v1386
      %1388 = vmatmul.bf16.gmra.mxu0 %v1284
      %v1389 = vpop.f32.mrf.mxu0
      %v1390 = vadd.f32 0.0, %v1389
      %v1391 = vpop.f32.mrf.mxu0
      %v1392 = vadd.f32 0.0, %v1391
      %1393 = vmatmul.bf16.gmra.mxu0 %v1285
      %v1394 = vpop.f32.mrf.mxu0
      %v1395 = vadd.f32 0.0, %v1394
      %v1396 = vpop.f32.mrf.mxu0
      %v1397 = vadd.f32 0.0, %v1396
      %1398 = vmatmul.bf16.gmra.mxu0 %v1286
      %v1399 = vpop.f32.mrf.mxu0
      %v1400 = vadd.f32 0.0, %v1399
      %v1401 = vpop.f32.mrf.mxu0
      %v1402 = vadd.f32 0.0, %v1401
      %1403 = vmatmul.bf16.gmra.mxu0 %v1287
      %v1404 = vpop.f32.mrf.mxu0
      %v1405 = vadd.f32 0.0, %v1404
      %v1406 = vpop.f32.mrf.mxu0
      %v1407 = vadd.f32 0.0, %v1406
      %1408 = vmatmul.bf16.gmra.mxu0 %v1288
      %v1409 = vpop.f32.mrf.mxu0
      %v1410 = vadd.f32 0.0, %v1409
      %v1411 = vpop.f32.mrf.mxu0
      %v1412 = vadd.f32 0.0, %v1411
      %1413 = vmatmul.bf16.gmra.mxu0 %v1289
      %v1414 = vpop.f32.mrf.mxu0
      %v1415 = vadd.f32 0.0, %v1414
      %v1416 = vpop.f32.mrf.mxu0
      %v1417 = vadd.f32 0.0, %v1416
      %1418 = vmatmul.bf16.gmra.mxu0 %v1290
      %v1419 = vpop.f32.mrf.mxu0
      %v1420 = vadd.f32 0.0, %v1419
      %v1421 = vpop.f32.mrf.mxu0
      %v1422 = vadd.f32 0.0, %v1421
      %1423 = vmatmul.bf16.gmra.mxu0 %v1291
      %v1424 = vpop.f32.mrf.mxu0
      %v1425 = vadd.f32 0.0, %v1424
      %v1426 = vpop.f32.mrf.mxu0
      %v1427 = vadd.f32 0.0, %v1426
      %1428 = vmatmul.bf16.gmra.mxu0 %v1292
      %v1429 = vpop.f32.mrf.mxu0
      %v1430 = vadd.f32 0.0, %v1429
      %v1431 = vpop.f32.mrf.mxu0
      %v1432 = vadd.f32 0.0, %v1431
      %1433 = vmatmul.bf16.gmra.mxu0 %v1293
      %v1434 = vpop.f32.mrf.mxu0
      %v1435 = vadd.f32 0.0, %v1434
      %v1436 = vpop.f32.mrf.mxu0
      %v1437 = vadd.f32 0.0, %v1436
      %1438 = vmatmul.bf16.gmra.mxu0 %v1294
      %v1439 = vpop.f32.mrf.mxu0
      %v1440 = vadd.f32 0.0, %v1439
      %v1441 = vpop.f32.mrf.mxu0
      %v1442 = vadd.f32 0.0, %v1441
      %1443 = vmatmul.bf16.gmra.mxu0 %v1295
      %v1444 = vpop.f32.mrf.mxu0
      %v1445 = vadd.f32 0.0, %v1444
      %v1446 = vpop.f32.mrf.mxu0
      %v1447 = vadd.f32 0.0, %v1446
      %1448 = vdwg.mxu0
      %v1449 = vunpack.c.l.b16 %v843
      %v1450 = vunpack.c.l.b16 %v852
      %v1451 = vunpack.c.l.b16 %v865
      %v1452 = vunpack.c.l.b16 %v874
      %v1453 = vunpack.c.l.b16 %v887
      %v1454 = vunpack.c.l.b16 %v896
      %v1455 = vunpack.c.l.b16 %v909
      %v1456 = vunpack.c.l.b16 %v918
      %v1457 = vunpack.c.l.b16 %v931
      %v1458 = vunpack.c.l.b16 %v940
      %v1459 = vunpack.c.l.b16 %v953
      %v1460 = vunpack.c.l.b16 %v962
      %v1461 = vunpack.c.l.b16 %v975
      %v1462 = vunpack.c.l.b16 %v984
      %v1463 = vunpack.c.l.b16 %v997
      %v1464 = vunpack.c.l.b16 %v1006
      %v1465 = vunpack.c.l.b16 %v1019
      %v1466 = vunpack.c.l.b16 %v1028
      %v1467 = vunpack.c.l.b16 %v1041
      %v1468 = vunpack.c.l.b16 %v1050
      %v1469 = vunpack.c.l.b16 %v1063
      %v1470 = vunpack.c.l.b16 %v1072
      %v1471 = vunpack.c.l.b16 %v1085
      %v1472 = vunpack.c.l.b16 %v1094
      %v1473 = vunpack.c.l.b16 %v1107
      %v1474 = vunpack.c.l.b16 %v1116
      %v1475 = vunpack.c.l.b16 %v1129
      %v1476 = vunpack.c.l.b16 %v1138
      %v1477 = vunpack.c.l.b16 %v1151
      %v1478 = vunpack.c.l.b16 %v1160
      %v1479 = vunpack.c.l.b16 %v1173
      %v1480 = vunpack.c.l.b16 %v1182
      %v1481 = vpack.c.b16 %v1450, %v1449
      %v1482 = vpack.c.b16 %v1452, %v1451
      %v1483 = vpack.c.b16 %v1454, %v1453
      %v1484 = vpack.c.b16 %v1456, %v1455
      %v1485 = vpack.c.b16 %v1458, %v1457
      %v1486 = vpack.c.b16 %v1460, %v1459
      %v1487 = vpack.c.b16 %v1462, %v1461
      %v1488 = vpack.c.b16 %v1464, %v1463
      %v1489 = vpack.c.b16 %v1466, %v1465
      %v1490 = vpack.c.b16 %v1468, %v1467
      %v1491 = vpack.c.b16 %v1470, %v1469
      %v1492 = vpack.c.b16 %v1472, %v1471
      %v1493 = vpack.c.b16 %v1474, %v1473
      %v1494 = vpack.c.b16 %v1476, %v1475
      %v1495 = vpack.c.b16 %v1478, %v1477
      %v1496 = vpack.c.b16 %v1480, %v1479
      %v1529 = vunpack.c.l.b16 %v1183
      %v1530 = vunpack.c.l.b16 %v1184
      %v1531 = vunpack.c.l.b16 %v1185
      %v1532 = vunpack.c.l.b16 %v1186
      %v1533 = vunpack.c.l.b16 %v1187
      %v1534 = vunpack.c.l.b16 %v1188
      %v1535 = vunpack.c.l.b16 %v1189
      %v1536 = vunpack.c.l.b16 %v1190
      %v1537 = vunpack.c.l.b16 %v1191
      %v1538 = vunpack.c.l.b16 %v1192
      %v1539 = vunpack.c.l.b16 %v1193
      %v1540 = vunpack.c.l.b16 %v1194
      %v1541 = vunpack.c.l.b16 %v1195
      %v1542 = vunpack.c.l.b16 %v1196
      %v1543 = vunpack.c.l.b16 %v1197
      %v1544 = vunpack.c.l.b16 %v1198
      %v1545 = vpack.c.b16 %v1530, %v1529
      %v1546 = vpack.c.b16 %v1532, %v1531
      %v1547 = vpack.c.b16 %v1534, %v1533
      %v1548 = vpack.c.b16 %v1536, %v1535
      %v1549 = vpack.c.b16 %v1538, %v1537
      %v1550 = vpack.c.b16 %v1540, %v1539
      %v1551 = vpack.c.b16 %v1542, %v1541
      %v1552 = vpack.c.b16 %v1544, %v1543
      %1561 = vmatpush.bf16.msra.mxu0 %v1552
      %1562 = vmatpush.bf16.msra.mxu0 %v1551
      %1563 = vmatpush.bf16.msra.mxu0 %v1550
      %1564 = vmatpush.bf16.msra.mxu0 %v1549
      %1565 = vmatpush.bf16.msra.mxu0 %v1548
      %1566 = vmatpush.bf16.msra.mxu0 %v1547
      %1567 = vmatpush.bf16.msra.mxu0 %v1546
      %1568 = vmatpush.bf16.msra.mxu0 %v1545
      %1569 = vmatmul.bf16.gmra.mxu0 %v1481
      %v1570 = vpop.f32.mrf.mxu0
      %v1571 = vadd.f32 %v1370, %v1570
      %v1572 = vpop.f32.mrf.mxu0
      %v1573 = vadd.f32 %v1372, %v1572
      %1574 = vmatmul.bf16.gmra.mxu0 %v1482
      %v1575 = vpop.f32.mrf.mxu0
      %v1576 = vadd.f32 %v1375, %v1575
      %v1577 = vpop.f32.mrf.mxu0
      %v1578 = vadd.f32 %v1377, %v1577
      %1579 = vmatmul.bf16.gmra.mxu0 %v1483
      %v1580 = vpop.f32.mrf.mxu0
      %v1581 = vadd.f32 %v1380, %v1580
      %v1582 = vpop.f32.mrf.mxu0
      %v1583 = vadd.f32 %v1382, %v1582
      %1584 = vmatmul.bf16.gmra.mxu0 %v1484
      %v1585 = vpop.f32.mrf.mxu0
      %v1586 = vadd.f32 %v1385, %v1585
      %v1587 = vpop.f32.mrf.mxu0
      %v1588 = vadd.f32 %v1387, %v1587
      %1589 = vmatmul.bf16.gmra.mxu0 %v1485
      %v1590 = vpop.f32.mrf.mxu0
      %v1591 = vadd.f32 %v1390, %v1590
      %v1592 = vpop.f32.mrf.mxu0
      %v1593 = vadd.f32 %v1392, %v1592
      %1594 = vmatmul.bf16.gmra.mxu0 %v1486
      %v1595 = vpop.f32.mrf.mxu0
      %v1596 = vadd.f32 %v1395, %v1595
      %v1597 = vpop.f32.mrf.mxu0
      %v1598 = vadd.f32 %v1397, %v1597
      %1599 = vmatmul.bf16.gmra.mxu0 %v1487
      %v1600 = vpop.f32.mrf.mxu0
      %v1601 = vadd.f32 %v1400, %v1600
      %v1602 = vpop.f32.mrf.mxu0
      %v1603 = vadd.f32 %v1402, %v1602
      %1604 = vmatmul.bf16.gmra.mxu0 %v1488
      %v1605 = vpop.f32.mrf.mxu0
      %v1606 = vadd.f32 %v1405, %v1605
      %v1607 = vpop.f32.mrf.mxu0
      %v1608 = vadd.f32 %v1407, %v1607
      %1609 = vmatmul.bf16.gmra.mxu0 %v1489
      %v1610 = vpop.f32.mrf.mxu0
      %v1611 = vadd.f32 %v1410, %v1610
      %v1612 = vpop.f32.mrf.mxu0
      %v1613 = vadd.f32 %v1412, %v1612
      %1614 = vmatmul.bf16.gmra.mxu0 %v1490
      %v1615 = vpop.f32.mrf.mxu0
      %v1616 = vadd.f32 %v1415, %v1615
      %v1617 = vpop.f32.mrf.mxu0
      %v1618 = vadd.f32 %v1417, %v1617
      %1619 = vmatmul.bf16.gmra.mxu0 %v1491
      %v1620 = vpop.f32.mrf.mxu0
      %v1621 = vadd.f32 %v1420, %v1620
      %v1622 = vpop.f32.mrf.mxu0
      %v1623 = vadd.f32 %v1422, %v1622
      %1624 = vmatmul.bf16.gmra.mxu0 %v1492
      %v1625 = vpop.f32.mrf.mxu0
      %v1626 = vadd.f32 %v1425, %v1625
      %v1627 = vpop.f32.mrf.mxu0
      %v1628 = vadd.f32 %v1427, %v1627
      %1629 = vmatmul.bf16.gmra.mxu0 %v1493
      %v1630 = vpop.f32.mrf.mxu0
      %v1631 = vadd.f32 %v1430, %v1630
      %v1632 = vpop.f32.mrf.mxu0
      %v1633 = vadd.f32 %v1432, %v1632
      %1634 = vmatmul.bf16.gmra.mxu0 %v1494
      %v1635 = vpop.f32.mrf.mxu0
      %v1636 = vadd.f32 %v1435, %v1635
      %v1637 = vpop.f32.mrf.mxu0
      %v1638 = vadd.f32 %v1437, %v1637
      %1639 = vmatmul.bf16.gmra.mxu0 %v1495
      %v1640 = vpop.f32.mrf.mxu0
      %v1641 = vadd.f32 %v1440, %v1640
      %v1642 = vpop.f32.mrf.mxu0
      %v1643 = vadd.f32 %v1442, %v1642
      %1644 = vmatmul.bf16.gmra.mxu0 %v1496
      %v1645 = vpop.f32.mrf.mxu0
      %v1646 = vadd.f32 %v1445, %v1645
      %v1647 = vpop.f32.mrf.mxu0
      %v1648 = vadd.f32 %v1447, %v1647
      %1649 = vdwg.mxu0
      %v1650 = vld [vmem:[#allocation2 + $0x4] sm:$0xf]
      %v1651 = vld [vmem:[#allocation2 + $0x8] sm:$0xf]
      %v1652 = vld [vmem:[#allocation2 + $0xc] sm:$0x1]
      %v1653 = vld [vmem:[#allocation2 + $0x14] sm:$0xf]
      %v1654 = vld [vmem:[#allocation2 + $0x18] sm:$0xf]
      %v1655 = vld [vmem:[#allocation2 + $0x1c] sm:$0x1]
      %v1656 = vld [vmem:[#allocation2 + $0x24] sm:$0xf]
      %v1657 = vld [vmem:[#allocation2 + $0x28] sm:$0xf]
      %v1658 = vld [vmem:[#allocation2 + $0x2c] sm:$0x1]
      %v1659 = vld [vmem:[#allocation2 + $0x34] sm:$0xf]
      %v1660 = vld [vmem:[#allocation2 + $0x38] sm:$0xf]
      %v1661 = vld [vmem:[#allocation2 + $0x3c] sm:$0x1]
      %v1662 = vld [vmem:[#allocation2 + $0x44] sm:$0xf]
      %v1663 = vld [vmem:[#allocation2 + $0x48] sm:$0xf]
      %v1664 = vld [vmem:[#allocation2 + $0x4c] sm:$0x1]
      %v1665 = vld [vmem:[#allocation2 + $0x54] sm:$0xf]
      %v1666 = vld [vmem:[#allocation2 + $0x58] sm:$0xf]
      %v1667 = vld [vmem:[#allocation2 + $0x5c] sm:$0x1]
      %v1668 = vld [vmem:[#allocation2 + $0x64] sm:$0xf]
      %v1669 = vld [vmem:[#allocation2 + $0x68] sm:$0xf]
      %v1670 = vld [vmem:[#allocation2 + $0x6c] sm:$0x1]
      %v1671 = vld [vmem:[#allocation2 + $0x74] sm:$0xf]
      %v1672 = vld [vmem:[#allocation2 + $0x78] sm:$0xf]
      %v1673 = vld [vmem:[#allocation2 + $0x7c] sm:$0x1]
      %v1674 = vld [vmem:[#allocation2 + $0x84] sm:$0xf]
      %v1675 = vld [vmem:[#allocation2 + $0x88] sm:$0xf]
      %v1676 = vld [vmem:[#allocation2 + $0x8c] sm:$0x1]
      %v1677 = vld [vmem:[#allocation2 + $0x94] sm:$0xf]
      %v1678 = vld [vmem:[#allocation2 + $0x98] sm:$0xf]
      %v1679 = vld [vmem:[#allocation2 + $0x9c] sm:$0x1]
      %v1680 = vld [vmem:[#allocation2 + $0xa4] sm:$0xf]
      %v1681 = vld [vmem:[#allocation2 + $0xa8] sm:$0xf]
      %v1682 = vld [vmem:[#allocation2 + $0xac] sm:$0x1]
      %v1683 = vld [vmem:[#allocation2 + $0xb4] sm:$0xf]
      %v1684 = vld [vmem:[#allocation2 + $0xb8] sm:$0xf]
      %v1685 = vld [vmem:[#allocation2 + $0xbc] sm:$0x1]
      %v1686 = vld [vmem:[#allocation2 + $0xc4] sm:$0xf]
      %v1687 = vld [vmem:[#allocation2 + $0xc8] sm:$0xf]
      %v1688 = vld [vmem:[#allocation2 + $0xcc] sm:$0x1]
      %v1689 = vld [vmem:[#allocation2 + $0xd4] sm:$0xf]
      %v1690 = vld [vmem:[#allocation2 + $0xd8] sm:$0xf]
      %v1691 = vld [vmem:[#allocation2 + $0xdc] sm:$0x1]
      %v1692 = vld [vmem:[#allocation2 + $0xe4] sm:$0xf]
      %v1693 = vld [vmem:[#allocation2 + $0xe8] sm:$0xf]
      %v1694 = vld [vmem:[#allocation2 + $0xec] sm:$0x1]
      %v1695 = vld [vmem:[#allocation2 + $0xf4] sm:$0xf]
      %v1696 = vld [vmem:[#allocation2 + $0xf8] sm:$0xf]
      %v1697 = vld [vmem:[#allocation2 + $0xfc] sm:$0x1]
      %vm1698 = vsmask.f32 3328
      %vm1699 = vsmask.f32 7440
      %vm1700 = vmor %vm1698, %vm1699
      %v1702 = vshrl.u32 %v1650, 16
      %v1704 = vrot.slane %v1702, 4
      %v1705 = vshll.u32 %v1650, 16
      %v1707 = vrot.slane %v1705, 5
      %v1708 = vor.u32 %v1704, %v1707
      %v1709 = vrot.slane %v1708, 4
      %v1711 = vshll.u32 %v1651, 16
      %v1713 = vrot.slane %v1711, 5
      %v1714 = vsel %vm1700, %v1709, %v1713
      %v1715 = vshrl.u32 %v1651, 16
      %v1717 = vrot.slane %v1715, 4
      %v1718 = vor.u32 %v1717, %v1713
      %v1719 = vrot.slane %v1718, 4
      %v1721 = vshll.u32 %v1652, 16
      %v1723 = vrot.slane %v1721, 5
      %v1724 = vsel %vm1700, %v1719, %v1723
      %v1726 = vshrl.u32 %v1653, 16
      %v1728 = vrot.slane %v1726, 4
      %v1729 = vshll.u32 %v1653, 16
      %v1731 = vrot.slane %v1729, 5
      %v1732 = vor.u32 %v1728, %v1731
      %v1733 = vrot.slane %v1732, 4
      %v1735 = vshll.u32 %v1654, 16
      %v1737 = vrot.slane %v1735, 5
      %v1738 = vsel %vm1700, %v1733, %v1737
      %v1739 = vshrl.u32 %v1654, 16
      %v1741 = vrot.slane %v1739, 4
      %v1742 = vor.u32 %v1741, %v1737
      %v1743 = vrot.slane %v1742, 4
      %v1745 = vshll.u32 %v1655, 16
      %v1747 = vrot.slane %v1745, 5
      %v1748 = vsel %vm1700, %v1743, %v1747
      %v1750 = vshrl.u32 %v1656, 16
      %v1752 = vrot.slane %v1750, 4
      %v1753 = vshll.u32 %v1656, 16
      %v1755 = vrot.slane %v1753, 5
      %v1756 = vor.u32 %v1752, %v1755
      %v1757 = vrot.slane %v1756, 4
      %v1759 = vshll.u32 %v1657, 16
      %v1761 = vrot.slane %v1759, 5
      %v1762 = vsel %vm1700, %v1757, %v1761
      %v1763 = vshrl.u32 %v1657, 16
      %v1765 = vrot.slane %v1763, 4
      %v1766 = vor.u32 %v1765, %v1761
      %v1767 = vrot.slane %v1766, 4
      %v1769 = vshll.u32 %v1658, 16
      %v1771 = vrot.slane %v1769, 5
      %v1772 = vsel %vm1700, %v1767, %v1771
      %v1774 = vshrl.u32 %v1659, 16
      %v1776 = vrot.slane %v1774, 4
      %v1777 = vshll.u32 %v1659, 16
      %v1779 = vrot.slane %v1777, 5
      %v1780 = vor.u32 %v1776, %v1779
      %v1781 = vrot.slane %v1780, 4
      %v1783 = vshll.u32 %v1660, 16
      %v1785 = vrot.slane %v1783, 5
      %v1786 = vsel %vm1700, %v1781, %v1785
      %v1787 = vshrl.u32 %v1660, 16
      %v1789 = vrot.slane %v1787, 4
      %v1790 = vor.u32 %v1789, %v1785
      %v1791 = vrot.slane %v1790, 4
      %v1793 = vshll.u32 %v1661, 16
      %v1795 = vrot.slane %v1793, 5
      %v1796 = vsel %vm1700, %v1791, %v1795
      %v1798 = vshrl.u32 %v1662, 16
      %v1800 = vrot.slane %v1798, 4
      %v1801 = vshll.u32 %v1662, 16
      %v1803 = vrot.slane %v1801, 5
      %v1804 = vor.u32 %v1800, %v1803
      %v1805 = vrot.slane %v1804, 4
      %v1807 = vshll.u32 %v1663, 16
      %v1809 = vrot.slane %v1807, 5
      %v1810 = vsel %vm1700, %v1805, %v1809
      %v1811 = vshrl.u32 %v1663, 16
      %v1813 = vrot.slane %v1811, 4
      %v1814 = vor.u32 %v1813, %v1809
      %v1815 = vrot.slane %v1814, 4
      %v1817 = vshll.u32 %v1664, 16
      %v1819 = vrot.slane %v1817, 5
      %v1820 = vsel %vm1700, %v1815, %v1819
      %v1822 = vshrl.u32 %v1665, 16
      %v1824 = vrot.slane %v1822, 4
      %v1825 = vshll.u32 %v1665, 16
      %v1827 = vrot.slane %v1825, 5
      %v1828 = vor.u32 %v1824, %v1827
      %v1829 = vrot.slane %v1828, 4
      %v1831 = vshll.u32 %v1666, 16
      %v1833 = vrot.slane %v1831, 5
      %v1834 = vsel %vm1700, %v1829, %v1833
      %v1835 = vshrl.u32 %v1666, 16
      %v1837 = vrot.slane %v1835, 4
      %v1838 = vor.u32 %v1837, %v1833
      %v1839 = vrot.slane %v1838, 4
      %v1841 = vshll.u32 %v1667, 16
      %v1843 = vrot.slane %v1841, 5
      %v1844 = vsel %vm1700, %v1839, %v1843
      %v1846 = vshrl.u32 %v1668, 16
      %v1848 = vrot.slane %v1846, 4
      %v1849 = vshll.u32 %v1668, 16
      %v1851 = vrot.slane %v1849, 5
      %v1852 = vor.u32 %v1848, %v1851
      %v1853 = vrot.slane %v1852, 4
      %v1855 = vshll.u32 %v1669, 16
      %v1857 = vrot.slane %v1855, 5
      %v1858 = vsel %vm1700, %v1853, %v1857
      %v1859 = vshrl.u32 %v1669, 16
      %v1861 = vrot.slane %v1859, 4
      %v1862 = vor.u32 %v1861, %v1857
      %v1863 = vrot.slane %v1862, 4
      %v1865 = vshll.u32 %v1670, 16
      %v1867 = vrot.slane %v1865, 5
      %v1868 = vsel %vm1700, %v1863, %v1867
      %v1870 = vshrl.u32 %v1671, 16
      %v1872 = vrot.slane %v1870, 4
      %v1873 = vshll.u32 %v1671, 16
      %v1875 = vrot.slane %v1873, 5
      %v1876 = vor.u32 %v1872, %v1875
      %v1877 = vrot.slane %v1876, 4
      %v1879 = vshll.u32 %v1672, 16
      %v1881 = vrot.slane %v1879, 5
      %v1882 = vsel %vm1700, %v1877, %v1881
      %v1883 = vshrl.u32 %v1672, 16
      %v1885 = vrot.slane %v1883, 4
      %v1886 = vor.u32 %v1885, %v1881
      %v1887 = vrot.slane %v1886, 4
      %v1889 = vshll.u32 %v1673, 16
      %v1891 = vrot.slane %v1889, 5
      %v1892 = vsel %vm1700, %v1887, %v1891
      %v1894 = vshrl.u32 %v1674, 16
      %v1896 = vrot.slane %v1894, 4
      %v1897 = vshll.u32 %v1674, 16
      %v1899 = vrot.slane %v1897, 5
      %v1900 = vor.u32 %v1896, %v1899
      %v1901 = vrot.slane %v1900, 4
      %v1903 = vshll.u32 %v1675, 16
      %v1905 = vrot.slane %v1903, 5
      %v1906 = vsel %vm1700, %v1901, %v1905
      %v1907 = vshrl.u32 %v1675, 16
      %v1909 = vrot.slane %v1907, 4
      %v1910 = vor.u32 %v1909, %v1905
      %v1911 = vrot.slane %v1910, 4
      %v1913 = vshll.u32 %v1676, 16
      %v1915 = vrot.slane %v1913, 5
      %v1916 = vsel %vm1700, %v1911, %v1915
      %v1918 = vshrl.u32 %v1677, 16
      %v1920 = vrot.slane %v1918, 4
      %v1921 = vshll.u32 %v1677, 16
      %v1923 = vrot.slane %v1921, 5
      %v1924 = vor.u32 %v1920, %v1923
      %v1925 = vrot.slane %v1924, 4
      %v1927 = vshll.u32 %v1678, 16
      %v1929 = vrot.slane %v1927, 5
      %v1930 = vsel %vm1700, %v1925, %v1929
      %v1931 = vshrl.u32 %v1678, 16
      %v1933 = vrot.slane %v1931, 4
      %v1934 = vor.u32 %v1933, %v1929
      %v1935 = vrot.slane %v1934, 4
      %v1937 = vshll.u32 %v1679, 16
      %v1939 = vrot.slane %v1937, 5
      %v1940 = vsel %vm1700, %v1935, %v1939
      %v1942 = vshrl.u32 %v1680, 16
      %v1944 = vrot.slane %v1942, 4
      %v1945 = vshll.u32 %v1680, 16
      %v1947 = vrot.slane %v1945, 5
      %v1948 = vor.u32 %v1944, %v1947
      %v1949 = vrot.slane %v1948, 4
      %v1951 = vshll.u32 %v1681, 16
      %v1953 = vrot.slane %v1951, 5
      %v1954 = vsel %vm1700, %v1949, %v1953
      %v1955 = vshrl.u32 %v1681, 16
      %v1957 = vrot.slane %v1955, 4
      %v1958 = vor.u32 %v1957, %v1953
      %v1959 = vrot.slane %v1958, 4
      %v1961 = vshll.u32 %v1682, 16
      %v1963 = vrot.slane %v1961, 5
      %v1964 = vsel %vm1700, %v1959, %v1963
      %v1966 = vshrl.u32 %v1683, 16
      %v1968 = vrot.slane %v1966, 4
      %v1969 = vshll.u32 %v1683, 16
      %v1971 = vrot.slane %v1969, 5
      %v1972 = vor.u32 %v1968, %v1971
      %v1973 = vrot.slane %v1972, 4
      %v1975 = vshll.u32 %v1684, 16
      %v1977 = vrot.slane %v1975, 5
      %v1978 = vsel %vm1700, %v1973, %v1977
      %v1979 = vshrl.u32 %v1684, 16
      %v1981 = vrot.slane %v1979, 4
      %v1982 = vor.u32 %v1981, %v1977
      %v1983 = vrot.slane %v1982, 4
      %v1985 = vshll.u32 %v1685, 16
      %v1987 = vrot.slane %v1985, 5
      %v1988 = vsel %vm1700, %v1983, %v1987
      %v1990 = vshrl.u32 %v1686, 16
      %v1992 = vrot.slane %v1990, 4
      %v1993 = vshll.u32 %v1686, 16
      %v1995 = vrot.slane %v1993, 5
      %v1996 = vor.u32 %v1992, %v1995
      %v1997 = vrot.slane %v1996, 4
      %v1999 = vshll.u32 %v1687, 16
      %v2001 = vrot.slane %v1999, 5
      %v2002 = vsel %vm1700, %v1997, %v2001
      %v2003 = vshrl.u32 %v1687, 16
      %v2005 = vrot.slane %v2003, 4
      %v2006 = vor.u32 %v2005, %v2001
      %v2007 = vrot.slane %v2006, 4
      %v2009 = vshll.u32 %v1688, 16
      %v2011 = vrot.slane %v2009, 5
      %v2012 = vsel %vm1700, %v2007, %v2011
      %v2014 = vshrl.u32 %v1689, 16
      %v2016 = vrot.slane %v2014, 4
      %v2017 = vshll.u32 %v1689, 16
      %v2019 = vrot.slane %v2017, 5
      %v2020 = vor.u32 %v2016, %v2019
      %v2021 = vrot.slane %v2020, 4
      %v2023 = vshll.u32 %v1690, 16
      %v2025 = vrot.slane %v2023, 5
      %v2026 = vsel %vm1700, %v2021, %v2025
      %v2027 = vshrl.u32 %v1690, 16
      %v2029 = vrot.slane %v2027, 4
      %v2030 = vor.u32 %v2029, %v2025
      %v2031 = vrot.slane %v2030, 4
      %v2033 = vshll.u32 %v1691, 16
      %v2035 = vrot.slane %v2033, 5
      %v2036 = vsel %vm1700, %v2031, %v2035
      %v2038 = vshrl.u32 %v1692, 16
      %v2040 = vrot.slane %v2038, 4
      %v2041 = vshll.u32 %v1692, 16
      %v2043 = vrot.slane %v2041, 5
      %v2044 = vor.u32 %v2040, %v2043
      %v2045 = vrot.slane %v2044, 4
      %v2047 = vshll.u32 %v1693, 16
      %v2049 = vrot.slane %v2047, 5
      %v2050 = vsel %vm1700, %v2045, %v2049
      %v2051 = vshrl.u32 %v1693, 16
      %v2053 = vrot.slane %v2051, 4
      %v2054 = vor.u32 %v2053, %v2049
      %v2055 = vrot.slane %v2054, 4
      %v2057 = vshll.u32 %v1694, 16
      %v2059 = vrot.slane %v2057, 5
      %v2060 = vsel %vm1700, %v2055, %v2059
      %v2062 = vshrl.u32 %v1695, 16
      %v2064 = vrot.slane %v2062, 4
      %v2065 = vshll.u32 %v1695, 16
      %v2067 = vrot.slane %v2065, 5
      %v2068 = vor.u32 %v2064, %v2067
      %v2069 = vrot.slane %v2068, 4
      %v2071 = vshll.u32 %v1696, 16
      %v2073 = vrot.slane %v2071, 5
      %v2074 = vsel %vm1700, %v2069, %v2073
      %v2075 = vshrl.u32 %v1696, 16
      %v2077 = vrot.slane %v2075, 4
      %v2078 = vor.u32 %v2077, %v2073
      %v2079 = vrot.slane %v2078, 4
      %v2081 = vshll.u32 %v1697, 16
      %v2083 = vrot.slane %v2081, 5
      %v2084 = vsel %vm1700, %v2079, %v2083
      %s2085 = scalar_lea.vmem %s3, 128
      %v2086 = vld [vmem:[%s2085] sm:$0xf]
      %v2087 = vld [vmem:[%s2085 + $0x4] sm:$0xf]
      %v2088 = vld [vmem:[%s2085 + $0x8] sm:$0xf]
      %v2089 = vld [vmem:[%s2085 + $0xc] sm:$0xf]
      %v2090 = vld [vmem:[%s2085 + $0x10] sm:$0xf]
      %v2091 = vld [vmem:[%s2085 + $0x14] sm:$0xf]
      %v2092 = vld [vmem:[%s2085 + $0x18] sm:$0xf]
      %v2093 = vld [vmem:[%s2085 + $0x1c] sm:$0xf]
      %v2094 = vld [vmem:[%s2085 + $0x20] sm:$0xf]
      %v2095 = vld [vmem:[%s2085 + $0x24] sm:$0xf]
      %v2096 = vld [vmem:[%s2085 + $0x28] sm:$0xf]
      %v2097 = vld [vmem:[%s2085 + $0x2c] sm:$0xf]
      %v2098 = vld [vmem:[%s2085 + $0x30] sm:$0xf]
      %v2099 = vld [vmem:[%s2085 + $0x34] sm:$0xf]
      %v2100 = vld [vmem:[%s2085 + $0x38] sm:$0xf]
      %v2101 = vld [vmem:[%s2085 + $0x3c] sm:$0xf]
      %v2102 = vunpack.c.l.b16 %v1714
      %v2103 = vunpack.c.l.b16 %v1724
      %v2104 = vunpack.c.l.b16 %v1738
      %v2105 = vunpack.c.l.b16 %v1748
      %v2106 = vunpack.c.l.b16 %v1762
      %v2107 = vunpack.c.l.b16 %v1772
      %v2108 = vunpack.c.l.b16 %v1786
      %v2109 = vunpack.c.l.b16 %v1796
      %v2110 = vunpack.c.l.b16 %v1810
      %v2111 = vunpack.c.l.b16 %v1820
      %v2112 = vunpack.c.l.b16 %v1834
      %v2113 = vunpack.c.l.b16 %v1844
      %v2114 = vunpack.c.l.b16 %v1858
      %v2115 = vunpack.c.l.b16 %v1868
      %v2116 = vunpack.c.l.b16 %v1882
      %v2117 = vunpack.c.l.b16 %v1892
      %v2118 = vunpack.c.l.b16 %v1906
      %v2119 = vunpack.c.l.b16 %v1916
      %v2120 = vunpack.c.l.b16 %v1930
      %v2121 = vunpack.c.l.b16 %v1940
      %v2122 = vunpack.c.l.b16 %v1954
      %v2123 = vunpack.c.l.b16 %v1964
      %v2124 = vunpack.c.l.b16 %v1978
      %v2125 = vunpack.c.l.b16 %v1988
      %v2126 = vunpack.c.l.b16 %v2002
      %v2127 = vunpack.c.l.b16 %v2012
      %v2128 = vunpack.c.l.b16 %v2026
      %v2129 = vunpack.c.l.b16 %v2036
      %v2130 = vunpack.c.l.b16 %v2050
      %v2131 = vunpack.c.l.b16 %v2060
      %v2132 = vunpack.c.l.b16 %v2074
      %v2133 = vunpack.c.l.b16 %v2084
      %v2134 = vpack.c.b16 %v2103, %v2102
      %v2135 = vpack.c.b16 %v2105, %v2104
      %v2136 = vpack.c.b16 %v2107, %v2106
      %v2137 = vpack.c.b16 %v2109, %v2108
      %v2138 = vpack.c.b16 %v2111, %v2110
      %v2139 = vpack.c.b16 %v2113, %v2112
      %v2140 = vpack.c.b16 %v2115, %v2114
      %v2141 = vpack.c.b16 %v2117, %v2116
      %v2142 = vpack.c.b16 %v2119, %v2118
      %v2143 = vpack.c.b16 %v2121, %v2120
      %v2144 = vpack.c.b16 %v2123, %v2122
      %v2145 = vpack.c.b16 %v2125, %v2124
      %v2146 = vpack.c.b16 %v2127, %v2126
      %v2147 = vpack.c.b16 %v2129, %v2128
      %v2148 = vpack.c.b16 %v2131, %v2130
      %v2149 = vpack.c.b16 %v2133, %v2132
      %v2182 = vunpack.c.l.b16 %v2086
      %v2183 = vunpack.c.l.b16 %v2087
      %v2184 = vunpack.c.l.b16 %v2088
      %v2185 = vunpack.c.l.b16 %v2089
      %v2186 = vunpack.c.l.b16 %v2090
      %v2187 = vunpack.c.l.b16 %v2091
      %v2188 = vunpack.c.l.b16 %v2092
      %v2189 = vunpack.c.l.b16 %v2093
      %v2190 = vunpack.c.l.b16 %v2094
      %v2191 = vunpack.c.l.b16 %v2095
      %v2192 = vunpack.c.l.b16 %v2096
      %v2193 = vunpack.c.l.b16 %v2097
      %v2194 = vunpack.c.l.b16 %v2098
      %v2195 = vunpack.c.l.b16 %v2099
      %v2196 = vunpack.c.l.b16 %v2100
      %v2197 = vunpack.c.l.b16 %v2101
      %v2198 = vpack.c.b16 %v2183, %v2182
      %v2199 = vpack.c.b16 %v2185, %v2184
      %v2200 = vpack.c.b16 %v2187, %v2186
      %v2201 = vpack.c.b16 %v2189, %v2188
      %v2202 = vpack.c.b16 %v2191, %v2190
      %v2203 = vpack.c.b16 %v2193, %v2192
      %v2204 = vpack.c.b16 %v2195, %v2194
      %v2205 = vpack.c.b16 %v2197, %v2196
      %2214 = vmatpush.bf16.msra.mxu0 %v2205
      %2215 = vmatpush.bf16.msra.mxu0 %v2204
      %2216 = vmatpush.bf16.msra.mxu0 %v2203
      %2217 = vmatpush.bf16.msra.mxu0 %v2202
      %2218 = vmatpush.bf16.msra.mxu0 %v2201
      %2219 = vmatpush.bf16.msra.mxu0 %v2200
      %2220 = vmatpush.bf16.msra.mxu0 %v2199
      %2221 = vmatpush.bf16.msra.mxu0 %v2198
      %2222 = vmatmul.bf16.gmra.mxu0 %v2134
      %v2223 = vpop.f32.mrf.mxu0
      %v2224 = vadd.f32 0.0, %v2223
      %v2225 = vpop.f32.mrf.mxu0
      %v2226 = vadd.f32 0.0, %v2225
      %2227 = vmatmul.bf16.gmra.mxu0 %v2135
      %v2228 = vpop.f32.mrf.mxu0
      %v2229 = vadd.f32 0.0, %v2228
      %v2230 = vpop.f32.mrf.mxu0
      %v2231 = vadd.f32 0.0, %v2230
      %2232 = vmatmul.bf16.gmra.mxu0 %v2136
      %v2233 = vpop.f32.mrf.mxu0
      %v2234 = vadd.f32 0.0, %v2233
      %v2235 = vpop.f32.mrf.mxu0
      %v2236 = vadd.f32 0.0, %v2235
      %2237 = vmatmul.bf16.gmra.mxu0 %v2137
      %v2238 = vpop.f32.mrf.mxu0
      %v2239 = vadd.f32 0.0, %v2238
      %v2240 = vpop.f32.mrf.mxu0
      %v2241 = vadd.f32 0.0, %v2240
      %2242 = vmatmul.bf16.gmra.mxu0 %v2138
      %v2243 = vpop.f32.mrf.mxu0
      %v2244 = vadd.f32 0.0, %v2243
      %v2245 = vpop.f32.mrf.mxu0
      %v2246 = vadd.f32 0.0, %v2245
      %2247 = vmatmul.bf16.gmra.mxu0 %v2139
      %v2248 = vpop.f32.mrf.mxu0
      %v2249 = vadd.f32 0.0, %v2248
      %v2250 = vpop.f32.mrf.mxu0
      %v2251 = vadd.f32 0.0, %v2250
      %2252 = vmatmul.bf16.gmra.mxu0 %v2140
      %v2253 = vpop.f32.mrf.mxu0
      %v2254 = vadd.f32 0.0, %v2253
      %v2255 = vpop.f32.mrf.mxu0
      %v2256 = vadd.f32 0.0, %v2255
      %2257 = vmatmul.bf16.gmra.mxu0 %v2141
      %v2258 = vpop.f32.mrf.mxu0
      %v2259 = vadd.f32 0.0, %v2258
      %v2260 = vpop.f32.mrf.mxu0
      %v2261 = vadd.f32 0.0, %v2260
      %2262 = vmatmul.bf16.gmra.mxu0 %v2142
      %v2263 = vpop.f32.mrf.mxu0
      %v2264 = vadd.f32 0.0, %v2263
      %v2265 = vpop.f32.mrf.mxu0
      %v2266 = vadd.f32 0.0, %v2265
      %2267 = vmatmul.bf16.gmra.mxu0 %v2143
      %v2268 = vpop.f32.mrf.mxu0
      %v2269 = vadd.f32 0.0, %v2268
      %v2270 = vpop.f32.mrf.mxu0
      %v2271 = vadd.f32 0.0, %v2270
      %2272 = vmatmul.bf16.gmra.mxu0 %v2144
      %v2273 = vpop.f32.mrf.mxu0
      %v2274 = vadd.f32 0.0, %v2273
      %v2275 = vpop.f32.mrf.mxu0
      %v2276 = vadd.f32 0.0, %v2275
      %2277 = vmatmul.bf16.gmra.mxu0 %v2145
      %v2278 = vpop.f32.mrf.mxu0
      %v2279 = vadd.f32 0.0, %v2278
      %v2280 = vpop.f32.mrf.mxu0
      %v2281 = vadd.f32 0.0, %v2280
      %2282 = vmatmul.bf16.gmra.mxu0 %v2146
      %v2283 = vpop.f32.mrf.mxu0
      %v2284 = vadd.f32 0.0, %v2283
      %v2285 = vpop.f32.mrf.mxu0
      %v2286 = vadd.f32 0.0, %v2285
      %2287 = vmatmul.bf16.gmra.mxu0 %v2147
      %v2288 = vpop.f32.mrf.mxu0
      %v2289 = vadd.f32 0.0, %v2288
      %v2290 = vpop.f32.mrf.mxu0
      %v2291 = vadd.f32 0.0, %v2290
      %2292 = vmatmul.bf16.gmra.mxu0 %v2148
      %v2293 = vpop.f32.mrf.mxu0
      %v2294 = vadd.f32 0.0, %v2293
      %v2295 = vpop.f32.mrf.mxu0
      %v2296 = vadd.f32 0.0, %v2295
      %2297 = vmatmul.bf16.gmra.mxu0 %v2149
      %v2298 = vpop.f32.mrf.mxu0
      %v2299 = vadd.f32 0.0, %v2298
      %v2300 = vpop.f32.mrf.mxu0
      %v2301 = vadd.f32 0.0, %v2300
      %2302 = vdwg.mxu0
      %v2303 = vadd.f32 %v1571, %v2224
      %v2304 = vadd.f32 %v1573, %v2226
      %v2305 = vadd.f32 %v1576, %v2229
      %v2306 = vadd.f32 %v1578, %v2231
      %v2307 = vadd.f32 %v1581, %v2234
      %v2308 = vadd.f32 %v1583, %v2236
      %v2309 = vadd.f32 %v1586, %v2239
      %v2310 = vadd.f32 %v1588, %v2241
      %v2311 = vadd.f32 %v1591, %v2244
      %v2312 = vadd.f32 %v1593, %v2246
      %v2313 = vadd.f32 %v1596, %v2249
      %v2314 = vadd.f32 %v1598, %v2251
      %v2315 = vadd.f32 %v1601, %v2254
      %v2316 = vadd.f32 %v1603, %v2256
      %v2317 = vadd.f32 %v1606, %v2259
      %v2318 = vadd.f32 %v1608, %v2261
      %v2319 = vadd.f32 %v1611, %v2264
      %v2320 = vadd.f32 %v1613, %v2266
      %v2321 = vadd.f32 %v1616, %v2269
      %v2322 = vadd.f32 %v1618, %v2271
      %v2323 = vadd.f32 %v1621, %v2274
      %v2324 = vadd.f32 %v1623, %v2276
      %v2325 = vadd.f32 %v1626, %v2279
      %v2326 = vadd.f32 %v1628, %v2281
      %v2327 = vadd.f32 %v1631, %v2284
      %v2328 = vadd.f32 %v1633, %v2286
      %v2329 = vadd.f32 %v1636, %v2289
      %v2330 = vadd.f32 %v1638, %v2291
      %v2331 = vadd.f32 %v1641, %v2294
      %v2332 = vadd.f32 %v1643, %v2296
      %v2333 = vadd.f32 %v1646, %v2299
      %v2334 = vadd.f32 %v1648, %v2301
      %v2335 = vld [vmem:[%s303] sm:$0x8]
      %v2336 = vld [vmem:[%s303 + $0x4] sm:$0xf]
      %v2337 = vld [vmem:[%s303 + $0x8] sm:$0xf]
      %v2338 = vld [vmem:[%s303 + $0x10] sm:$0x8]
      %v2339 = vld [vmem:[%s303 + $0x14] sm:$0xf]
      %v2340 = vld [vmem:[%s303 + $0x18] sm:$0xf]
      %v2341 = vld [vmem:[%s303 + $0x20] sm:$0x8]
      %v2342 = vld [vmem:[%s303 + $0x24] sm:$0xf]
      %v2343 = vld [vmem:[%s303 + $0x28] sm:$0xf]
      %v2344 = vld [vmem:[%s303 + $0x30] sm:$0x8]
      %v2345 = vld [vmem:[%s303 + $0x34] sm:$0xf]
      %v2346 = vld [vmem:[%s303 + $0x38] sm:$0xf]
      %v2347 = vld [vmem:[%s303 + $0x40] sm:$0x8]
      %v2348 = vld [vmem:[%s303 + $0x44] sm:$0xf]
      %v2349 = vld [vmem:[%s303 + $0x48] sm:$0xf]
      %v2350 = vld [vmem:[%s303 + $0x50] sm:$0x8]
      %v2351 = vld [vmem:[%s303 + $0x54] sm:$0xf]
      %v2352 = vld [vmem:[%s303 + $0x58] sm:$0xf]
      %v2353 = vld [vmem:[%s303 + $0x60] sm:$0x8]
      %v2354 = vld [vmem:[%s303 + $0x64] sm:$0xf]
      %v2355 = vld [vmem:[%s303 + $0x68] sm:$0xf]
      %v2356 = vld [vmem:[%s303 + $0x70] sm:$0x8]
      %v2357 = vld [vmem:[%s303 + $0x74] sm:$0xf]
      %v2358 = vld [vmem:[%s303 + $0x78] sm:$0xf]
      %v2359 = vld [vmem:[%s303 + $0x80] sm:$0x8]
      %v2360 = vld [vmem:[%s303 + $0x84] sm:$0xf]
      %v2361 = vld [vmem:[%s303 + $0x88] sm:$0xf]
      %v2362 = vld [vmem:[%s303 + $0x90] sm:$0x8]
      %v2363 = vld [vmem:[%s303 + $0x94] sm:$0xf]
      %v2364 = vld [vmem:[%s303 + $0x98] sm:$0xf]
      %v2365 = vld [vmem:[%s303 + $0xa0] sm:$0x8]
      %v2366 = vld [vmem:[%s303 + $0xa4] sm:$0xf]
      %v2367 = vld [vmem:[%s303 + $0xa8] sm:$0xf]
      %v2368 = vld [vmem:[%s303 + $0xb0] sm:$0x8]
      %v2369 = vld [vmem:[%s303 + $0xb4] sm:$0xf]
      %v2370 = vld [vmem:[%s303 + $0xb8] sm:$0xf]
      %v2371 = vld [vmem:[%s303 + $0xc0] sm:$0x8]
      %v2372 = vld [vmem:[%s303 + $0xc4] sm:$0xf]
      %v2373 = vld [vmem:[%s303 + $0xc8] sm:$0xf]
      %v2374 = vld [vmem:[%s303 + $0xd0] sm:$0x8]
      %v2375 = vld [vmem:[%s303 + $0xd4] sm:$0xf]
      %v2376 = vld [vmem:[%s303 + $0xd8] sm:$0xf]
      %v2377 = vld [vmem:[%s303 + $0xe0] sm:$0x8]
      %v2378 = vld [vmem:[%s303 + $0xe4] sm:$0xf]
      %v2379 = vld [vmem:[%s303 + $0xe8] sm:$0xf]
      %v2380 = vld [vmem:[%s303 + $0xf0] sm:$0x8]
      %v2381 = vld [vmem:[%s303 + $0xf4] sm:$0xf]
      %v2382 = vld [vmem:[%s303 + $0xf8] sm:$0xf]
      %v2384 = vshrl.u32 %v2335, 16
      %v2386 = vrot.slane %v2384, 7
      %v2387 = vrot.slane %v2386, 4
      %v2389 = vshrl.u32 %v2336, 16
      %v2391 = vrot.slane %v2389, 7
      %v2392 = vshll.u32 %v2336, 16
      %v2394 = vor.u32 %v2391, %v2392
      %v2395 = vsel %vm830, %v2387, %v2394
      %v2396 = vrot.slane %v2391, 4
      %v2398 = vshrl.u32 %v2337, 16
      %v2400 = vrot.slane %v2398, 7
      %v2401 = vshll.u32 %v2337, 16
      %v2403 = vor.u32 %v2400, %v2401
      %v2404 = vsel %vm830, %v2396, %v2403
      %v2406 = vshrl.u32 %v2338, 16
      %v2408 = vrot.slane %v2406, 7
      %v2409 = vrot.slane %v2408, 4
      %v2411 = vshrl.u32 %v2339, 16
      %v2413 = vrot.slane %v2411, 7
      %v2414 = vshll.u32 %v2339, 16
      %v2416 = vor.u32 %v2413, %v2414
      %v2417 = vsel %vm830, %v2409, %v2416
      %v2418 = vrot.slane %v2413, 4
      %v2420 = vshrl.u32 %v2340, 16
      %v2422 = vrot.slane %v2420, 7
      %v2423 = vshll.u32 %v2340, 16
      %v2425 = vor.u32 %v2422, %v2423
      %v2426 = vsel %vm830, %v2418, %v2425
      %v2428 = vshrl.u32 %v2341, 16
      %v2430 = vrot.slane %v2428, 7
      %v2431 = vrot.slane %v2430, 4
      %v2433 = vshrl.u32 %v2342, 16
      %v2435 = vrot.slane %v2433, 7
      %v2436 = vshll.u32 %v2342, 16
      %v2438 = vor.u32 %v2435, %v2436
      %v2439 = vsel %vm830, %v2431, %v2438
      %v2440 = vrot.slane %v2435, 4
      %v2442 = vshrl.u32 %v2343, 16
      %v2444 = vrot.slane %v2442, 7
      %v2445 = vshll.u32 %v2343, 16
      %v2447 = vor.u32 %v2444, %v2445
      %v2448 = vsel %vm830, %v2440, %v2447
      %v2450 = vshrl.u32 %v2344, 16
      %v2452 = vrot.slane %v2450, 7
      %v2453 = vrot.slane %v2452, 4
      %v2455 = vshrl.u32 %v2345, 16
      %v2457 = vrot.slane %v2455, 7
      %v2458 = vshll.u32 %v2345, 16
      %v2460 = vor.u32 %v2457, %v2458
      %v2461 = vsel %vm830, %v2453, %v2460
      %v2462 = vrot.slane %v2457, 4
      %v2464 = vshrl.u32 %v2346, 16
      %v2466 = vrot.slane %v2464, 7
      %v2467 = vshll.u32 %v2346, 16
      %v2469 = vor.u32 %v2466, %v2467
      %v2470 = vsel %vm830, %v2462, %v2469
      %v2472 = vshrl.u32 %v2347, 16
      %v2474 = vrot.slane %v2472, 7
      %v2475 = vrot.slane %v2474, 4
      %v2477 = vshrl.u32 %v2348, 16
      %v2479 = vrot.slane %v2477, 7
      %v2480 = vshll.u32 %v2348, 16
      %v2482 = vor.u32 %v2479, %v2480
      %v2483 = vsel %vm830, %v2475, %v2482
      %v2484 = vrot.slane %v2479, 4
      %v2486 = vshrl.u32 %v2349, 16
      %v2488 = vrot.slane %v2486, 7
      %v2489 = vshll.u32 %v2349, 16
      %v2491 = vor.u32 %v2488, %v2489
      %v2492 = vsel %vm830, %v2484, %v2491
      %v2494 = vshrl.u32 %v2350, 16
      %v2496 = vrot.slane %v2494, 7
      %v2497 = vrot.slane %v2496, 4
      %v2499 = vshrl.u32 %v2351, 16
      %v2501 = vrot.slane %v2499, 7
      %v2502 = vshll.u32 %v2351, 16
      %v2504 = vor.u32 %v2501, %v2502
      %v2505 = vsel %vm830, %v2497, %v2504
      %v2506 = vrot.slane %v2501, 4
      %v2508 = vshrl.u32 %v2352, 16
      %v2510 = vrot.slane %v2508, 7
      %v2511 = vshll.u32 %v2352, 16
      %v2513 = vor.u32 %v2510, %v2511
      %v2514 = vsel %vm830, %v2506, %v2513
      %v2516 = vshrl.u32 %v2353, 16
      %v2518 = vrot.slane %v2516, 7
      %v2519 = vrot.slane %v2518, 4
      %v2521 = vshrl.u32 %v2354, 16
      %v2523 = vrot.slane %v2521, 7
      %v2524 = vshll.u32 %v2354, 16
      %v2526 = vor.u32 %v2523, %v2524
      %v2527 = vsel %vm830, %v2519, %v2526
      %v2528 = vrot.slane %v2523, 4
      %v2530 = vshrl.u32 %v2355, 16
      %v2532 = vrot.slane %v2530, 7
      %v2533 = vshll.u32 %v2355, 16
      %v2535 = vor.u32 %v2532, %v2533
      %v2536 = vsel %vm830, %v2528, %v2535
      %v2538 = vshrl.u32 %v2356, 16
      %v2540 = vrot.slane %v2538, 7
      %v2541 = vrot.slane %v2540, 4
      %v2543 = vshrl.u32 %v2357, 16
      %v2545 = vrot.slane %v2543, 7
      %v2546 = vshll.u32 %v2357, 16
      %v2548 = vor.u32 %v2545, %v2546
      %v2549 = vsel %vm830, %v2541, %v2548
      %v2550 = vrot.slane %v2545, 4
      %v2552 = vshrl.u32 %v2358, 16
      %v2554 = vrot.slane %v2552, 7
      %v2555 = vshll.u32 %v2358, 16
      %v2557 = vor.u32 %v2554, %v2555
      %v2558 = vsel %vm830, %v2550, %v2557
      %v2560 = vshrl.u32 %v2359, 16
      %v2562 = vrot.slane %v2560, 7
      %v2563 = vrot.slane %v2562, 4
      %v2565 = vshrl.u32 %v2360, 16
      %v2567 = vrot.slane %v2565, 7
      %v2568 = vshll.u32 %v2360, 16
      %v2570 = vor.u32 %v2567, %v2568
      %v2571 = vsel %vm830, %v2563, %v2570
      %v2572 = vrot.slane %v2567, 4
      %v2574 = vshrl.u32 %v2361, 16
      %v2576 = vrot.slane %v2574, 7
      %v2577 = vshll.u32 %v2361, 16
      %v2579 = vor.u32 %v2576, %v2577
      %v2580 = vsel %vm830, %v2572, %v2579
      %v2582 = vshrl.u32 %v2362, 16
      %v2584 = vrot.slane %v2582, 7
      %v2585 = vrot.slane %v2584, 4
      %v2587 = vshrl.u32 %v2363, 16
      %v2589 = vrot.slane %v2587, 7
      %v2590 = vshll.u32 %v2363, 16
      %v2592 = vor.u32 %v2589, %v2590
      %v2593 = vsel %vm830, %v2585, %v2592
      %v2594 = vrot.slane %v2589, 4
      %v2596 = vshrl.u32 %v2364, 16
      %v2598 = vrot.slane %v2596, 7
      %v2599 = vshll.u32 %v2364, 16
      %v2601 = vor.u32 %v2598, %v2599
      %v2602 = vsel %vm830, %v2594, %v2601
      %v2604 = vshrl.u32 %v2365, 16
      %v2606 = vrot.slane %v2604, 7
      %v2607 = vrot.slane %v2606, 4
      %v2609 = vshrl.u32 %v2366, 16
      %v2611 = vrot.slane %v2609, 7
      %v2612 = vshll.u32 %v2366, 16
      %v2614 = vor.u32 %v2611, %v2612
      %v2615 = vsel %vm830, %v2607, %v2614
      %v2616 = vrot.slane %v2611, 4
      %v2618 = vshrl.u32 %v2367, 16
      %v2620 = vrot.slane %v2618, 7
      %v2621 = vshll.u32 %v2367, 16
      %v2623 = vor.u32 %v2620, %v2621
      %v2624 = vsel %vm830, %v2616, %v2623
      %v2626 = vshrl.u32 %v2368, 16
      %v2628 = vrot.slane %v2626, 7
      %v2629 = vrot.slane %v2628, 4
      %v2631 = vshrl.u32 %v2369, 16
      %v2633 = vrot.slane %v2631, 7
      %v2634 = vshll.u32 %v2369, 16
      %v2636 = vor.u32 %v2633, %v2634
      %v2637 = vsel %vm830, %v2629, %v2636
      %v2638 = vrot.slane %v2633, 4
      %v2640 = vshrl.u32 %v2370, 16
      %v2642 = vrot.slane %v2640, 7
      %v2643 = vshll.u32 %v2370, 16
      %v2645 = vor.u32 %v2642, %v2643
      %v2646 = vsel %vm830, %v2638, %v2645
      %v2648 = vshrl.u32 %v2371, 16
      %v2650 = vrot.slane %v2648, 7
      %v2651 = vrot.slane %v2650, 4
      %v2653 = vshrl.u32 %v2372, 16
      %v2655 = vrot.slane %v2653, 7
      %v2656 = vshll.u32 %v2372, 16
      %v2658 = vor.u32 %v2655, %v2656
      %v2659 = vsel %vm830, %v2651, %v2658
      %v2660 = vrot.slane %v2655, 4
      %v2662 = vshrl.u32 %v2373, 16
      %v2664 = vrot.slane %v2662, 7
      %v2665 = vshll.u32 %v2373, 16
      %v2667 = vor.u32 %v2664, %v2665
      %v2668 = vsel %vm830, %v2660, %v2667
      %v2670 = vshrl.u32 %v2374, 16
      %v2672 = vrot.slane %v2670, 7
      %v2673 = vrot.slane %v2672, 4
      %v2675 = vshrl.u32 %v2375, 16
      %v2677 = vrot.slane %v2675, 7
      %v2678 = vshll.u32 %v2375, 16
      %v2680 = vor.u32 %v2677, %v2678
      %v2681 = vsel %vm830, %v2673, %v2680
      %v2682 = vrot.slane %v2677, 4
      %v2684 = vshrl.u32 %v2376, 16
      %v2686 = vrot.slane %v2684, 7
      %v2687 = vshll.u32 %v2376, 16
      %v2689 = vor.u32 %v2686, %v2687
      %v2690 = vsel %vm830, %v2682, %v2689
      %v2692 = vshrl.u32 %v2377, 16
      %v2694 = vrot.slane %v2692, 7
      %v2695 = vrot.slane %v2694, 4
      %v2697 = vshrl.u32 %v2378, 16
      %v2699 = vrot.slane %v2697, 7
      %v2700 = vshll.u32 %v2378, 16
      %v2702 = vor.u32 %v2699, %v2700
      %v2703 = vsel %vm830, %v2695, %v2702
      %v2704 = vrot.slane %v2699, 4
      %v2706 = vshrl.u32 %v2379, 16
      %v2708 = vrot.slane %v2706, 7
      %v2709 = vshll.u32 %v2379, 16
      %v2711 = vor.u32 %v2708, %v2709
      %v2712 = vsel %vm830, %v2704, %v2711
      %v2714 = vshrl.u32 %v2380, 16
      %v2716 = vrot.slane %v2714, 7
      %v2717 = vrot.slane %v2716, 4
      %v2719 = vshrl.u32 %v2381, 16
      %v2721 = vrot.slane %v2719, 7
      %v2722 = vshll.u32 %v2381, 16
      %v2724 = vor.u32 %v2721, %v2722
      %v2725 = vsel %vm830, %v2717, %v2724
      %v2726 = vrot.slane %v2721, 4
      %v2728 = vshrl.u32 %v2382, 16
      %v2730 = vrot.slane %v2728, 7
      %v2731 = vshll.u32 %v2382, 16
      %v2733 = vor.u32 %v2730, %v2731
      %v2734 = vsel %vm830, %v2726, %v2733
      %s2735 = scalar_lea.vmem %s3, 192
      %v2736 = vld [vmem:[%s2735] sm:$0xf]
      %v2737 = vld [vmem:[%s2735 + $0x4] sm:$0xf]
      %v2738 = vld [vmem:[%s2735 + $0x8] sm:$0xf]
      %v2739 = vld [vmem:[%s2735 + $0xc] sm:$0xf]
      %v2740 = vld [vmem:[%s2735 + $0x10] sm:$0xf]
      %v2741 = vld [vmem:[%s2735 + $0x14] sm:$0xf]
      %v2742 = vld [vmem:[%s2735 + $0x18] sm:$0xf]
      %v2743 = vld [vmem:[%s2735 + $0x1c] sm:$0xf]
      %v2744 = vld [vmem:[%s2735 + $0x20] sm:$0xf]
      %v2745 = vld [vmem:[%s2735 + $0x24] sm:$0xf]
      %v2746 = vld [vmem:[%s2735 + $0x28] sm:$0xf]
      %v2747 = vld [vmem:[%s2735 + $0x2c] sm:$0xf]
      %v2748 = vld [vmem:[%s2735 + $0x30] sm:$0xf]
      %v2749 = vld [vmem:[%s2735 + $0x34] sm:$0xf]
      %v2750 = vld [vmem:[%s2735 + $0x38] sm:$0xf]
      %v2751 = vld [vmem:[%s2735 + $0x3c] sm:$0xf]
      %v2752 = vunpack.c.l.b16 %v2395
      %v2753 = vunpack.c.l.b16 %v2404
      %v2754 = vunpack.c.l.b16 %v2417
      %v2755 = vunpack.c.l.b16 %v2426
      %v2756 = vunpack.c.l.b16 %v2439
      %v2757 = vunpack.c.l.b16 %v2448
      %v2758 = vunpack.c.l.b16 %v2461
      %v2759 = vunpack.c.l.b16 %v2470
      %v2760 = vunpack.c.l.b16 %v2483
      %v2761 = vunpack.c.l.b16 %v2492
      %v2762 = vunpack.c.l.b16 %v2505
      %v2763 = vunpack.c.l.b16 %v2514
      %v2764 = vunpack.c.l.b16 %v2527
      %v2765 = vunpack.c.l.b16 %v2536
      %v2766 = vunpack.c.l.b16 %v2549
      %v2767 = vunpack.c.l.b16 %v2558
      %v2768 = vunpack.c.l.b16 %v2571
      %v2769 = vunpack.c.l.b16 %v2580
      %v2770 = vunpack.c.l.b16 %v2593
      %v2771 = vunpack.c.l.b16 %v2602
      %v2772 = vunpack.c.l.b16 %v2615
      %v2773 = vunpack.c.l.b16 %v2624
      %v2774 = vunpack.c.l.b16 %v2637
      %v2775 = vunpack.c.l.b16 %v2646
      %v2776 = vunpack.c.l.b16 %v2659
      %v2777 = vunpack.c.l.b16 %v2668
      %v2778 = vunpack.c.l.b16 %v2681
      %v2779 = vunpack.c.l.b16 %v2690
      %v2780 = vunpack.c.l.b16 %v2703
      %v2781 = vunpack.c.l.b16 %v2712
      %v2782 = vunpack.c.l.b16 %v2725
      %v2783 = vunpack.c.l.b16 %v2734
      %v2784 = vpack.c.b16 %v2753, %v2752
      %v2785 = vpack.c.b16 %v2755, %v2754
      %v2786 = vpack.c.b16 %v2757, %v2756
      %v2787 = vpack.c.b16 %v2759, %v2758
      %v2788 = vpack.c.b16 %v2761, %v2760
      %v2789 = vpack.c.b16 %v2763, %v2762
      %v2790 = vpack.c.b16 %v2765, %v2764
      %v2791 = vpack.c.b16 %v2767, %v2766
      %v2792 = vpack.c.b16 %v2769, %v2768
      %v2793 = vpack.c.b16 %v2771, %v2770
      %v2794 = vpack.c.b16 %v2773, %v2772
      %v2795 = vpack.c.b16 %v2775, %v2774
      %v2796 = vpack.c.b16 %v2777, %v2776
      %v2797 = vpack.c.b16 %v2779, %v2778
      %v2798 = vpack.c.b16 %v2781, %v2780
      %v2799 = vpack.c.b16 %v2783, %v2782
      %v2832 = vunpack.c.l.b16 %v2736
      %v2833 = vunpack.c.l.b16 %v2737
      %v2834 = vunpack.c.l.b16 %v2738
      %v2835 = vunpack.c.l.b16 %v2739
      %v2836 = vunpack.c.l.b16 %v2740
      %v2837 = vunpack.c.l.b16 %v2741
      %v2838 = vunpack.c.l.b16 %v2742
      %v2839 = vunpack.c.l.b16 %v2743
      %v2840 = vunpack.c.l.b16 %v2744
      %v2841 = vunpack.c.l.b16 %v2745
      %v2842 = vunpack.c.l.b16 %v2746
      %v2843 = vunpack.c.l.b16 %v2747
      %v2844 = vunpack.c.l.b16 %v2748
      %v2845 = vunpack.c.l.b16 %v2749
      %v2846 = vunpack.c.l.b16 %v2750
      %v2847 = vunpack.c.l.b16 %v2751
      %v2848 = vpack.c.b16 %v2833, %v2832
      %v2849 = vpack.c.b16 %v2835, %v2834
      %v2850 = vpack.c.b16 %v2837, %v2836
      %v2851 = vpack.c.b16 %v2839, %v2838
      %v2852 = vpack.c.b16 %v2841, %v2840
      %v2853 = vpack.c.b16 %v2843, %v2842
      %v2854 = vpack.c.b16 %v2845, %v2844
      %v2855 = vpack.c.b16 %v2847, %v2846
      %2864 = vmatpush.bf16.msra.mxu0 %v2855
      %2865 = vmatpush.bf16.msra.mxu0 %v2854
      %2866 = vmatpush.bf16.msra.mxu0 %v2853
      %2867 = vmatpush.bf16.msra.mxu0 %v2852
      %2868 = vmatpush.bf16.msra.mxu0 %v2851
      %2869 = vmatpush.bf16.msra.mxu0 %v2850
      %2870 = vmatpush.bf16.msra.mxu0 %v2849
      %2871 = vmatpush.bf16.msra.mxu0 %v2848
      %2872 = vmatmul.bf16.gmra.mxu0 %v2784
      %v2873 = vpop.f32.mrf.mxu0
      %v2874 = vadd.f32 0.0, %v2873
      %v2875 = vpop.f32.mrf.mxu0
      %v2876 = vadd.f32 0.0, %v2875
      %2877 = vmatmul.bf16.gmra.mxu0 %v2785
      %v2878 = vpop.f32.mrf.mxu0
      %v2879 = vadd.f32 0.0, %v2878
      %v2880 = vpop.f32.mrf.mxu0
      %v2881 = vadd.f32 0.0, %v2880
      %2882 = vmatmul.bf16.gmra.mxu0 %v2786
      %v2883 = vpop.f32.mrf.mxu0
      %v2884 = vadd.f32 0.0, %v2883
      %v2885 = vpop.f32.mrf.mxu0
      %v2886 = vadd.f32 0.0, %v2885
      %2887 = vmatmul.bf16.gmra.mxu0 %v2787
      %v2888 = vpop.f32.mrf.mxu0
      %v2889 = vadd.f32 0.0, %v2888
      %v2890 = vpop.f32.mrf.mxu0
      %v2891 = vadd.f32 0.0, %v2890
      %2892 = vmatmul.bf16.gmra.mxu0 %v2788
      %v2893 = vpop.f32.mrf.mxu0
      %v2894 = vadd.f32 0.0, %v2893
      %v2895 = vpop.f32.mrf.mxu0
      %v2896 = vadd.f32 0.0, %v2895
      %2897 = vmatmul.bf16.gmra.mxu0 %v2789
      %v2898 = vpop.f32.mrf.mxu0
      %v2899 = vadd.f32 0.0, %v2898
      %v2900 = vpop.f32.mrf.mxu0
      %v2901 = vadd.f32 0.0, %v2900
      %2902 = vmatmul.bf16.gmra.mxu0 %v2790
      %v2903 = vpop.f32.mrf.mxu0
      %v2904 = vadd.f32 0.0, %v2903
      %v2905 = vpop.f32.mrf.mxu0
      %v2906 = vadd.f32 0.0, %v2905
      %2907 = vmatmul.bf16.gmra.mxu0 %v2791
      %v2908 = vpop.f32.mrf.mxu0
      %v2909 = vadd.f32 0.0, %v2908
      %v2910 = vpop.f32.mrf.mxu0
      %v2911 = vadd.f32 0.0, %v2910
      %2912 = vmatmul.bf16.gmra.mxu0 %v2792
      %v2913 = vpop.f32.mrf.mxu0
      %v2914 = vadd.f32 0.0, %v2913
      %v2915 = vpop.f32.mrf.mxu0
      %v2916 = vadd.f32 0.0, %v2915
      %2917 = vmatmul.bf16.gmra.mxu0 %v2793
      %v2918 = vpop.f32.mrf.mxu0
      %v2919 = vadd.f32 0.0, %v2918
      %v2920 = vpop.f32.mrf.mxu0
      %v2921 = vadd.f32 0.0, %v2920
      %2922 = vmatmul.bf16.gmra.mxu0 %v2794
      %v2923 = vpop.f32.mrf.mxu0
      %v2924 = vadd.f32 0.0, %v2923
      %v2925 = vpop.f32.mrf.mxu0
      %v2926 = vadd.f32 0.0, %v2925
      %2927 = vmatmul.bf16.gmra.mxu0 %v2795
      %v2928 = vpop.f32.mrf.mxu0
      %v2929 = vadd.f32 0.0, %v2928
      %v2930 = vpop.f32.mrf.mxu0
      %v2931 = vadd.f32 0.0, %v2930
      %2932 = vmatmul.bf16.gmra.mxu0 %v2796
      %v2933 = vpop.f32.mrf.mxu0
      %v2934 = vadd.f32 0.0, %v2933
      %v2935 = vpop.f32.mrf.mxu0
      %v2936 = vadd.f32 0.0, %v2935
      %2937 = vmatmul.bf16.gmra.mxu0 %v2797
      %v2938 = vpop.f32.mrf.mxu0
      %v2939 = vadd.f32 0.0, %v2938
      %v2940 = vpop.f32.mrf.mxu0
      %v2941 = vadd.f32 0.0, %v2940
      %2942 = vmatmul.bf16.gmra.mxu0 %v2798
      %v2943 = vpop.f32.mrf.mxu0
      %v2944 = vadd.f32 0.0, %v2943
      %v2945 = vpop.f32.mrf.mxu0
      %v2946 = vadd.f32 0.0, %v2945
      %2947 = vmatmul.bf16.gmra.mxu0 %v2799
      %v2948 = vpop.f32.mrf.mxu0
      %v2949 = vadd.f32 0.0, %v2948
      %v2950 = vpop.f32.mrf.mxu0
      %v2951 = vadd.f32 0.0, %v2950
      %2952 = vdwg.mxu0
      %v2953 = vadd.f32 %v2303, %v2874
      %v2954 = vadd.f32 %v2304, %v2876
      %v2955 = vadd.f32 %v2305, %v2879
      %v2956 = vadd.f32 %v2306, %v2881
      %v2957 = vadd.f32 %v2307, %v2884
      %v2958 = vadd.f32 %v2308, %v2886
      %v2959 = vadd.f32 %v2309, %v2889
      %v2960 = vadd.f32 %v2310, %v2891
      %v2961 = vadd.f32 %v2311, %v2894
      %v2962 = vadd.f32 %v2312, %v2896
      %v2963 = vadd.f32 %v2313, %v2899
      %v2964 = vadd.f32 %v2314, %v2901
      %v2965 = vadd.f32 %v2315, %v2904
      %v2966 = vadd.f32 %v2316, %v2906
      %v2967 = vadd.f32 %v2317, %v2909
      %v2968 = vadd.f32 %v2318, %v2911
      %v2969 = vadd.f32 %v2319, %v2914
      %v2970 = vadd.f32 %v2320, %v2916
      %v2971 = vadd.f32 %v2321, %v2919
      %v2972 = vadd.f32 %v2322, %v2921
      %v2973 = vadd.f32 %v2323, %v2924
      %v2974 = vadd.f32 %v2324, %v2926
      %v2975 = vadd.f32 %v2325, %v2929
      %v2976 = vadd.f32 %v2326, %v2931
      %v2977 = vadd.f32 %v2327, %v2934
      %v2978 = vadd.f32 %v2328, %v2936
      %v2979 = vadd.f32 %v2329, %v2939
      %v2980 = vadd.f32 %v2330, %v2941
      %v2981 = vadd.f32 %v2331, %v2944
      %v2982 = vadd.f32 %v2332, %v2946
      %v2983 = vadd.f32 %v2333, %v2949
      %v2984 = vadd.f32 %v2334, %v2951
      %s2985 = scalar_lea.vmem %s3, 256
      %v2986 = vld [vmem:[%s2985] sm:$0xf]
      %v2987 = vld [vmem:[%s2985 + $0x4] sm:$0xf]
      %v2988 = vld [vmem:[%s2985 + $0x8] sm:$0xf]
      %v2989 = vld [vmem:[%s2985 + $0xc] sm:$0xf]
      %v2990 = vld [vmem:[%s2985 + $0x10] sm:$0xf]
      %v2991 = vld [vmem:[%s2985 + $0x14] sm:$0xf]
      %v2992 = vld [vmem:[%s2985 + $0x18] sm:$0xf]
      %v2993 = vld [vmem:[%s2985 + $0x1c] sm:$0xf]
      %v2994 = vld [vmem:[%s2985 + $0x20] sm:$0xf]
      %v2995 = vld [vmem:[%s2985 + $0x24] sm:$0xf]
      %v2996 = vld [vmem:[%s2985 + $0x28] sm:$0xf]
      %v2997 = vld [vmem:[%s2985 + $0x2c] sm:$0xf]
      %v2998 = vld [vmem:[%s2985 + $0x30] sm:$0xf]
      %v2999 = vld [vmem:[%s2985 + $0x34] sm:$0xf]
      %v3000 = vld [vmem:[%s2985 + $0x38] sm:$0xf]
      %v3001 = vld [vmem:[%s2985 + $0x3c] sm:$0xf]
      %v3034 = vunpack.c.l.b16 %v2336
      %v3035 = vunpack.c.l.b16 %v2337
      %v3036 = vunpack.c.l.b16 %v2339
      %v3037 = vunpack.c.l.b16 %v2340
      %v3038 = vunpack.c.l.b16 %v2342
      %v3039 = vunpack.c.l.b16 %v2343
      %v3040 = vunpack.c.l.b16 %v2345
      %v3041 = vunpack.c.l.b16 %v2346
      %v3042 = vunpack.c.l.b16 %v2348
      %v3043 = vunpack.c.l.b16 %v2349
      %v3044 = vunpack.c.l.b16 %v2351
      %v3045 = vunpack.c.l.b16 %v2352
      %v3046 = vunpack.c.l.b16 %v2354
      %v3047 = vunpack.c.l.b16 %v2355
      %v3048 = vunpack.c.l.b16 %v2357
      %v3049 = vunpack.c.l.b16 %v2358
      %v3050 = vunpack.c.l.b16 %v2360
      %v3051 = vunpack.c.l.b16 %v2361
      %v3052 = vunpack.c.l.b16 %v2363
      %v3053 = vunpack.c.l.b16 %v2364
      %v3054 = vunpack.c.l.b16 %v2366
      %v3055 = vunpack.c.l.b16 %v2367
      %v3056 = vunpack.c.l.b16 %v2369
      %v3057 = vunpack.c.l.b16 %v2370
      %v3058 = vunpack.c.l.b16 %v2372
      %v3059 = vunpack.c.l.b16 %v2373
      %v3060 = vunpack.c.l.b16 %v2375
      %v3061 = vunpack.c.l.b16 %v2376
      %v3062 = vunpack.c.l.b16 %v2378
      %v3063 = vunpack.c.l.b16 %v2379
      %v3064 = vunpack.c.l.b16 %v2381
      %v3065 = vunpack.c.l.b16 %v2382
      %v3066 = vpack.c.b16 %v3035, %v3034
      %v3067 = vpack.c.b16 %v3037, %v3036
      %v3068 = vpack.c.b16 %v3039, %v3038
      %v3069 = vpack.c.b16 %v3041, %v3040
      %v3070 = vpack.c.b16 %v3043, %v3042
      %v3071 = vpack.c.b16 %v3045, %v3044
      %v3072 = vpack.c.b16 %v3047, %v3046
      %v3073 = vpack.c.b16 %v3049, %v3048
      %v3074 = vpack.c.b16 %v3051, %v3050
      %v3075 = vpack.c.b16 %v3053, %v3052
      %v3076 = vpack.c.b16 %v3055, %v3054
      %v3077 = vpack.c.b16 %v3057, %v3056
      %v3078 = vpack.c.b16 %v3059, %v3058
      %v3079 = vpack.c.b16 %v3061, %v3060
      %v3080 = vpack.c.b16 %v3063, %v3062
      %v3081 = vpack.c.b16 %v3065, %v3064
      %v3114 = vunpack.c.l.b16 %v2986
      %v3115 = vunpack.c.l.b16 %v2987
      %v3116 = vunpack.c.l.b16 %v2988
      %v3117 = vunpack.c.l.b16 %v2989
      %v3118 = vunpack.c.l.b16 %v2990
      %v3119 = vunpack.c.l.b16 %v2991
      %v3120 = vunpack.c.l.b16 %v2992
      %v3121 = vunpack.c.l.b16 %v2993
      %v3122 = vunpack.c.l.b16 %v2994
      %v3123 = vunpack.c.l.b16 %v2995
      %v3124 = vunpack.c.l.b16 %v2996
      %v3125 = vunpack.c.l.b16 %v2997
      %v3126 = vunpack.c.l.b16 %v2998
      %v3127 = vunpack.c.l.b16 %v2999
      %v3128 = vunpack.c.l.b16 %v3000
      %v3129 = vunpack.c.l.b16 %v3001
      %v3130 = vpack.c.b16 %v3115, %v3114
      %v3131 = vpack.c.b16 %v3117, %v3116
      %v3132 = vpack.c.b16 %v3119, %v3118
      %v3133 = vpack.c.b16 %v3121, %v3120
      %v3134 = vpack.c.b16 %v3123, %v3122
      %v3135 = vpack.c.b16 %v3125, %v3124
      %v3136 = vpack.c.b16 %v3127, %v3126
      %v3137 = vpack.c.b16 %v3129, %v3128
      %3146 = vmatpush.bf16.msra.mxu0 %v3137
      %3147 = vmatpush.bf16.msra.mxu0 %v3136
      %3148 = vmatpush.bf16.msra.mxu0 %v3135
      %3149 = vmatpush.bf16.msra.mxu0 %v3134
      %3150 = vmatpush.bf16.msra.mxu0 %v3133
      %3151 = vmatpush.bf16.msra.mxu0 %v3132
      %3152 = vmatpush.bf16.msra.mxu0 %v3131
      %3153 = vmatpush.bf16.msra.mxu0 %v3130
      %3154 = vmatmul.bf16.gmra.mxu0 %v3066
      %v3155 = vpop.f32.mrf.mxu0
      %v3156 = vadd.f32 0.0, %v3155
      %v3157 = vpop.f32.mrf.mxu0
      %v3158 = vadd.f32 0.0, %v3157
      %3159 = vmatmul.bf16.gmra.mxu0 %v3067
      %v3160 = vpop.f32.mrf.mxu0
      %v3161 = vadd.f32 0.0, %v3160
      %v3162 = vpop.f32.mrf.mxu0
      %v3163 = vadd.f32 0.0, %v3162
      %3164 = vmatmul.bf16.gmra.mxu0 %v3068
      %v3165 = vpop.f32.mrf.mxu0
      %v3166 = vadd.f32 0.0, %v3165
      %v3167 = vpop.f32.mrf.mxu0
      %v3168 = vadd.f32 0.0, %v3167
      %3169 = vmatmul.bf16.gmra.mxu0 %v3069
      %v3170 = vpop.f32.mrf.mxu0
      %v3171 = vadd.f32 0.0, %v3170
      %v3172 = vpop.f32.mrf.mxu0
      %v3173 = vadd.f32 0.0, %v3172
      %3174 = vmatmul.bf16.gmra.mxu0 %v3070
      %v3175 = vpop.f32.mrf.mxu0
      %v3176 = vadd.f32 0.0, %v3175
      %v3177 = vpop.f32.mrf.mxu0
      %v3178 = vadd.f32 0.0, %v3177
      %3179 = vmatmul.bf16.gmra.mxu0 %v3071
      %v3180 = vpop.f32.mrf.mxu0
      %v3181 = vadd.f32 0.0, %v3180
      %v3182 = vpop.f32.mrf.mxu0
      %v3183 = vadd.f32 0.0, %v3182
      %3184 = vmatmul.bf16.gmra.mxu0 %v3072
      %v3185 = vpop.f32.mrf.mxu0
      %v3186 = vadd.f32 0.0, %v3185
      %v3187 = vpop.f32.mrf.mxu0
      %v3188 = vadd.f32 0.0, %v3187
      %3189 = vmatmul.bf16.gmra.mxu0 %v3073
      %v3190 = vpop.f32.mrf.mxu0
      %v3191 = vadd.f32 0.0, %v3190
      %v3192 = vpop.f32.mrf.mxu0
      %v3193 = vadd.f32 0.0, %v3192
      %3194 = vmatmul.bf16.gmra.mxu0 %v3074
      %v3195 = vpop.f32.mrf.mxu0
      %v3196 = vadd.f32 0.0, %v3195
      %v3197 = vpop.f32.mrf.mxu0
      %v3198 = vadd.f32 0.0, %v3197
      %3199 = vmatmul.bf16.gmra.mxu0 %v3075
      %v3200 = vpop.f32.mrf.mxu0
      %v3201 = vadd.f32 0.0, %v3200
      %v3202 = vpop.f32.mrf.mxu0
      %v3203 = vadd.f32 0.0, %v3202
      %3204 = vmatmul.bf16.gmra.mxu0 %v3076
      %v3205 = vpop.f32.mrf.mxu0
      %v3206 = vadd.f32 0.0, %v3205
      %v3207 = vpop.f32.mrf.mxu0
      %v3208 = vadd.f32 0.0, %v3207
      %3209 = vmatmul.bf16.gmra.mxu0 %v3077
      %v3210 = vpop.f32.mrf.mxu0
      %v3211 = vadd.f32 0.0, %v3210
      %v3212 = vpop.f32.mrf.mxu0
      %v3213 = vadd.f32 0.0, %v3212
      %3214 = vmatmul.bf16.gmra.mxu0 %v3078
      %v3215 = vpop.f32.mrf.mxu0
      %v3216 = vadd.f32 0.0, %v3215
      %v3217 = vpop.f32.mrf.mxu0
      %v3218 = vadd.f32 0.0, %v3217
      %3219 = vmatmul.bf16.gmra.mxu0 %v3079
      %v3220 = vpop.f32.mrf.mxu0
      %v3221 = vadd.f32 0.0, %v3220
      %v3222 = vpop.f32.mrf.mxu0
      %v3223 = vadd.f32 0.0, %v3222
      %3224 = vmatmul.bf16.gmra.mxu0 %v3080
      %v3225 = vpop.f32.mrf.mxu0
      %v3226 = vadd.f32 0.0, %v3225
      %v3227 = vpop.f32.mrf.mxu0
      %v3228 = vadd.f32 0.0, %v3227
      %3229 = vmatmul.bf16.gmra.mxu0 %v3081
      %v3230 = vpop.f32.mrf.mxu0
      %v3231 = vadd.f32 0.0, %v3230
      %v3232 = vpop.f32.mrf.mxu0
      %v3233 = vadd.f32 0.0, %v3232
      %3234 = vdwg.mxu0
      %v3235 = vadd.f32 %v2953, %v3156
      %v3236 = vadd.f32 %v2954, %v3158
      %v3237 = vadd.f32 %v2955, %v3161
      %v3238 = vadd.f32 %v2956, %v3163
      %v3239 = vadd.f32 %v2957, %v3166
      %v3240 = vadd.f32 %v2958, %v3168
      %v3241 = vadd.f32 %v2959, %v3171
      %v3242 = vadd.f32 %v2960, %v3173
      %v3243 = vadd.f32 %v2961, %v3176
      %v3244 = vadd.f32 %v2962, %v3178
      %v3245 = vadd.f32 %v2963, %v3181
      %v3246 = vadd.f32 %v2964, %v3183
      %v3247 = vadd.f32 %v2965, %v3186
      %v3248 = vadd.f32 %v2966, %v3188
      %v3249 = vadd.f32 %v2967, %v3191
      %v3250 = vadd.f32 %v2968, %v3193
      %v3251 = vadd.f32 %v2969, %v3196
      %v3252 = vadd.f32 %v2970, %v3198
      %v3253 = vadd.f32 %v2971, %v3201
      %v3254 = vadd.f32 %v2972, %v3203
      %v3255 = vadd.f32 %v2973, %v3206
      %v3256 = vadd.f32 %v2974, %v3208
      %v3257 = vadd.f32 %v2975, %v3211
      %v3258 = vadd.f32 %v2976, %v3213
      %v3259 = vadd.f32 %v2977, %v3216
      %v3260 = vadd.f32 %v2978, %v3218
      %v3261 = vadd.f32 %v2979, %v3221
      %v3262 = vadd.f32 %v2980, %v3223
      %v3263 = vadd.f32 %v2981, %v3226
      %v3264 = vadd.f32 %v2982, %v3228
      %v3265 = vadd.f32 %v2983, %v3231
      %v3266 = vadd.f32 %v2984, %v3233
      %v3267 = vld [vmem:[%s303 + $0x4] sm:$0xf]
      %v3268 = vld [vmem:[%s303 + $0x8] sm:$0xf]
      %v3269 = vld [vmem:[%s303 + $0xc] sm:$0x1]
      %v3270 = vld [vmem:[%s303 + $0x14] sm:$0xf]
      %v3271 = vld [vmem:[%s303 + $0x18] sm:$0xf]
      %v3272 = vld [vmem:[%s303 + $0x1c] sm:$0x1]
      %v3273 = vld [vmem:[%s303 + $0x24] sm:$0xf]
      %v3274 = vld [vmem:[%s303 + $0x28] sm:$0xf]
      %v3275 = vld [vmem:[%s303 + $0x2c] sm:$0x1]
      %v3276 = vld [vmem:[%s303 + $0x34] sm:$0xf]
      %v3277 = vld [vmem:[%s303 + $0x38] sm:$0xf]
      %v3278 = vld [vmem:[%s303 + $0x3c] sm:$0x1]
      %v3279 = vld [vmem:[%s303 + $0x44] sm:$0xf]
      %v3280 = vld [vmem:[%s303 + $0x48] sm:$0xf]
      %v3281 = vld [vmem:[%s303 + $0x4c] sm:$0x1]
      %v3282 = vld [vmem:[%s303 + $0x54] sm:$0xf]
      %v3283 = vld [vmem:[%s303 + $0x58] sm:$0xf]
      %v3284 = vld [vmem:[%s303 + $0x5c] sm:$0x1]
      %v3285 = vld [vmem:[%s303 + $0x64] sm:$0xf]
      %v3286 = vld [vmem:[%s303 + $0x68] sm:$0xf]
      %v3287 = vld [vmem:[%s303 + $0x6c] sm:$0x1]
      %v3288 = vld [vmem:[%s303 + $0x74] sm:$0xf]
      %v3289 = vld [vmem:[%s303 + $0x78] sm:$0xf]
      %v3290 = vld [vmem:[%s303 + $0x7c] sm:$0x1]
      %v3291 = vld [vmem:[%s303 + $0x84] sm:$0xf]
      %v3292 = vld [vmem:[%s303 + $0x88] sm:$0xf]
      %v3293 = vld [vmem:[%s303 + $0x8c] sm:$0x1]
      %v3294 = vld [vmem:[%s303 + $0x94] sm:$0xf]
      %v3295 = vld [vmem:[%s303 + $0x98] sm:$0xf]
      %v3296 = vld [vmem:[%s303 + $0x9c] sm:$0x1]
      %v3297 = vld [vmem:[%s303 + $0xa4] sm:$0xf]
      %v3298 = vld [vmem:[%s303 + $0xa8] sm:$0xf]
      %v3299 = vld [vmem:[%s303 + $0xac] sm:$0x1]
      %v3300 = vld [vmem:[%s303 + $0xb4] sm:$0xf]
      %v3301 = vld [vmem:[%s303 + $0xb8] sm:$0xf]
      %v3302 = vld [vmem:[%s303 + $0xbc] sm:$0x1]
      %v3303 = vld [vmem:[%s303 + $0xc4] sm:$0xf]
      %v3304 = vld [vmem:[%s303 + $0xc8] sm:$0xf]
      %v3305 = vld [vmem:[%s303 + $0xcc] sm:$0x1]
      %v3306 = vld [vmem:[%s303 + $0xd4] sm:$0xf]
      %v3307 = vld [vmem:[%s303 + $0xd8] sm:$0xf]
      %v3308 = vld [vmem:[%s303 + $0xdc] sm:$0x1]
      %v3309 = vld [vmem:[%s303 + $0xe4] sm:$0xf]
      %v3310 = vld [vmem:[%s303 + $0xe8] sm:$0xf]
      %v3311 = vld [vmem:[%s303 + $0xec] sm:$0x1]
      %v3312 = vld [vmem:[%s303 + $0xf4] sm:$0xf]
      %v3313 = vld [vmem:[%s303 + $0xf8] sm:$0xf]
      %v3314 = vld [vmem:[%s303 + $0xfc] sm:$0x1]
      %v3316 = vshrl.u32 %v3267, 16
      %v3318 = vrot.slane %v3316, 4
      %v3319 = vshll.u32 %v3267, 16
      %v3321 = vrot.slane %v3319, 5
      %v3322 = vor.u32 %v3318, %v3321
      %v3323 = vrot.slane %v3322, 4
      %v3325 = vshll.u32 %v3268, 16
      %v3327 = vrot.slane %v3325, 5
      %v3328 = vsel %vm1700, %v3323, %v3327
      %v3329 = vshrl.u32 %v3268, 16
      %v3331 = vrot.slane %v3329, 4
      %v3332 = vor.u32 %v3331, %v3327
      %v3333 = vrot.slane %v3332, 4
      %v3335 = vshll.u32 %v3269, 16
      %v3337 = vrot.slane %v3335, 5
      %v3338 = vsel %vm1700, %v3333, %v3337
      %v3340 = vshrl.u32 %v3270, 16
      %v3342 = vrot.slane %v3340, 4
      %v3343 = vshll.u32 %v3270, 16
      %v3345 = vrot.slane %v3343, 5
      %v3346 = vor.u32 %v3342, %v3345
      %v3347 = vrot.slane %v3346, 4
      %v3349 = vshll.u32 %v3271, 16
      %v3351 = vrot.slane %v3349, 5
      %v3352 = vsel %vm1700, %v3347, %v3351
      %v3353 = vshrl.u32 %v3271, 16
      %v3355 = vrot.slane %v3353, 4
      %v3356 = vor.u32 %v3355, %v3351
      %v3357 = vrot.slane %v3356, 4
      %v3359 = vshll.u32 %v3272, 16
      %v3361 = vrot.slane %v3359, 5
      %v3362 = vsel %vm1700, %v3357, %v3361
      %v3364 = vshrl.u32 %v3273, 16
      %v3366 = vrot.slane %v3364, 4
      %v3367 = vshll.u32 %v3273, 16
      %v3369 = vrot.slane %v3367, 5
      %v3370 = vor.u32 %v3366, %v3369
      %v3371 = vrot.slane %v3370, 4
      %v3373 = vshll.u32 %v3274, 16
      %v3375 = vrot.slane %v3373, 5
      %v3376 = vsel %vm1700, %v3371, %v3375
      %v3377 = vshrl.u32 %v3274, 16
      %v3379 = vrot.slane %v3377, 4
      %v3380 = vor.u32 %v3379, %v3375
      %v3381 = vrot.slane %v3380, 4
      %v3383 = vshll.u32 %v3275, 16
      %v3385 = vrot.slane %v3383, 5
      %v3386 = vsel %vm1700, %v3381, %v3385
      %v3388 = vshrl.u32 %v3276, 16
      %v3390 = vrot.slane %v3388, 4
      %v3391 = vshll.u32 %v3276, 16
      %v3393 = vrot.slane %v3391, 5
      %v3394 = vor.u32 %v3390, %v3393
      %v3395 = vrot.slane %v3394, 4
      %v3397 = vshll.u32 %v3277, 16
      %v3399 = vrot.slane %v3397, 5
      %v3400 = vsel %vm1700, %v3395, %v3399
      %v3401 = vshrl.u32 %v3277, 16
      %v3403 = vrot.slane %v3401, 4
      %v3404 = vor.u32 %v3403, %v3399
      %v3405 = vrot.slane %v3404, 4
      %v3407 = vshll.u32 %v3278, 16
      %v3409 = vrot.slane %v3407, 5
      %v3410 = vsel %vm1700, %v3405, %v3409
      %v3412 = vshrl.u32 %v3279, 16
      %v3414 = vrot.slane %v3412, 4
      %v3415 = vshll.u32 %v3279, 16
      %v3417 = vrot.slane %v3415, 5
      %v3418 = vor.u32 %v3414, %v3417
      %v3419 = vrot.slane %v3418, 4
      %v3421 = vshll.u32 %v3280, 16
      %v3423 = vrot.slane %v3421, 5
      %v3424 = vsel %vm1700, %v3419, %v3423
      %v3425 = vshrl.u32 %v3280, 16
      %v3427 = vrot.slane %v3425, 4
      %v3428 = vor.u32 %v3427, %v3423
      %v3429 = vrot.slane %v3428, 4
      %v3431 = vshll.u32 %v3281, 16
      %v3433 = vrot.slane %v3431, 5
      %v3434 = vsel %vm1700, %v3429, %v3433
      %v3436 = vshrl.u32 %v3282, 16
      %v3438 = vrot.slane %v3436, 4
      %v3439 = vshll.u32 %v3282, 16
      %v3441 = vrot.slane %v3439, 5
      %v3442 = vor.u32 %v3438, %v3441
      %v3443 = vrot.slane %v3442, 4
      %v3445 = vshll.u32 %v3283, 16
      %v3447 = vrot.slane %v3445, 5
      %v3448 = vsel %vm1700, %v3443, %v3447
      %v3449 = vshrl.u32 %v3283, 16
      %v3451 = vrot.slane %v3449, 4
      %v3452 = vor.u32 %v3451, %v3447
      %v3453 = vrot.slane %v3452, 4
      %v3455 = vshll.u32 %v3284, 16
      %v3457 = vrot.slane %v3455, 5
      %v3458 = vsel %vm1700, %v3453, %v3457
      %v3460 = vshrl.u32 %v3285, 16
      %v3462 = vrot.slane %v3460, 4
      %v3463 = vshll.u32 %v3285, 16
      %v3465 = vrot.slane %v3463, 5
      %v3466 = vor.u32 %v3462, %v3465
      %v3467 = vrot.slane %v3466, 4
      %v3469 = vshll.u32 %v3286, 16
      %v3471 = vrot.slane %v3469, 5
      %v3472 = vsel %vm1700, %v3467, %v3471
      %v3473 = vshrl.u32 %v3286, 16
      %v3475 = vrot.slane %v3473, 4
      %v3476 = vor.u32 %v3475, %v3471
      %v3477 = vrot.slane %v3476, 4
      %v3479 = vshll.u32 %v3287, 16
      %v3481 = vrot.slane %v3479, 5
      %v3482 = vsel %vm1700, %v3477, %v3481
      %v3484 = vshrl.u32 %v3288, 16
      %v3486 = vrot.slane %v3484, 4
      %v3487 = vshll.u32 %v3288, 16
      %v3489 = vrot.slane %v3487, 5
      %v3490 = vor.u32 %v3486, %v3489
      %v3491 = vrot.slane %v3490, 4
      %v3493 = vshll.u32 %v3289, 16
      %v3495 = vrot.slane %v3493, 5
      %v3496 = vsel %vm1700, %v3491, %v3495
      %v3497 = vshrl.u32 %v3289, 16
      %v3499 = vrot.slane %v3497, 4
      %v3500 = vor.u32 %v3499, %v3495
      %v3501 = vrot.slane %v3500, 4
      %v3503 = vshll.u32 %v3290, 16
      %v3505 = vrot.slane %v3503, 5
      %v3506 = vsel %vm1700, %v3501, %v3505
      %v3508 = vshrl.u32 %v3291, 16
      %v3510 = vrot.slane %v3508, 4
      %v3511 = vshll.u32 %v3291, 16
      %v3513 = vrot.slane %v3511, 5
      %v3514 = vor.u32 %v3510, %v3513
      %v3515 = vrot.slane %v3514, 4
      %v3517 = vshll.u32 %v3292, 16
      %v3519 = vrot.slane %v3517, 5
      %v3520 = vsel %vm1700, %v3515, %v3519
      %v3521 = vshrl.u32 %v3292, 16
      %v3523 = vrot.slane %v3521, 4
      %v3524 = vor.u32 %v3523, %v3519
      %v3525 = vrot.slane %v3524, 4
      %v3527 = vshll.u32 %v3293, 16
      %v3529 = vrot.slane %v3527, 5
      %v3530 = vsel %vm1700, %v3525, %v3529
      %v3532 = vshrl.u32 %v3294, 16
      %v3534 = vrot.slane %v3532, 4
      %v3535 = vshll.u32 %v3294, 16
      %v3537 = vrot.slane %v3535, 5
      %v3538 = vor.u32 %v3534, %v3537
      %v3539 = vrot.slane %v3538, 4
      %v3541 = vshll.u32 %v3295, 16
      %v3543 = vrot.slane %v3541, 5
      %v3544 = vsel %vm1700, %v3539, %v3543
      %v3545 = vshrl.u32 %v3295, 16
      %v3547 = vrot.slane %v3545, 4
      %v3548 = vor.u32 %v3547, %v3543
      %v3549 = vrot.slane %v3548, 4
      %v3551 = vshll.u32 %v3296, 16
      %v3553 = vrot.slane %v3551, 5
      %v3554 = vsel %vm1700, %v3549, %v3553
      %v3556 = vshrl.u32 %v3297, 16
      %v3558 = vrot.slane %v3556, 4
      %v3559 = vshll.u32 %v3297, 16
      %v3561 = vrot.slane %v3559, 5
      %v3562 = vor.u32 %v3558, %v3561
      %v3563 = vrot.slane %v3562, 4
      %v3565 = vshll.u32 %v3298, 16
      %v3567 = vrot.slane %v3565, 5
      %v3568 = vsel %vm1700, %v3563, %v3567
      %v3569 = vshrl.u32 %v3298, 16
      %v3571 = vrot.slane %v3569, 4
      %v3572 = vor.u32 %v3571, %v3567
      %v3573 = vrot.slane %v3572, 4
      %v3575 = vshll.u32 %v3299, 16
      %v3577 = vrot.slane %v3575, 5
      %v3578 = vsel %vm1700, %v3573, %v3577
      %v3580 = vshrl.u32 %v3300, 16
      %v3582 = vrot.slane %v3580, 4
      %v3583 = vshll.u32 %v3300, 16
      %v3585 = vrot.slane %v3583, 5
      %v3586 = vor.u32 %v3582, %v3585
      %v3587 = vrot.slane %v3586, 4
      %v3589 = vshll.u32 %v3301, 16
      %v3591 = vrot.slane %v3589, 5
      %v3592 = vsel %vm1700, %v3587, %v3591
      %v3593 = vshrl.u32 %v3301, 16
      %v3595 = vrot.slane %v3593, 4
      %v3596 = vor.u32 %v3595, %v3591
      %v3597 = vrot.slane %v3596, 4
      %v3599 = vshll.u32 %v3302, 16
      %v3601 = vrot.slane %v3599, 5
      %v3602 = vsel %vm1700, %v3597, %v3601
      %v3604 = vshrl.u32 %v3303, 16
      %v3606 = vrot.slane %v3604, 4
      %v3607 = vshll.u32 %v3303, 16
      %v3609 = vrot.slane %v3607, 5
      %v3610 = vor.u32 %v3606, %v3609
      %v3611 = vrot.slane %v3610, 4
      %v3613 = vshll.u32 %v3304, 16
      %v3615 = vrot.slane %v3613, 5
      %v3616 = vsel %vm1700, %v3611, %v3615
      %v3617 = vshrl.u32 %v3304, 16
      %v3619 = vrot.slane %v3617, 4
      %v3620 = vor.u32 %v3619, %v3615
      %v3621 = vrot.slane %v3620, 4
      %v3623 = vshll.u32 %v3305, 16
      %v3625 = vrot.slane %v3623, 5
      %v3626 = vsel %vm1700, %v3621, %v3625
      %v3628 = vshrl.u32 %v3306, 16
      %v3630 = vrot.slane %v3628, 4
      %v3631 = vshll.u32 %v3306, 16
      %v3633 = vrot.slane %v3631, 5
      %v3634 = vor.u32 %v3630, %v3633
      %v3635 = vrot.slane %v3634, 4
      %v3637 = vshll.u32 %v3307, 16
      %v3639 = vrot.slane %v3637, 5
      %v3640 = vsel %vm1700, %v3635, %v3639
      %v3641 = vshrl.u32 %v3307, 16
      %v3643 = vrot.slane %v3641, 4
      %v3644 = vor.u32 %v3643, %v3639
      %v3645 = vrot.slane %v3644, 4
      %v3647 = vshll.u32 %v3308, 16
      %v3649 = vrot.slane %v3647, 5
      %v3650 = vsel %vm1700, %v3645, %v3649
      %v3652 = vshrl.u32 %v3309, 16
      %v3654 = vrot.slane %v3652, 4
      %v3655 = vshll.u32 %v3309, 16
      %v3657 = vrot.slane %v3655, 5
      %v3658 = vor.u32 %v3654, %v3657
      %v3659 = vrot.slane %v3658, 4
      %v3661 = vshll.u32 %v3310, 16
      %v3663 = vrot.slane %v3661, 5
      %v3664 = vsel %vm1700, %v3659, %v3663
      %v3665 = vshrl.u32 %v3310, 16
      %v3667 = vrot.slane %v3665, 4
      %v3668 = vor.u32 %v3667, %v3663
      %v3669 = vrot.slane %v3668, 4
      %v3671 = vshll.u32 %v3311, 16
      %v3673 = vrot.slane %v3671, 5
      %v3674 = vsel %vm1700, %v3669, %v3673
      %v3676 = vshrl.u32 %v3312, 16
      %v3678 = vrot.slane %v3676, 4
      %v3679 = vshll.u32 %v3312, 16
      %v3681 = vrot.slane %v3679, 5
      %v3682 = vor.u32 %v3678, %v3681
      %v3683 = vrot.slane %v3682, 4
      %v3685 = vshll.u32 %v3313, 16
      %v3687 = vrot.slane %v3685, 5
      %v3688 = vsel %vm1700, %v3683, %v3687
      %v3689 = vshrl.u32 %v3313, 16
      %v3691 = vrot.slane %v3689, 4
      %v3692 = vor.u32 %v3691, %v3687
      %v3693 = vrot.slane %v3692, 4
      %v3695 = vshll.u32 %v3314, 16
      %v3697 = vrot.slane %v3695, 5
      %v3698 = vsel %vm1700, %v3693, %v3697
      %s3699 = scalar_lea.vmem %s3, 320
      %v3700 = vld [vmem:[%s3699] sm:$0xf]
      %v3701 = vld [vmem:[%s3699 + $0x4] sm:$0xf]
      %v3702 = vld [vmem:[%s3699 + $0x8] sm:$0xf]
      %v3703 = vld [vmem:[%s3699 + $0xc] sm:$0xf]
      %v3704 = vld [vmem:[%s3699 + $0x10] sm:$0xf]
      %v3705 = vld [vmem:[%s3699 + $0x14] sm:$0xf]
      %v3706 = vld [vmem:[%s3699 + $0x18] sm:$0xf]
      %v3707 = vld [vmem:[%s3699 + $0x1c] sm:$0xf]
      %v3708 = vld [vmem:[%s3699 + $0x20] sm:$0xf]
      %v3709 = vld [vmem:[%s3699 + $0x24] sm:$0xf]
      %v3710 = vld [vmem:[%s3699 + $0x28] sm:$0xf]
      %v3711 = vld [vmem:[%s3699 + $0x2c] sm:$0xf]
      %v3712 = vld [vmem:[%s3699 + $0x30] sm:$0xf]
      %v3713 = vld [vmem:[%s3699 + $0x34] sm:$0xf]
      %v3714 = vld [vmem:[%s3699 + $0x38] sm:$0xf]
      %v3715 = vld [vmem:[%s3699 + $0x3c] sm:$0xf]
      %v3716 = vunpack.c.l.b16 %v3328
      %v3717 = vunpack.c.l.b16 %v3338
      %v3718 = vunpack.c.l.b16 %v3352
      %v3719 = vunpack.c.l.b16 %v3362
      %v3720 = vunpack.c.l.b16 %v3376
      %v3721 = vunpack.c.l.b16 %v3386
      %v3722 = vunpack.c.l.b16 %v3400
      %v3723 = vunpack.c.l.b16 %v3410
      %v3724 = vunpack.c.l.b16 %v3424
      %v3725 = vunpack.c.l.b16 %v3434
      %v3726 = vunpack.c.l.b16 %v3448
      %v3727 = vunpack.c.l.b16 %v3458
      %v3728 = vunpack.c.l.b16 %v3472
      %v3729 = vunpack.c.l.b16 %v3482
      %v3730 = vunpack.c.l.b16 %v3496
      %v3731 = vunpack.c.l.b16 %v3506
      %v3732 = vunpack.c.l.b16 %v3520
      %v3733 = vunpack.c.l.b16 %v3530
      %v3734 = vunpack.c.l.b16 %v3544
      %v3735 = vunpack.c.l.b16 %v3554
      %v3736 = vunpack.c.l.b16 %v3568
      %v3737 = vunpack.c.l.b16 %v3578
      %v3738 = vunpack.c.l.b16 %v3592
      %v3739 = vunpack.c.l.b16 %v3602
      %v3740 = vunpack.c.l.b16 %v3616
      %v3741 = vunpack.c.l.b16 %v3626
      %v3742 = vunpack.c.l.b16 %v3640
      %v3743 = vunpack.c.l.b16 %v3650
      %v3744 = vunpack.c.l.b16 %v3664
      %v3745 = vunpack.c.l.b16 %v3674
      %v3746 = vunpack.c.l.b16 %v3688
      %v3747 = vunpack.c.l.b16 %v3698
      %v3748 = vpack.c.b16 %v3717, %v3716
      %v3749 = vpack.c.b16 %v3719, %v3718
      %v3750 = vpack.c.b16 %v3721, %v3720
      %v3751 = vpack.c.b16 %v3723, %v3722
      %v3752 = vpack.c.b16 %v3725, %v3724
      %v3753 = vpack.c.b16 %v3727, %v3726
      %v3754 = vpack.c.b16 %v3729, %v3728
      %v3755 = vpack.c.b16 %v3731, %v3730
      %v3756 = vpack.c.b16 %v3733, %v3732
      %v3757 = vpack.c.b16 %v3735, %v3734
      %v3758 = vpack.c.b16 %v3737, %v3736
      %v3759 = vpack.c.b16 %v3739, %v3738
      %v3760 = vpack.c.b16 %v3741, %v3740
      %v3761 = vpack.c.b16 %v3743, %v3742
      %v3762 = vpack.c.b16 %v3745, %v3744
      %v3763 = vpack.c.b16 %v3747, %v3746
      %v3796 = vunpack.c.l.b16 %v3700
      %v3797 = vunpack.c.l.b16 %v3701
      %v3798 = vunpack.c.l.b16 %v3702
      %v3799 = vunpack.c.l.b16 %v3703
      %v3800 = vunpack.c.l.b16 %v3704
      %v3801 = vunpack.c.l.b16 %v3705
      %v3802 = vunpack.c.l.b16 %v3706
      %v3803 = vunpack.c.l.b16 %v3707
      %v3804 = vunpack.c.l.b16 %v3708
      %v3805 = vunpack.c.l.b16 %v3709
      %v3806 = vunpack.c.l.b16 %v3710
      %v3807 = vunpack.c.l.b16 %v3711
      %v3808 = vunpack.c.l.b16 %v3712
      %v3809 = vunpack.c.l.b16 %v3713
      %v3810 = vunpack.c.l.b16 %v3714
      %v3811 = vunpack.c.l.b16 %v3715
      %v3812 = vpack.c.b16 %v3797, %v3796
      %v3813 = vpack.c.b16 %v3799, %v3798
      %v3814 = vpack.c.b16 %v3801, %v3800
      %v3815 = vpack.c.b16 %v3803, %v3802
      %v3816 = vpack.c.b16 %v3805, %v3804
      %v3817 = vpack.c.b16 %v3807, %v3806
      %v3818 = vpack.c.b16 %v3809, %v3808
      %v3819 = vpack.c.b16 %v3811, %v3810
      %3828 = vmatpush.bf16.msra.mxu0 %v3819
      %3829 = vmatpush.bf16.msra.mxu0 %v3818
      %3830 = vmatpush.bf16.msra.mxu0 %v3817
      %3831 = vmatpush.bf16.msra.mxu0 %v3816
      %3832 = vmatpush.bf16.msra.mxu0 %v3815
      %3833 = vmatpush.bf16.msra.mxu0 %v3814
      %3834 = vmatpush.bf16.msra.mxu0 %v3813
      %3835 = vmatpush.bf16.msra.mxu0 %v3812
      %3836 = vmatmul.bf16.gmra.mxu0 %v3748
      %v3837 = vpop.f32.mrf.mxu0
      %v3838 = vadd.f32 0.0, %v3837
      %v3839 = vpop.f32.mrf.mxu0
      %v3840 = vadd.f32 0.0, %v3839
      %3841 = vmatmul.bf16.gmra.mxu0 %v3749
      %v3842 = vpop.f32.mrf.mxu0
      %v3843 = vadd.f32 0.0, %v3842
      %v3844 = vpop.f32.mrf.mxu0
      %v3845 = vadd.f32 0.0, %v3844
      %3846 = vmatmul.bf16.gmra.mxu0 %v3750
      %v3847 = vpop.f32.mrf.mxu0
      %v3848 = vadd.f32 0.0, %v3847
      %v3849 = vpop.f32.mrf.mxu0
      %v3850 = vadd.f32 0.0, %v3849
      %3851 = vmatmul.bf16.gmra.mxu0 %v3751
      %v3852 = vpop.f32.mrf.mxu0
      %v3853 = vadd.f32 0.0, %v3852
      %v3854 = vpop.f32.mrf.mxu0
      %v3855 = vadd.f32 0.0, %v3854
      %3856 = vmatmul.bf16.gmra.mxu0 %v3752
      %v3857 = vpop.f32.mrf.mxu0
      %v3858 = vadd.f32 0.0, %v3857
      %v3859 = vpop.f32.mrf.mxu0
      %v3860 = vadd.f32 0.0, %v3859
      %3861 = vmatmul.bf16.gmra.mxu0 %v3753
      %v3862 = vpop.f32.mrf.mxu0
      %v3863 = vadd.f32 0.0, %v3862
      %v3864 = vpop.f32.mrf.mxu0
      %v3865 = vadd.f32 0.0, %v3864
      %3866 = vmatmul.bf16.gmra.mxu0 %v3754
      %v3867 = vpop.f32.mrf.mxu0
      %v3868 = vadd.f32 0.0, %v3867
      %v3869 = vpop.f32.mrf.mxu0
      %v3870 = vadd.f32 0.0, %v3869
      %3871 = vmatmul.bf16.gmra.mxu0 %v3755
      %v3872 = vpop.f32.mrf.mxu0
      %v3873 = vadd.f32 0.0, %v3872
      %v3874 = vpop.f32.mrf.mxu0
      %v3875 = vadd.f32 0.0, %v3874
      %3876 = vmatmul.bf16.gmra.mxu0 %v3756
      %v3877 = vpop.f32.mrf.mxu0
      %v3878 = vadd.f32 0.0, %v3877
      %v3879 = vpop.f32.mrf.mxu0
      %v3880 = vadd.f32 0.0, %v3879
      %3881 = vmatmul.bf16.gmra.mxu0 %v3757
      %v3882 = vpop.f32.mrf.mxu0
      %v3883 = vadd.f32 0.0, %v3882
      %v3884 = vpop.f32.mrf.mxu0
      %v3885 = vadd.f32 0.0, %v3884
      %3886 = vmatmul.bf16.gmra.mxu0 %v3758
      %v3887 = vpop.f32.mrf.mxu0
      %v3888 = vadd.f32 0.0, %v3887
      %v3889 = vpop.f32.mrf.mxu0
      %v3890 = vadd.f32 0.0, %v3889
      %3891 = vmatmul.bf16.gmra.mxu0 %v3759
      %v3892 = vpop.f32.mrf.mxu0
      %v3893 = vadd.f32 0.0, %v3892
      %v3894 = vpop.f32.mrf.mxu0
      %v3895 = vadd.f32 0.0, %v3894
      %3896 = vmatmul.bf16.gmra.mxu0 %v3760
      %v3897 = vpop.f32.mrf.mxu0
      %v3898 = vadd.f32 0.0, %v3897
      %v3899 = vpop.f32.mrf.mxu0
      %v3900 = vadd.f32 0.0, %v3899
      %3901 = vmatmul.bf16.gmra.mxu0 %v3761
      %v3902 = vpop.f32.mrf.mxu0
      %v3903 = vadd.f32 0.0, %v3902
      %v3904 = vpop.f32.mrf.mxu0
      %v3905 = vadd.f32 0.0, %v3904
      %3906 = vmatmul.bf16.gmra.mxu0 %v3762
      %v3907 = vpop.f32.mrf.mxu0
      %v3908 = vadd.f32 0.0, %v3907
      %v3909 = vpop.f32.mrf.mxu0
      %v3910 = vadd.f32 0.0, %v3909
      %3911 = vmatmul.bf16.gmra.mxu0 %v3763
      %v3912 = vpop.f32.mrf.mxu0
      %v3913 = vadd.f32 0.0, %v3912
      %v3914 = vpop.f32.mrf.mxu0
      %v3915 = vadd.f32 0.0, %v3914
      %3916 = vdwg.mxu0
      %v3917 = vadd.f32 %v3235, %v3838
      %v3918 = vadd.f32 %v3236, %v3840
      %v3919 = vadd.f32 %v3237, %v3843
      %v3920 = vadd.f32 %v3238, %v3845
      %v3921 = vadd.f32 %v3239, %v3848
      %v3922 = vadd.f32 %v3240, %v3850
      %v3923 = vadd.f32 %v3241, %v3853
      %v3924 = vadd.f32 %v3242, %v3855
      %v3925 = vadd.f32 %v3243, %v3858
      %v3926 = vadd.f32 %v3244, %v3860
      %v3927 = vadd.f32 %v3245, %v3863
      %v3928 = vadd.f32 %v3246, %v3865
      %v3929 = vadd.f32 %v3247, %v3868
      %v3930 = vadd.f32 %v3248, %v3870
      %v3931 = vadd.f32 %v3249, %v3873
      %v3932 = vadd.f32 %v3250, %v3875
      %v3933 = vadd.f32 %v3251, %v3878
      %v3934 = vadd.f32 %v3252, %v3880
      %v3935 = vadd.f32 %v3253, %v3883
      %v3936 = vadd.f32 %v3254, %v3885
      %v3937 = vadd.f32 %v3255, %v3888
      %v3938 = vadd.f32 %v3256, %v3890
      %v3939 = vadd.f32 %v3257, %v3893
      %v3940 = vadd.f32 %v3258, %v3895
      %v3941 = vadd.f32 %v3259, %v3898
      %v3942 = vadd.f32 %v3260, %v3900
      %v3943 = vadd.f32 %v3261, %v3903
      %v3944 = vadd.f32 %v3262, %v3905
      %v3945 = vadd.f32 %v3263, %v3908
      %v3946 = vadd.f32 %v3264, %v3910
      %v3947 = vadd.f32 %v3265, %v3913
      %v3948 = vadd.f32 %v3266, %v3915
      %s3949 = scalar_lea.vmem [#allocation2], 32
      %v3950 = vld [vmem:[%s3949] sm:$0x8]
      %v3951 = vld [vmem:[%s3949 + $0x4] sm:$0xf]
      %v3952 = vld [vmem:[%s3949 + $0x8] sm:$0xf]
      %v3953 = vld [vmem:[%s3949 + $0x10] sm:$0x8]
      %v3954 = vld [vmem:[%s3949 + $0x14] sm:$0xf]
      %v3955 = vld [vmem:[%s3949 + $0x18] sm:$0xf]
      %v3956 = vld [vmem:[%s3949 + $0x20] sm:$0x8]
      %v3957 = vld [vmem:[%s3949 + $0x24] sm:$0xf]
      %v3958 = vld [vmem:[%s3949 + $0x28] sm:$0xf]
      %v3959 = vld [vmem:[%s3949 + $0x30] sm:$0x8]
      %v3960 = vld [vmem:[%s3949 + $0x34] sm:$0xf]
      %v3961 = vld [vmem:[%s3949 + $0x38] sm:$0xf]
      %v3962 = vld [vmem:[%s3949 + $0x40] sm:$0x8]
      %v3963 = vld [vmem:[%s3949 + $0x44] sm:$0xf]
      %v3964 = vld [vmem:[%s3949 + $0x48] sm:$0xf]
      %v3965 = vld [vmem:[%s3949 + $0x50] sm:$0x8]
      %v3966 = vld [vmem:[%s3949 + $0x54] sm:$0xf]
      %v3967 = vld [vmem:[%s3949 + $0x58] sm:$0xf]
      %v3968 = vld [vmem:[%s3949 + $0x60] sm:$0x8]
      %v3969 = vld [vmem:[%s3949 + $0x64] sm:$0xf]
      %v3970 = vld [vmem:[%s3949 + $0x68] sm:$0xf]
      %v3971 = vld [vmem:[%s3949 + $0x70] sm:$0x8]
      %v3972 = vld [vmem:[%s3949 + $0x74] sm:$0xf]
      %v3973 = vld [vmem:[%s3949 + $0x78] sm:$0xf]
      %v3974 = vld [vmem:[%s3949 + $0x80] sm:$0x8]
      %v3975 = vld [vmem:[%s3949 + $0x84] sm:$0xf]
      %v3976 = vld [vmem:[%s3949 + $0x88] sm:$0xf]
      %v3977 = vld [vmem:[%s3949 + $0x90] sm:$0x8]
      %v3978 = vld [vmem:[%s3949 + $0x94] sm:$0xf]
      %v3979 = vld [vmem:[%s3949 + $0x98] sm:$0xf]
      %v3980 = vld [vmem:[%s3949 + $0xa0] sm:$0x8]
      %v3981 = vld [vmem:[%s3949 + $0xa4] sm:$0xf]
      %v3982 = vld [vmem:[%s3949 + $0xa8] sm:$0xf]
      %v3983 = vld [vmem:[%s3949 + $0xb0] sm:$0x8]
      %v3984 = vld [vmem:[%s3949 + $0xb4] sm:$0xf]
      %v3985 = vld [vmem:[%s3949 + $0xb8] sm:$0xf]
      %v3986 = vld [vmem:[%s3949 + $0xc0] sm:$0x8]
      %v3987 = vld [vmem:[%s3949 + $0xc4] sm:$0xf]
      %v3988 = vld [vmem:[%s3949 + $0xc8] sm:$0xf]
      %v3989 = vld [vmem:[%s3949 + $0xd0] sm:$0x8]
      %v3990 = vld [vmem:[%s3949 + $0xd4] sm:$0xf]
      %v3991 = vld [vmem:[%s3949 + $0xd8] sm:$0xf]
      %v3992 = vld [vmem:[%s3949 + $0xe0] sm:$0x8]
      %v3993 = vld [vmem:[%s3949 + $0xe4] sm:$0xf]
      %v3994 = vld [vmem:[%s3949 + $0xe8] sm:$0xf]
      %v3995 = vld [vmem:[%s3949 + $0xf0] sm:$0x8]
      %v3996 = vld [vmem:[%s3949 + $0xf4] sm:$0xf]
      %v3997 = vld [vmem:[%s3949 + $0xf8] sm:$0xf]
      %v3999 = vshrl.u32 %v3950, 16
      %v4001 = vrot.slane %v3999, 7
      %v4002 = vrot.slane %v4001, 4
      %v4004 = vshrl.u32 %v3951, 16
      %v4006 = vrot.slane %v4004, 7
      %v4007 = vshll.u32 %v3951, 16
      %v4009 = vor.u32 %v4006, %v4007
      %v4010 = vsel %vm830, %v4002, %v4009
      %v4011 = vrot.slane %v4006, 4
      %v4013 = vshrl.u32 %v3952, 16
      %v4015 = vrot.slane %v4013, 7
      %v4016 = vshll.u32 %v3952, 16
      %v4018 = vor.u32 %v4015, %v4016
      %v4019 = vsel %vm830, %v4011, %v4018
      %v4021 = vshrl.u32 %v3953, 16
      %v4023 = vrot.slane %v4021, 7
      %v4024 = vrot.slane %v4023, 4
      %v4026 = vshrl.u32 %v3954, 16
      %v4028 = vrot.slane %v4026, 7
      %v4029 = vshll.u32 %v3954, 16
      %v4031 = vor.u32 %v4028, %v4029
      %v4032 = vsel %vm830, %v4024, %v4031
      %v4033 = vrot.slane %v4028, 4
      %v4035 = vshrl.u32 %v3955, 16
      %v4037 = vrot.slane %v4035, 7
      %v4038 = vshll.u32 %v3955, 16
      %v4040 = vor.u32 %v4037, %v4038
      %v4041 = vsel %vm830, %v4033, %v4040
      %v4043 = vshrl.u32 %v3956, 16
      %v4045 = vrot.slane %v4043, 7
      %v4046 = vrot.slane %v4045, 4
      %v4048 = vshrl.u32 %v3957, 16
      %v4050 = vrot.slane %v4048, 7
      %v4051 = vshll.u32 %v3957, 16
      %v4053 = vor.u32 %v4050, %v4051
      %v4054 = vsel %vm830, %v4046, %v4053
      %v4055 = vrot.slane %v4050, 4
      %v4057 = vshrl.u32 %v3958, 16
      %v4059 = vrot.slane %v4057, 7
      %v4060 = vshll.u32 %v3958, 16
      %v4062 = vor.u32 %v4059, %v4060
      %v4063 = vsel %vm830, %v4055, %v4062
      %v4065 = vshrl.u32 %v3959, 16
      %v4067 = vrot.slane %v4065, 7
      %v4068 = vrot.slane %v4067, 4
      %v4070 = vshrl.u32 %v3960, 16
      %v4072 = vrot.slane %v4070, 7
      %v4073 = vshll.u32 %v3960, 16
      %v4075 = vor.u32 %v4072, %v4073
      %v4076 = vsel %vm830, %v4068, %v4075
      %v4077 = vrot.slane %v4072, 4
      %v4079 = vshrl.u32 %v3961, 16
      %v4081 = vrot.slane %v4079, 7
      %v4082 = vshll.u32 %v3961, 16
      %v4084 = vor.u32 %v4081, %v4082
      %v4085 = vsel %vm830, %v4077, %v4084
      %v4087 = vshrl.u32 %v3962, 16
      %v4089 = vrot.slane %v4087, 7
      %v4090 = vrot.slane %v4089, 4
      %v4092 = vshrl.u32 %v3963, 16
      %v4094 = vrot.slane %v4092, 7
      %v4095 = vshll.u32 %v3963, 16
      %v4097 = vor.u32 %v4094, %v4095
      %v4098 = vsel %vm830, %v4090, %v4097
      %v4099 = vrot.slane %v4094, 4
      %v4101 = vshrl.u32 %v3964, 16
      %v4103 = vrot.slane %v4101, 7
      %v4104 = vshll.u32 %v3964, 16
      %v4106 = vor.u32 %v4103, %v4104
      %v4107 = vsel %vm830, %v4099, %v4106
      %v4109 = vshrl.u32 %v3965, 16
      %v4111 = vrot.slane %v4109, 7
      %v4112 = vrot.slane %v4111, 4
      %v4114 = vshrl.u32 %v3966, 16
      %v4116 = vrot.slane %v4114, 7
      %v4117 = vshll.u32 %v3966, 16
      %v4119 = vor.u32 %v4116, %v4117
      %v4120 = vsel %vm830, %v4112, %v4119
      %v4121 = vrot.slane %v4116, 4
      %v4123 = vshrl.u32 %v3967, 16
      %v4125 = vrot.slane %v4123, 7
      %v4126 = vshll.u32 %v3967, 16
      %v4128 = vor.u32 %v4125, %v4126
      %v4129 = vsel %vm830, %v4121, %v4128
      %v4131 = vshrl.u32 %v3968, 16
      %v4133 = vrot.slane %v4131, 7
      %v4134 = vrot.slane %v4133, 4
      %v4136 = vshrl.u32 %v3969, 16
      %v4138 = vrot.slane %v4136, 7
      %v4139 = vshll.u32 %v3969, 16
      %v4141 = vor.u32 %v4138, %v4139
      %v4142 = vsel %vm830, %v4134, %v4141
      %v4143 = vrot.slane %v4138, 4
      %v4145 = vshrl.u32 %v3970, 16
      %v4147 = vrot.slane %v4145, 7
      %v4148 = vshll.u32 %v3970, 16
      %v4150 = vor.u32 %v4147, %v4148
      %v4151 = vsel %vm830, %v4143, %v4150
      %v4153 = vshrl.u32 %v3971, 16
      %v4155 = vrot.slane %v4153, 7
      %v4156 = vrot.slane %v4155, 4
      %v4158 = vshrl.u32 %v3972, 16
      %v4160 = vrot.slane %v4158, 7
      %v4161 = vshll.u32 %v3972, 16
      %v4163 = vor.u32 %v4160, %v4161
      %v4164 = vsel %vm830, %v4156, %v4163
      %v4165 = vrot.slane %v4160, 4
      %v4167 = vshrl.u32 %v3973, 16
      %v4169 = vrot.slane %v4167, 7
      %v4170 = vshll.u32 %v3973, 16
      %v4172 = vor.u32 %v4169, %v4170
      %v4173 = vsel %vm830, %v4165, %v4172
      %v4175 = vshrl.u32 %v3974, 16
      %v4177 = vrot.slane %v4175, 7
      %v4178 = vrot.slane %v4177, 4
      %v4180 = vshrl.u32 %v3975, 16
      %v4182 = vrot.slane %v4180, 7
      %v4183 = vshll.u32 %v3975, 16
      %v4185 = vor.u32 %v4182, %v4183
      %v4186 = vsel %vm830, %v4178, %v4185
      %v4187 = vrot.slane %v4182, 4
      %v4189 = vshrl.u32 %v3976, 16
      %v4191 = vrot.slane %v4189, 7
      %v4192 = vshll.u32 %v3976, 16
      %v4194 = vor.u32 %v4191, %v4192
      %v4195 = vsel %vm830, %v4187, %v4194
      %v4197 = vshrl.u32 %v3977, 16
      %v4199 = vrot.slane %v4197, 7
      %v4200 = vrot.slane %v4199, 4
      %v4202 = vshrl.u32 %v3978, 16
      %v4204 = vrot.slane %v4202, 7
      %v4205 = vshll.u32 %v3978, 16
      %v4207 = vor.u32 %v4204, %v4205
      %v4208 = vsel %vm830, %v4200, %v4207
      %v4209 = vrot.slane %v4204, 4
      %v4211 = vshrl.u32 %v3979, 16
      %v4213 = vrot.slane %v4211, 7
      %v4214 = vshll.u32 %v3979, 16
      %v4216 = vor.u32 %v4213, %v4214
      %v4217 = vsel %vm830, %v4209, %v4216
      %v4219 = vshrl.u32 %v3980, 16
      %v4221 = vrot.slane %v4219, 7
      %v4222 = vrot.slane %v4221, 4
      %v4224 = vshrl.u32 %v3981, 16
      %v4226 = vrot.slane %v4224, 7
      %v4227 = vshll.u32 %v3981, 16
      %v4229 = vor.u32 %v4226, %v4227
      %v4230 = vsel %vm830, %v4222, %v4229
      %v4231 = vrot.slane %v4226, 4
      %v4233 = vshrl.u32 %v3982, 16
      %v4235 = vrot.slane %v4233, 7
      %v4236 = vshll.u32 %v3982, 16
      %v4238 = vor.u32 %v4235, %v4236
      %v4239 = vsel %vm830, %v4231, %v4238
      %v4241 = vshrl.u32 %v3983, 16
      %v4243 = vrot.slane %v4241, 7
      %v4244 = vrot.slane %v4243, 4
      %v4246 = vshrl.u32 %v3984, 16
      %v4248 = vrot.slane %v4246, 7
      %v4249 = vshll.u32 %v3984, 16
      %v4251 = vor.u32 %v4248, %v4249
      %v4252 = vsel %vm830, %v4244, %v4251
      %v4253 = vrot.slane %v4248, 4
      %v4255 = vshrl.u32 %v3985, 16
      %v4257 = vrot.slane %v4255, 7
      %v4258 = vshll.u32 %v3985, 16
      %v4260 = vor.u32 %v4257, %v4258
      %v4261 = vsel %vm830, %v4253, %v4260
      %v4263 = vshrl.u32 %v3986, 16
      %v4265 = vrot.slane %v4263, 7
      %v4266 = vrot.slane %v4265, 4
      %v4268 = vshrl.u32 %v3987, 16
      %v4270 = vrot.slane %v4268, 7
      %v4271 = vshll.u32 %v3987, 16
      %v4273 = vor.u32 %v4270, %v4271
      %v4274 = vsel %vm830, %v4266, %v4273
      %v4275 = vrot.slane %v4270, 4
      %v4277 = vshrl.u32 %v3988, 16
      %v4279 = vrot.slane %v4277, 7
      %v4280 = vshll.u32 %v3988, 16
      %v4282 = vor.u32 %v4279, %v4280
      %v4283 = vsel %vm830, %v4275, %v4282
      %v4285 = vshrl.u32 %v3989, 16
      %v4287 = vrot.slane %v4285, 7
      %v4288 = vrot.slane %v4287, 4
      %v4290 = vshrl.u32 %v3990, 16
      %v4292 = vrot.slane %v4290, 7
      %v4293 = vshll.u32 %v3990, 16
      %v4295 = vor.u32 %v4292, %v4293
      %v4296 = vsel %vm830, %v4288, %v4295
      %v4297 = vrot.slane %v4292, 4
      %v4299 = vshrl.u32 %v3991, 16
      %v4301 = vrot.slane %v4299, 7
      %v4302 = vshll.u32 %v3991, 16
      %v4304 = vor.u32 %v4301, %v4302
      %v4305 = vsel %vm830, %v4297, %v4304
      %v4307 = vshrl.u32 %v3992, 16
      %v4309 = vrot.slane %v4307, 7
      %v4310 = vrot.slane %v4309, 4
      %v4312 = vshrl.u32 %v3993, 16
      %v4314 = vrot.slane %v4312, 7
      %v4315 = vshll.u32 %v3993, 16
      %v4317 = vor.u32 %v4314, %v4315
      %v4318 = vsel %vm830, %v4310, %v4317
      %v4319 = vrot.slane %v4314, 4
      %v4321 = vshrl.u32 %v3994, 16
      %v4323 = vrot.slane %v4321, 7
      %v4324 = vshll.u32 %v3994, 16
      %v4326 = vor.u32 %v4323, %v4324
      %v4327 = vsel %vm830, %v4319, %v4326
      %v4329 = vshrl.u32 %v3995, 16
      %v4331 = vrot.slane %v4329, 7
      %v4332 = vrot.slane %v4331, 4
      %v4334 = vshrl.u32 %v3996, 16
      %v4336 = vrot.slane %v4334, 7
      %v4337 = vshll.u32 %v3996, 16
      %v4339 = vor.u32 %v4336, %v4337
      %v4340 = vsel %vm830, %v4332, %v4339
      %v4341 = vrot.slane %v4336, 4
      %v4343 = vshrl.u32 %v3997, 16
      %v4345 = vrot.slane %v4343, 7
      %v4346 = vshll.u32 %v3997, 16
      %v4348 = vor.u32 %v4345, %v4346
      %v4349 = vsel %vm830, %v4341, %v4348
      %s4350 = scalar_lea.vmem %s3, 384
      %v4351 = vld [vmem:[%s4350] sm:$0xf]
      %v4352 = vld [vmem:[%s4350 + $0x4] sm:$0xf]
      %v4353 = vld [vmem:[%s4350 + $0x8] sm:$0xf]
      %v4354 = vld [vmem:[%s4350 + $0xc] sm:$0xf]
      %v4355 = vld [vmem:[%s4350 + $0x10] sm:$0xf]
      %v4356 = vld [vmem:[%s4350 + $0x14] sm:$0xf]
      %v4357 = vld [vmem:[%s4350 + $0x18] sm:$0xf]
      %v4358 = vld [vmem:[%s4350 + $0x1c] sm:$0xf]
      %v4359 = vld [vmem:[%s4350 + $0x20] sm:$0xf]
      %v4360 = vld [vmem:[%s4350 + $0x24] sm:$0xf]
      %v4361 = vld [vmem:[%s4350 + $0x28] sm:$0xf]
      %v4362 = vld [vmem:[%s4350 + $0x2c] sm:$0xf]
      %v4363 = vld [vmem:[%s4350 + $0x30] sm:$0xf]
      %v4364 = vld [vmem:[%s4350 + $0x34] sm:$0xf]
      %v4365 = vld [vmem:[%s4350 + $0x38] sm:$0xf]
      %v4366 = vld [vmem:[%s4350 + $0x3c] sm:$0xf]
      %v4367 = vunpack.c.l.b16 %v4010
      %v4368 = vunpack.c.l.b16 %v4019
      %v4369 = vunpack.c.l.b16 %v4032
      %v4370 = vunpack.c.l.b16 %v4041
      %v4371 = vunpack.c.l.b16 %v4054
      %v4372 = vunpack.c.l.b16 %v4063
      %v4373 = vunpack.c.l.b16 %v4076
      %v4374 = vunpack.c.l.b16 %v4085
      %v4375 = vunpack.c.l.b16 %v4098
      %v4376 = vunpack.c.l.b16 %v4107
      %v4377 = vunpack.c.l.b16 %v4120
      %v4378 = vunpack.c.l.b16 %v4129
      %v4379 = vunpack.c.l.b16 %v4142
      %v4380 = vunpack.c.l.b16 %v4151
      %v4381 = vunpack.c.l.b16 %v4164
      %v4382 = vunpack.c.l.b16 %v4173
      %v4383 = vunpack.c.l.b16 %v4186
      %v4384 = vunpack.c.l.b16 %v4195
      %v4385 = vunpack.c.l.b16 %v4208
      %v4386 = vunpack.c.l.b16 %v4217
      %v4387 = vunpack.c.l.b16 %v4230
      %v4388 = vunpack.c.l.b16 %v4239
      %v4389 = vunpack.c.l.b16 %v4252
      %v4390 = vunpack.c.l.b16 %v4261
      %v4391 = vunpack.c.l.b16 %v4274
      %v4392 = vunpack.c.l.b16 %v4283
      %v4393 = vunpack.c.l.b16 %v4296
      %v4394 = vunpack.c.l.b16 %v4305
      %v4395 = vunpack.c.l.b16 %v4318
      %v4396 = vunpack.c.l.b16 %v4327
      %v4397 = vunpack.c.l.b16 %v4340
      %v4398 = vunpack.c.l.b16 %v4349
      %v4399 = vpack.c.b16 %v4368, %v4367
      %v4400 = vpack.c.b16 %v4370, %v4369
      %v4401 = vpack.c.b16 %v4372, %v4371
      %v4402 = vpack.c.b16 %v4374, %v4373
      %v4403 = vpack.c.b16 %v4376, %v4375
      %v4404 = vpack.c.b16 %v4378, %v4377
      %v4405 = vpack.c.b16 %v4380, %v4379
      %v4406 = vpack.c.b16 %v4382, %v4381
      %v4407 = vpack.c.b16 %v4384, %v4383
      %v4408 = vpack.c.b16 %v4386, %v4385
      %v4409 = vpack.c.b16 %v4388, %v4387
      %v4410 = vpack.c.b16 %v4390, %v4389
      %v4411 = vpack.c.b16 %v4392, %v4391
      %v4412 = vpack.c.b16 %v4394, %v4393
      %v4413 = vpack.c.b16 %v4396, %v4395
      %v4414 = vpack.c.b16 %v4398, %v4397
      %v4447 = vunpack.c.l.b16 %v4351
      %v4448 = vunpack.c.l.b16 %v4352
      %v4449 = vunpack.c.l.b16 %v4353
      %v4450 = vunpack.c.l.b16 %v4354
      %v4451 = vunpack.c.l.b16 %v4355
      %v4452 = vunpack.c.l.b16 %v4356
      %v4453 = vunpack.c.l.b16 %v4357
      %v4454 = vunpack.c.l.b16 %v4358
      %v4455 = vunpack.c.l.b16 %v4359
      %v4456 = vunpack.c.l.b16 %v4360
      %v4457 = vunpack.c.l.b16 %v4361
      %v4458 = vunpack.c.l.b16 %v4362
      %v4459 = vunpack.c.l.b16 %v4363
      %v4460 = vunpack.c.l.b16 %v4364
      %v4461 = vunpack.c.l.b16 %v4365
      %v4462 = vunpack.c.l.b16 %v4366
      %v4463 = vpack.c.b16 %v4448, %v4447
      %v4464 = vpack.c.b16 %v4450, %v4449
      %v4465 = vpack.c.b16 %v4452, %v4451
      %v4466 = vpack.c.b16 %v4454, %v4453
      %v4467 = vpack.c.b16 %v4456, %v4455
      %v4468 = vpack.c.b16 %v4458, %v4457
      %v4469 = vpack.c.b16 %v4460, %v4459
      %v4470 = vpack.c.b16 %v4462, %v4461
      %4479 = vmatpush.bf16.msra.mxu0 %v4470
      %4480 = vmatpush.bf16.msra.mxu0 %v4469
      %4481 = vmatpush.bf16.msra.mxu0 %v4468
      %4482 = vmatpush.bf16.msra.mxu0 %v4467
      %4483 = vmatpush.bf16.msra.mxu0 %v4466
      %4484 = vmatpush.bf16.msra.mxu0 %v4465
      %4485 = vmatpush.bf16.msra.mxu0 %v4464
      %4486 = vmatpush.bf16.msra.mxu0 %v4463
      %4487 = vmatmul.bf16.gmra.mxu0 %v4399
      %v4488 = vpop.f32.mrf.mxu0
      %v4489 = vadd.f32 0.0, %v4488
      %v4490 = vpop.f32.mrf.mxu0
      %v4491 = vadd.f32 0.0, %v4490
      %4492 = vmatmul.bf16.gmra.mxu0 %v4400
      %v4493 = vpop.f32.mrf.mxu0
      %v4494 = vadd.f32 0.0, %v4493
      %v4495 = vpop.f32.mrf.mxu0
      %v4496 = vadd.f32 0.0, %v4495
      %4497 = vmatmul.bf16.gmra.mxu0 %v4401
      %v4498 = vpop.f32.mrf.mxu0
      %v4499 = vadd.f32 0.0, %v4498
      %v4500 = vpop.f32.mrf.mxu0
      %v4501 = vadd.f32 0.0, %v4500
      %4502 = vmatmul.bf16.gmra.mxu0 %v4402
      %v4503 = vpop.f32.mrf.mxu0
      %v4504 = vadd.f32 0.0, %v4503
      %v4505 = vpop.f32.mrf.mxu0
      %v4506 = vadd.f32 0.0, %v4505
      %4507 = vmatmul.bf16.gmra.mxu0 %v4403
      %v4508 = vpop.f32.mrf.mxu0
      %v4509 = vadd.f32 0.0, %v4508
      %v4510 = vpop.f32.mrf.mxu0
      %v4511 = vadd.f32 0.0, %v4510
      %4512 = vmatmul.bf16.gmra.mxu0 %v4404
      %v4513 = vpop.f32.mrf.mxu0
      %v4514 = vadd.f32 0.0, %v4513
      %v4515 = vpop.f32.mrf.mxu0
      %v4516 = vadd.f32 0.0, %v4515
      %4517 = vmatmul.bf16.gmra.mxu0 %v4405
      %v4518 = vpop.f32.mrf.mxu0
      %v4519 = vadd.f32 0.0, %v4518
      %v4520 = vpop.f32.mrf.mxu0
      %v4521 = vadd.f32 0.0, %v4520
      %4522 = vmatmul.bf16.gmra.mxu0 %v4406
      %v4523 = vpop.f32.mrf.mxu0
      %v4524 = vadd.f32 0.0, %v4523
      %v4525 = vpop.f32.mrf.mxu0
      %v4526 = vadd.f32 0.0, %v4525
      %4527 = vmatmul.bf16.gmra.mxu0 %v4407
      %v4528 = vpop.f32.mrf.mxu0
      %v4529 = vadd.f32 0.0, %v4528
      %v4530 = vpop.f32.mrf.mxu0
      %v4531 = vadd.f32 0.0, %v4530
      %4532 = vmatmul.bf16.gmra.mxu0 %v4408
      %v4533 = vpop.f32.mrf.mxu0
      %v4534 = vadd.f32 0.0, %v4533
      %v4535 = vpop.f32.mrf.mxu0
      %v4536 = vadd.f32 0.0, %v4535
      %4537 = vmatmul.bf16.gmra.mxu0 %v4409
      %v4538 = vpop.f32.mrf.mxu0
      %v4539 = vadd.f32 0.0, %v4538
      %v4540 = vpop.f32.mrf.mxu0
      %v4541 = vadd.f32 0.0, %v4540
      %4542 = vmatmul.bf16.gmra.mxu0 %v4410
      %v4543 = vpop.f32.mrf.mxu0
      %v4544 = vadd.f32 0.0, %v4543
      %v4545 = vpop.f32.mrf.mxu0
      %v4546 = vadd.f32 0.0, %v4545
      %4547 = vmatmul.bf16.gmra.mxu0 %v4411
      %v4548 = vpop.f32.mrf.mxu0
      %v4549 = vadd.f32 0.0, %v4548
      %v4550 = vpop.f32.mrf.mxu0
      %v4551 = vadd.f32 0.0, %v4550
      %4552 = vmatmul.bf16.gmra.mxu0 %v4412
      %v4553 = vpop.f32.mrf.mxu0
      %v4554 = vadd.f32 0.0, %v4553
      %v4555 = vpop.f32.mrf.mxu0
      %v4556 = vadd.f32 0.0, %v4555
      %4557 = vmatmul.bf16.gmra.mxu0 %v4413
      %v4558 = vpop.f32.mrf.mxu0
      %v4559 = vadd.f32 0.0, %v4558
      %v4560 = vpop.f32.mrf.mxu0
      %v4561 = vadd.f32 0.0, %v4560
      %4562 = vmatmul.bf16.gmra.mxu0 %v4414
      %v4563 = vpop.f32.mrf.mxu0
      %v4564 = vadd.f32 0.0, %v4563
      %v4565 = vpop.f32.mrf.mxu0
      %v4566 = vadd.f32 0.0, %v4565
      %4567 = vdwg.mxu0
      %v4568 = vadd.f32 %v3917, %v4489
      %v4569 = vadd.f32 %v3918, %v4491
      %v4570 = vadd.f32 %v3919, %v4494
      %v4571 = vadd.f32 %v3920, %v4496
      %v4572 = vadd.f32 %v3921, %v4499
      %v4573 = vadd.f32 %v3922, %v4501
      %v4574 = vadd.f32 %v3923, %v4504
      %v4575 = vadd.f32 %v3924, %v4506
      %v4576 = vadd.f32 %v3925, %v4509
      %v4577 = vadd.f32 %v3926, %v4511
      %v4578 = vadd.f32 %v3927, %v4514
      %v4579 = vadd.f32 %v3928, %v4516
      %v4580 = vadd.f32 %v3929, %v4519
      %v4581 = vadd.f32 %v3930, %v4521
      %v4582 = vadd.f32 %v3931, %v4524
      %v4583 = vadd.f32 %v3932, %v4526
      %v4584 = vadd.f32 %v3933, %v4529
      %v4585 = vadd.f32 %v3934, %v4531
      %v4586 = vadd.f32 %v3935, %v4534
      %v4587 = vadd.f32 %v3936, %v4536
      %v4588 = vadd.f32 %v3937, %v4539
      %v4589 = vadd.f32 %v3938, %v4541
      %v4590 = vadd.f32 %v3939, %v4544
      %v4591 = vadd.f32 %v3940, %v4546
      %v4592 = vadd.f32 %v3941, %v4549
      %v4593 = vadd.f32 %v3942, %v4551
      %v4594 = vadd.f32 %v3943, %v4554
      %v4595 = vadd.f32 %v3944, %v4556
      %v4596 = vadd.f32 %v3945, %v4559
      %v4597 = vadd.f32 %v3946, %v4561
      %v4598 = vadd.f32 %v3947, %v4564
      %v4599 = vadd.f32 %v3948, %v4566
      %s4600 = scalar_lea.vmem %s3, 448
      %v4601 = vld [vmem:[%s4600] sm:$0xf]
      %v4602 = vld [vmem:[%s4600 + $0x4] sm:$0xf]
      %v4603 = vld [vmem:[%s4600 + $0x8] sm:$0xf]
      %v4604 = vld [vmem:[%s4600 + $0xc] sm:$0xf]
      %v4605 = vld [vmem:[%s4600 + $0x10] sm:$0xf]
      %v4606 = vld [vmem:[%s4600 + $0x14] sm:$0xf]
      %v4607 = vld [vmem:[%s4600 + $0x18] sm:$0xf]
      %v4608 = vld [vmem:[%s4600 + $0x1c] sm:$0xf]
      %v4609 = vld [vmem:[%s4600 + $0x20] sm:$0xf]
      %v4610 = vld [vmem:[%s4600 + $0x24] sm:$0xf]
      %v4611 = vld [vmem:[%s4600 + $0x28] sm:$0xf]
      %v4612 = vld [vmem:[%s4600 + $0x2c] sm:$0xf]
      %v4613 = vld [vmem:[%s4600 + $0x30] sm:$0xf]
      %v4614 = vld [vmem:[%s4600 + $0x34] sm:$0xf]
      %v4615 = vld [vmem:[%s4600 + $0x38] sm:$0xf]
      %v4616 = vld [vmem:[%s4600 + $0x3c] sm:$0xf]
      %v4649 = vunpack.c.l.b16 %v3951
      %v4650 = vunpack.c.l.b16 %v3952
      %v4651 = vunpack.c.l.b16 %v3954
      %v4652 = vunpack.c.l.b16 %v3955
      %v4653 = vunpack.c.l.b16 %v3957
      %v4654 = vunpack.c.l.b16 %v3958
      %v4655 = vunpack.c.l.b16 %v3960
      %v4656 = vunpack.c.l.b16 %v3961
      %v4657 = vunpack.c.l.b16 %v3963
      %v4658 = vunpack.c.l.b16 %v3964
      %v4659 = vunpack.c.l.b16 %v3966
      %v4660 = vunpack.c.l.b16 %v3967
      %v4661 = vunpack.c.l.b16 %v3969
      %v4662 = vunpack.c.l.b16 %v3970
      %v4663 = vunpack.c.l.b16 %v3972
      %v4664 = vunpack.c.l.b16 %v3973
      %v4665 = vunpack.c.l.b16 %v3975
      %v4666 = vunpack.c.l.b16 %v3976
      %v4667 = vunpack.c.l.b16 %v3978
      %v4668 = vunpack.c.l.b16 %v3979
      %v4669 = vunpack.c.l.b16 %v3981
      %v4670 = vunpack.c.l.b16 %v3982
      %v4671 = vunpack.c.l.b16 %v3984
      %v4672 = vunpack.c.l.b16 %v3985
      %v4673 = vunpack.c.l.b16 %v3987
      %v4674 = vunpack.c.l.b16 %v3988
      %v4675 = vunpack.c.l.b16 %v3990
      %v4676 = vunpack.c.l.b16 %v3991
      %v4677 = vunpack.c.l.b16 %v3993
      %v4678 = vunpack.c.l.b16 %v3994
      %v4679 = vunpack.c.l.b16 %v3996
      %v4680 = vunpack.c.l.b16 %v3997
      %v4681 = vpack.c.b16 %v4650, %v4649
      %v4682 = vpack.c.b16 %v4652, %v4651
      %v4683 = vpack.c.b16 %v4654, %v4653
      %v4684 = vpack.c.b16 %v4656, %v4655
      %v4685 = vpack.c.b16 %v4658, %v4657
      %v4686 = vpack.c.b16 %v4660, %v4659
      %v4687 = vpack.c.b16 %v4662, %v4661
      %v4688 = vpack.c.b16 %v4664, %v4663
      %v4689 = vpack.c.b16 %v4666, %v4665
      %v4690 = vpack.c.b16 %v4668, %v4667
      %v4691 = vpack.c.b16 %v4670, %v4669
      %v4692 = vpack.c.b16 %v4672, %v4671
      %v4693 = vpack.c.b16 %v4674, %v4673
      %v4694 = vpack.c.b16 %v4676, %v4675
      %v4695 = vpack.c.b16 %v4678, %v4677
      %v4696 = vpack.c.b16 %v4680, %v4679
      %v4729 = vunpack.c.l.b16 %v4601
      %v4730 = vunpack.c.l.b16 %v4602
      %v4731 = vunpack.c.l.b16 %v4603
      %v4732 = vunpack.c.l.b16 %v4604
      %v4733 = vunpack.c.l.b16 %v4605
      %v4734 = vunpack.c.l.b16 %v4606
      %v4735 = vunpack.c.l.b16 %v4607
      %v4736 = vunpack.c.l.b16 %v4608
      %v4737 = vunpack.c.l.b16 %v4609
      %v4738 = vunpack.c.l.b16 %v4610
      %v4739 = vunpack.c.l.b16 %v4611
      %v4740 = vunpack.c.l.b16 %v4612
      %v4741 = vunpack.c.l.b16 %v4613
      %v4742 = vunpack.c.l.b16 %v4614
      %v4743 = vunpack.c.l.b16 %v4615
      %v4744 = vunpack.c.l.b16 %v4616
      %v4745 = vpack.c.b16 %v4730, %v4729
      %v4746 = vpack.c.b16 %v4732, %v4731
      %v4747 = vpack.c.b16 %v4734, %v4733
      %v4748 = vpack.c.b16 %v4736, %v4735
      %v4749 = vpack.c.b16 %v4738, %v4737
      %v4750 = vpack.c.b16 %v4740, %v4739
      %v4751 = vpack.c.b16 %v4742, %v4741
      %v4752 = vpack.c.b16 %v4744, %v4743
      %4761 = vmatpush.bf16.msra.mxu0 %v4752
      %4762 = vmatpush.bf16.msra.mxu0 %v4751
      %4763 = vmatpush.bf16.msra.mxu0 %v4750
      %4764 = vmatpush.bf16.msra.mxu0 %v4749
      %4765 = vmatpush.bf16.msra.mxu0 %v4748
      %4766 = vmatpush.bf16.msra.mxu0 %v4747
      %4767 = vmatpush.bf16.msra.mxu0 %v4746
      %4768 = vmatpush.bf16.msra.mxu0 %v4745
      %4769 = vmatmul.bf16.gmra.mxu0 %v4681
      %v4770 = vpop.f32.mrf.mxu0
      %v4771 = vadd.f32 0.0, %v4770
      %v4772 = vpop.f32.mrf.mxu0
      %v4773 = vadd.f32 0.0, %v4772
      %4774 = vmatmul.bf16.gmra.mxu0 %v4682
      %v4775 = vpop.f32.mrf.mxu0
      %v4776 = vadd.f32 0.0, %v4775
      %v4777 = vpop.f32.mrf.mxu0
      %v4778 = vadd.f32 0.0, %v4777
      %4779 = vmatmul.bf16.gmra.mxu0 %v4683
      %v4780 = vpop.f32.mrf.mxu0
      %v4781 = vadd.f32 0.0, %v4780
      %v4782 = vpop.f32.mrf.mxu0
      %v4783 = vadd.f32 0.0, %v4782
      %4784 = vmatmul.bf16.gmra.mxu0 %v4684
      %v4785 = vpop.f32.mrf.mxu0
      %v4786 = vadd.f32 0.0, %v4785
      %v4787 = vpop.f32.mrf.mxu0
      %v4788 = vadd.f32 0.0, %v4787
      %4789 = vmatmul.bf16.gmra.mxu0 %v4685
      %v4790 = vpop.f32.mrf.mxu0
      %v4791 = vadd.f32 0.0, %v4790
      %v4792 = vpop.f32.mrf.mxu0
      %v4793 = vadd.f32 0.0, %v4792
      %4794 = vmatmul.bf16.gmra.mxu0 %v4686
      %v4795 = vpop.f32.mrf.mxu0
      %v4796 = vadd.f32 0.0, %v4795
      %v4797 = vpop.f32.mrf.mxu0
      %v4798 = vadd.f32 0.0, %v4797
      %4799 = vmatmul.bf16.gmra.mxu0 %v4687
      %v4800 = vpop.f32.mrf.mxu0
      %v4801 = vadd.f32 0.0, %v4800
      %v4802 = vpop.f32.mrf.mxu0
      %v4803 = vadd.f32 0.0, %v4802
      %4804 = vmatmul.bf16.gmra.mxu0 %v4688
      %v4805 = vpop.f32.mrf.mxu0
      %v4806 = vadd.f32 0.0, %v4805
      %v4807 = vpop.f32.mrf.mxu0
      %v4808 = vadd.f32 0.0, %v4807
      %4809 = vmatmul.bf16.gmra.mxu0 %v4689
      %v4810 = vpop.f32.mrf.mxu0
      %v4811 = vadd.f32 0.0, %v4810
      %v4812 = vpop.f32.mrf.mxu0
      %v4813 = vadd.f32 0.0, %v4812
      %4814 = vmatmul.bf16.gmra.mxu0 %v4690
      %v4815 = vpop.f32.mrf.mxu0
      %v4816 = vadd.f32 0.0, %v4815
      %v4817 = vpop.f32.mrf.mxu0
      %v4818 = vadd.f32 0.0, %v4817
      %4819 = vmatmul.bf16.gmra.mxu0 %v4691
      %v4820 = vpop.f32.mrf.mxu0
      %v4821 = vadd.f32 0.0, %v4820
      %v4822 = vpop.f32.mrf.mxu0
      %v4823 = vadd.f32 0.0, %v4822
      %4824 = vmatmul.bf16.gmra.mxu0 %v4692
      %v4825 = vpop.f32.mrf.mxu0
      %v4826 = vadd.f32 0.0, %v4825
      %v4827 = vpop.f32.mrf.mxu0
      %v4828 = vadd.f32 0.0, %v4827
      %4829 = vmatmul.bf16.gmra.mxu0 %v4693
      %v4830 = vpop.f32.mrf.mxu0
      %v4831 = vadd.f32 0.0, %v4830
      %v4832 = vpop.f32.mrf.mxu0
      %v4833 = vadd.f32 0.0, %v4832
      %4834 = vmatmul.bf16.gmra.mxu0 %v4694
      %v4835 = vpop.f32.mrf.mxu0
      %v4836 = vadd.f32 0.0, %v4835
      %v4837 = vpop.f32.mrf.mxu0
      %v4838 = vadd.f32 0.0, %v4837
      %4839 = vmatmul.bf16.gmra.mxu0 %v4695
      %v4840 = vpop.f32.mrf.mxu0
      %v4841 = vadd.f32 0.0, %v4840
      %v4842 = vpop.f32.mrf.mxu0
      %v4843 = vadd.f32 0.0, %v4842
      %4844 = vmatmul.bf16.gmra.mxu0 %v4696
      %v4845 = vpop.f32.mrf.mxu0
      %v4846 = vadd.f32 0.0, %v4845
      %v4847 = vpop.f32.mrf.mxu0
      %v4848 = vadd.f32 0.0, %v4847
      %4849 = vdwg.mxu0
      %v4850 = vadd.f32 %v4568, %v4771
      %v4851 = vadd.f32 %v4569, %v4773
      %v4852 = vadd.f32 %v4570, %v4776
      %v4853 = vadd.f32 %v4571, %v4778
      %v4854 = vadd.f32 %v4572, %v4781
      %v4855 = vadd.f32 %v4573, %v4783
      %v4856 = vadd.f32 %v4574, %v4786
      %v4857 = vadd.f32 %v4575, %v4788
      %v4858 = vadd.f32 %v4576, %v4791
      %v4859 = vadd.f32 %v4577, %v4793
      %v4860 = vadd.f32 %v4578, %v4796
      %v4861 = vadd.f32 %v4579, %v4798
      %v4862 = vadd.f32 %v4580, %v4801
      %v4863 = vadd.f32 %v4581, %v4803
      %v4864 = vadd.f32 %v4582, %v4806
      %v4865 = vadd.f32 %v4583, %v4808
      %v4866 = vadd.f32 %v4584, %v4811
      %v4867 = vadd.f32 %v4585, %v4813
      %v4868 = vadd.f32 %v4586, %v4816
      %v4869 = vadd.f32 %v4587, %v4818
      %v4870 = vadd.f32 %v4588, %v4821
      %v4871 = vadd.f32 %v4589, %v4823
      %v4872 = vadd.f32 %v4590, %v4826
      %v4873 = vadd.f32 %v4591, %v4828
      %v4874 = vadd.f32 %v4592, %v4831
      %v4875 = vadd.f32 %v4593, %v4833
      %v4876 = vadd.f32 %v4594, %v4836
      %v4877 = vadd.f32 %v4595, %v4838
      %v4878 = vadd.f32 %v4596, %v4841
      %v4879 = vadd.f32 %v4597, %v4843
      %v4880 = vadd.f32 %v4598, %v4846
      %v4881 = vadd.f32 %v4599, %v4848
      %v4882 = vld [vmem:[%s3949 + $0x4] sm:$0xf]
      %v4883 = vld [vmem:[%s3949 + $0x8] sm:$0xf]
      %v4884 = vld [vmem:[%s3949 + $0xc] sm:$0x1]
      %v4885 = vld [vmem:[%s3949 + $0x14] sm:$0xf]
      %v4886 = vld [vmem:[%s3949 + $0x18] sm:$0xf]
      %v4887 = vld [vmem:[%s3949 + $0x1c] sm:$0x1]
      %v4888 = vld [vmem:[%s3949 + $0x24] sm:$0xf]
      %v4889 = vld [vmem:[%s3949 + $0x28] sm:$0xf]
      %v4890 = vld [vmem:[%s3949 + $0x2c] sm:$0x1]
      %v4891 = vld [vmem:[%s3949 + $0x34] sm:$0xf]
      %v4892 = vld [vmem:[%s3949 + $0x38] sm:$0xf]
      %v4893 = vld [vmem:[%s3949 + $0x3c] sm:$0x1]
      %v4894 = vld [vmem:[%s3949 + $0x44] sm:$0xf]
      %v4895 = vld [vmem:[%s3949 + $0x48] sm:$0xf]
      %v4896 = vld [vmem:[%s3949 + $0x4c] sm:$0x1]
      %v4897 = vld [vmem:[%s3949 + $0x54] sm:$0xf]
      %v4898 = vld [vmem:[%s3949 + $0x58] sm:$0xf]
      %v4899 = vld [vmem:[%s3949 + $0x5c] sm:$0x1]
      %v4900 = vld [vmem:[%s3949 + $0x64] sm:$0xf]
      %v4901 = vld [vmem:[%s3949 + $0x68] sm:$0xf]
      %v4902 = vld [vmem:[%s3949 + $0x6c] sm:$0x1]
      %v4903 = vld [vmem:[%s3949 + $0x74] sm:$0xf]
      %v4904 = vld [vmem:[%s3949 + $0x78] sm:$0xf]
      %v4905 = vld [vmem:[%s3949 + $0x7c] sm:$0x1]
      %v4906 = vld [vmem:[%s3949 + $0x84] sm:$0xf]
      %v4907 = vld [vmem:[%s3949 + $0x88] sm:$0xf]
      %v4908 = vld [vmem:[%s3949 + $0x8c] sm:$0x1]
      %v4909 = vld [vmem:[%s3949 + $0x94] sm:$0xf]
      %v4910 = vld [vmem:[%s3949 + $0x98] sm:$0xf]
      %v4911 = vld [vmem:[%s3949 + $0x9c] sm:$0x1]
      %v4912 = vld [vmem:[%s3949 + $0xa4] sm:$0xf]
      %v4913 = vld [vmem:[%s3949 + $0xa8] sm:$0xf]
      %v4914 = vld [vmem:[%s3949 + $0xac] sm:$0x1]
      %v4915 = vld [vmem:[%s3949 + $0xb4] sm:$0xf]
      %v4916 = vld [vmem:[%s3949 + $0xb8] sm:$0xf]
      %v4917 = vld [vmem:[%s3949 + $0xbc] sm:$0x1]
      %v4918 = vld [vmem:[%s3949 + $0xc4] sm:$0xf]
      %v4919 = vld [vmem:[%s3949 + $0xc8] sm:$0xf]
      %v4920 = vld [vmem:[%s3949 + $0xcc] sm:$0x1]
      %v4921 = vld [vmem:[%s3949 + $0xd4] sm:$0xf]
      %v4922 = vld [vmem:[%s3949 + $0xd8] sm:$0xf]
      %v4923 = vld [vmem:[%s3949 + $0xdc] sm:$0x1]
      %v4924 = vld [vmem:[%s3949 + $0xe4] sm:$0xf]
      %v4925 = vld [vmem:[%s3949 + $0xe8] sm:$0xf]
      %v4926 = vld [vmem:[%s3949 + $0xec] sm:$0x1]
      %v4927 = vld [vmem:[%s3949 + $0xf4] sm:$0xf]
      %v4928 = vld [vmem:[%s3949 + $0xf8] sm:$0xf]
      %v4929 = vld [vmem:[%s3949 + $0xfc] sm:$0x1]
      %v4931 = vshrl.u32 %v4882, 16
      %v4933 = vrot.slane %v4931, 4
      %v4934 = vshll.u32 %v4882, 16
      %v4936 = vrot.slane %v4934, 5
      %v4937 = vor.u32 %v4933, %v4936
      %v4938 = vrot.slane %v4937, 4
      %v4940 = vshll.u32 %v4883, 16
      %v4942 = vrot.slane %v4940, 5
      %v4943 = vsel %vm1700, %v4938, %v4942
      %v4944 = vshrl.u32 %v4883, 16
      %v4946 = vrot.slane %v4944, 4
      %v4947 = vor.u32 %v4946, %v4942
      %v4948 = vrot.slane %v4947, 4
      %v4950 = vshll.u32 %v4884, 16
      %v4952 = vrot.slane %v4950, 5
      %v4953 = vsel %vm1700, %v4948, %v4952
      %v4955 = vshrl.u32 %v4885, 16
      %v4957 = vrot.slane %v4955, 4
      %v4958 = vshll.u32 %v4885, 16
      %v4960 = vrot.slane %v4958, 5
      %v4961 = vor.u32 %v4957, %v4960
      %v4962 = vrot.slane %v4961, 4
      %v4964 = vshll.u32 %v4886, 16
      %v4966 = vrot.slane %v4964, 5
      %v4967 = vsel %vm1700, %v4962, %v4966
      %v4968 = vshrl.u32 %v4886, 16
      %v4970 = vrot.slane %v4968, 4
      %v4971 = vor.u32 %v4970, %v4966
      %v4972 = vrot.slane %v4971, 4
      %v4974 = vshll.u32 %v4887, 16
      %v4976 = vrot.slane %v4974, 5
      %v4977 = vsel %vm1700, %v4972, %v4976
      %v4979 = vshrl.u32 %v4888, 16
      %v4981 = vrot.slane %v4979, 4
      %v4982 = vshll.u32 %v4888, 16
      %v4984 = vrot.slane %v4982, 5
      %v4985 = vor.u32 %v4981, %v4984
      %v4986 = vrot.slane %v4985, 4
      %v4988 = vshll.u32 %v4889, 16
      %v4990 = vrot.slane %v4988, 5
      %v4991 = vsel %vm1700, %v4986, %v4990
      %v4992 = vshrl.u32 %v4889, 16
      %v4994 = vrot.slane %v4992, 4
      %v4995 = vor.u32 %v4994, %v4990
      %v4996 = vrot.slane %v4995, 4
      %v4998 = vshll.u32 %v4890, 16
      %v5000 = vrot.slane %v4998, 5
      %v5001 = vsel %vm1700, %v4996, %v5000
      %v5003 = vshrl.u32 %v4891, 16
      %v5005 = vrot.slane %v5003, 4
      %v5006 = vshll.u32 %v4891, 16
      %v5008 = vrot.slane %v5006, 5
      %v5009 = vor.u32 %v5005, %v5008
      %v5010 = vrot.slane %v5009, 4
      %v5012 = vshll.u32 %v4892, 16
      %v5014 = vrot.slane %v5012, 5
      %v5015 = vsel %vm1700, %v5010, %v5014
      %v5016 = vshrl.u32 %v4892, 16
      %v5018 = vrot.slane %v5016, 4
      %v5019 = vor.u32 %v5018, %v5014
      %v5020 = vrot.slane %v5019, 4
      %v5022 = vshll.u32 %v4893, 16
      %v5024 = vrot.slane %v5022, 5
      %v5025 = vsel %vm1700, %v5020, %v5024
      %v5027 = vshrl.u32 %v4894, 16
      %v5029 = vrot.slane %v5027, 4
      %v5030 = vshll.u32 %v4894, 16
      %v5032 = vrot.slane %v5030, 5
      %v5033 = vor.u32 %v5029, %v5032
      %v5034 = vrot.slane %v5033, 4
      %v5036 = vshll.u32 %v4895, 16
      %v5038 = vrot.slane %v5036, 5
      %v5039 = vsel %vm1700, %v5034, %v5038
      %v5040 = vshrl.u32 %v4895, 16
      %v5042 = vrot.slane %v5040, 4
      %v5043 = vor.u32 %v5042, %v5038
      %v5044 = vrot.slane %v5043, 4
      %v5046 = vshll.u32 %v4896, 16
      %v5048 = vrot.slane %v5046, 5
      %v5049 = vsel %vm1700, %v5044, %v5048
      %v5051 = vshrl.u32 %v4897, 16
      %v5053 = vrot.slane %v5051, 4
      %v5054 = vshll.u32 %v4897, 16
      %v5056 = vrot.slane %v5054, 5
      %v5057 = vor.u32 %v5053, %v5056
      %v5058 = vrot.slane %v5057, 4
      %v5060 = vshll.u32 %v4898, 16
      %v5062 = vrot.slane %v5060, 5
      %v5063 = vsel %vm1700, %v5058, %v5062
      %v5064 = vshrl.u32 %v4898, 16
      %v5066 = vrot.slane %v5064, 4
      %v5067 = vor.u32 %v5066, %v5062
      %v5068 = vrot.slane %v5067, 4
      %v5070 = vshll.u32 %v4899, 16
      %v5072 = vrot.slane %v5070, 5
      %v5073 = vsel %vm1700, %v5068, %v5072
      %v5075 = vshrl.u32 %v4900, 16
      %v5077 = vrot.slane %v5075, 4
      %v5078 = vshll.u32 %v4900, 16
      %v5080 = vrot.slane %v5078, 5
      %v5081 = vor.u32 %v5077, %v5080
      %v5082 = vrot.slane %v5081, 4
      %v5084 = vshll.u32 %v4901, 16
      %v5086 = vrot.slane %v5084, 5
      %v5087 = vsel %vm1700, %v5082, %v5086
      %v5088 = vshrl.u32 %v4901, 16
      %v5090 = vrot.slane %v5088, 4
      %v5091 = vor.u32 %v5090, %v5086
      %v5092 = vrot.slane %v5091, 4
      %v5094 = vshll.u32 %v4902, 16
      %v5096 = vrot.slane %v5094, 5
      %v5097 = vsel %vm1700, %v5092, %v5096
      %v5099 = vshrl.u32 %v4903, 16
      %v5101 = vrot.slane %v5099, 4
      %v5102 = vshll.u32 %v4903, 16
      %v5104 = vrot.slane %v5102, 5
      %v5105 = vor.u32 %v5101, %v5104
      %v5106 = vrot.slane %v5105, 4
      %v5108 = vshll.u32 %v4904, 16
      %v5110 = vrot.slane %v5108, 5
      %v5111 = vsel %vm1700, %v5106, %v5110
      %v5112 = vshrl.u32 %v4904, 16
      %v5114 = vrot.slane %v5112, 4
      %v5115 = vor.u32 %v5114, %v5110
      %v5116 = vrot.slane %v5115, 4
      %v5118 = vshll.u32 %v4905, 16
      %v5120 = vrot.slane %v5118, 5
      %v5121 = vsel %vm1700, %v5116, %v5120
      %v5123 = vshrl.u32 %v4906, 16
      %v5125 = vrot.slane %v5123, 4
      %v5126 = vshll.u32 %v4906, 16
      %v5128 = vrot.slane %v5126, 5
      %v5129 = vor.u32 %v5125, %v5128
      %v5130 = vrot.slane %v5129, 4
      %v5132 = vshll.u32 %v4907, 16
      %v5134 = vrot.slane %v5132, 5
      %v5135 = vsel %vm1700, %v5130, %v5134
      %v5136 = vshrl.u32 %v4907, 16
      %v5138 = vrot.slane %v5136, 4
      %v5139 = vor.u32 %v5138, %v5134
      %v5140 = vrot.slane %v5139, 4
      %v5142 = vshll.u32 %v4908, 16
      %v5144 = vrot.slane %v5142, 5
      %v5145 = vsel %vm1700, %v5140, %v5144
      %v5147 = vshrl.u32 %v4909, 16
      %v5149 = vrot.slane %v5147, 4
      %v5150 = vshll.u32 %v4909, 16
      %v5152 = vrot.slane %v5150, 5
      %v5153 = vor.u32 %v5149, %v5152
      %v5154 = vrot.slane %v5153, 4
      %v5156 = vshll.u32 %v4910, 16
      %v5158 = vrot.slane %v5156, 5
      %v5159 = vsel %vm1700, %v5154, %v5158
      %v5160 = vshrl.u32 %v4910, 16
      %v5162 = vrot.slane %v5160, 4
      %v5163 = vor.u32 %v5162, %v5158
      %v5164 = vrot.slane %v5163, 4
      %v5166 = vshll.u32 %v4911, 16
      %v5168 = vrot.slane %v5166, 5
      %v5169 = vsel %vm1700, %v5164, %v5168
      %v5171 = vshrl.u32 %v4912, 16
      %v5173 = vrot.slane %v5171, 4
      %v5174 = vshll.u32 %v4912, 16
      %v5176 = vrot.slane %v5174, 5
      %v5177 = vor.u32 %v5173, %v5176
      %v5178 = vrot.slane %v5177, 4
      %v5180 = vshll.u32 %v4913, 16
      %v5182 = vrot.slane %v5180, 5
      %v5183 = vsel %vm1700, %v5178, %v5182
      %v5184 = vshrl.u32 %v4913, 16
      %v5186 = vrot.slane %v5184, 4
      %v5187 = vor.u32 %v5186, %v5182
      %v5188 = vrot.slane %v5187, 4
      %v5190 = vshll.u32 %v4914, 16
      %v5192 = vrot.slane %v5190, 5
      %v5193 = vsel %vm1700, %v5188, %v5192
      %v5195 = vshrl.u32 %v4915, 16
      %v5197 = vrot.slane %v5195, 4
      %v5198 = vshll.u32 %v4915, 16
      %v5200 = vrot.slane %v5198, 5
      %v5201 = vor.u32 %v5197, %v5200
      %v5202 = vrot.slane %v5201, 4
      %v5204 = vshll.u32 %v4916, 16
      %v5206 = vrot.slane %v5204, 5
      %v5207 = vsel %vm1700, %v5202, %v5206
      %v5208 = vshrl.u32 %v4916, 16
      %v5210 = vrot.slane %v5208, 4
      %v5211 = vor.u32 %v5210, %v5206
      %v5212 = vrot.slane %v5211, 4
      %v5214 = vshll.u32 %v4917, 16
      %v5216 = vrot.slane %v5214, 5
      %v5217 = vsel %vm1700, %v5212, %v5216
      %v5219 = vshrl.u32 %v4918, 16
      %v5221 = vrot.slane %v5219, 4
      %v5222 = vshll.u32 %v4918, 16
      %v5224 = vrot.slane %v5222, 5
      %v5225 = vor.u32 %v5221, %v5224
      %v5226 = vrot.slane %v5225, 4
      %v5228 = vshll.u32 %v4919, 16
      %v5230 = vrot.slane %v5228, 5
      %v5231 = vsel %vm1700, %v5226, %v5230
      %v5232 = vshrl.u32 %v4919, 16
      %v5234 = vrot.slane %v5232, 4
      %v5235 = vor.u32 %v5234, %v5230
      %v5236 = vrot.slane %v5235, 4
      %v5238 = vshll.u32 %v4920, 16
      %v5240 = vrot.slane %v5238, 5
      %v5241 = vsel %vm1700, %v5236, %v5240
      %v5243 = vshrl.u32 %v4921, 16
      %v5245 = vrot.slane %v5243, 4
      %v5246 = vshll.u32 %v4921, 16
      %v5248 = vrot.slane %v5246, 5
      %v5249 = vor.u32 %v5245, %v5248
      %v5250 = vrot.slane %v5249, 4
      %v5252 = vshll.u32 %v4922, 16
      %v5254 = vrot.slane %v5252, 5
      %v5255 = vsel %vm1700, %v5250, %v5254
      %v5256 = vshrl.u32 %v4922, 16
      %v5258 = vrot.slane %v5256, 4
      %v5259 = vor.u32 %v5258, %v5254
      %v5260 = vrot.slane %v5259, 4
      %v5262 = vshll.u32 %v4923, 16
      %v5264 = vrot.slane %v5262, 5
      %v5265 = vsel %vm1700, %v5260, %v5264
      %v5267 = vshrl.u32 %v4924, 16
      %v5269 = vrot.slane %v5267, 4
      %v5270 = vshll.u32 %v4924, 16
      %v5272 = vrot.slane %v5270, 5
      %v5273 = vor.u32 %v5269, %v5272
      %v5274 = vrot.slane %v5273, 4
      %v5276 = vshll.u32 %v4925, 16
      %v5278 = vrot.slane %v5276, 5
      %v5279 = vsel %vm1700, %v5274, %v5278
      %v5280 = vshrl.u32 %v4925, 16
      %v5282 = vrot.slane %v5280, 4
      %v5283 = vor.u32 %v5282, %v5278
      %v5284 = vrot.slane %v5283, 4
      %v5286 = vshll.u32 %v4926, 16
      %v5288 = vrot.slane %v5286, 5
      %v5289 = vsel %vm1700, %v5284, %v5288
      %v5291 = vshrl.u32 %v4927, 16
      %v5293 = vrot.slane %v5291, 4
      %v5294 = vshll.u32 %v4927, 16
      %v5296 = vrot.slane %v5294, 5
      %v5297 = vor.u32 %v5293, %v5296
      %v5298 = vrot.slane %v5297, 4
      %v5300 = vshll.u32 %v4928, 16
      %v5302 = vrot.slane %v5300, 5
      %v5303 = vsel %vm1700, %v5298, %v5302
      %v5304 = vshrl.u32 %v4928, 16
      %v5306 = vrot.slane %v5304, 4
      %v5307 = vor.u32 %v5306, %v5302
      %v5308 = vrot.slane %v5307, 4
      %v5310 = vshll.u32 %v4929, 16
      %v5312 = vrot.slane %v5310, 5
      %v5313 = vsel %vm1700, %v5308, %v5312
      %s5314 = scalar_lea.vmem %s3, 512
      %v5315 = vld [vmem:[%s5314] sm:$0xf]
      %v5316 = vld [vmem:[%s5314 + $0x4] sm:$0xf]
      %v5317 = vld [vmem:[%s5314 + $0x8] sm:$0xf]
      %v5318 = vld [vmem:[%s5314 + $0xc] sm:$0xf]
      %v5319 = vld [vmem:[%s5314 + $0x10] sm:$0xf]
      %v5320 = vld [vmem:[%s5314 + $0x14] sm:$0xf]
      %v5321 = vld [vmem:[%s5314 + $0x18] sm:$0xf]
      %v5322 = vld [vmem:[%s5314 + $0x1c] sm:$0xf]
      %v5323 = vld [vmem:[%s5314 + $0x20] sm:$0xf]
      %v5324 = vld [vmem:[%s5314 + $0x24] sm:$0xf]
      %v5325 = vld [vmem:[%s5314 + $0x28] sm:$0xf]
      %v5326 = vld [vmem:[%s5314 + $0x2c] sm:$0xf]
      %v5327 = vld [vmem:[%s5314 + $0x30] sm:$0xf]
      %v5328 = vld [vmem:[%s5314 + $0x34] sm:$0xf]
      %v5329 = vld [vmem:[%s5314 + $0x38] sm:$0xf]
      %v5330 = vld [vmem:[%s5314 + $0x3c] sm:$0xf]
      %v5331 = vunpack.c.l.b16 %v4943
      %v5332 = vunpack.c.l.b16 %v4953
      %v5333 = vunpack.c.l.b16 %v4967
      %v5334 = vunpack.c.l.b16 %v4977
      %v5335 = vunpack.c.l.b16 %v4991
      %v5336 = vunpack.c.l.b16 %v5001
      %v5337 = vunpack.c.l.b16 %v5015
      %v5338 = vunpack.c.l.b16 %v5025
      %v5339 = vunpack.c.l.b16 %v5039
      %v5340 = vunpack.c.l.b16 %v5049
      %v5341 = vunpack.c.l.b16 %v5063
      %v5342 = vunpack.c.l.b16 %v5073
      %v5343 = vunpack.c.l.b16 %v5087
      %v5344 = vunpack.c.l.b16 %v5097
      %v5345 = vunpack.c.l.b16 %v5111
      %v5346 = vunpack.c.l.b16 %v5121
      %v5347 = vunpack.c.l.b16 %v5135
      %v5348 = vunpack.c.l.b16 %v5145
      %v5349 = vunpack.c.l.b16 %v5159
      %v5350 = vunpack.c.l.b16 %v5169
      %v5351 = vunpack.c.l.b16 %v5183
      %v5352 = vunpack.c.l.b16 %v5193
      %v5353 = vunpack.c.l.b16 %v5207
      %v5354 = vunpack.c.l.b16 %v5217
      %v5355 = vunpack.c.l.b16 %v5231
      %v5356 = vunpack.c.l.b16 %v5241
      %v5357 = vunpack.c.l.b16 %v5255
      %v5358 = vunpack.c.l.b16 %v5265
      %v5359 = vunpack.c.l.b16 %v5279
      %v5360 = vunpack.c.l.b16 %v5289
      %v5361 = vunpack.c.l.b16 %v5303
      %v5362 = vunpack.c.l.b16 %v5313
      %v5363 = vpack.c.b16 %v5332, %v5331
      %v5364 = vpack.c.b16 %v5334, %v5333
      %v5365 = vpack.c.b16 %v5336, %v5335
      %v5366 = vpack.c.b16 %v5338, %v5337
      %v5367 = vpack.c.b16 %v5340, %v5339
      %v5368 = vpack.c.b16 %v5342, %v5341
      %v5369 = vpack.c.b16 %v5344, %v5343
      %v5370 = vpack.c.b16 %v5346, %v5345
      %v5371 = vpack.c.b16 %v5348, %v5347
      %v5372 = vpack.c.b16 %v5350, %v5349
      %v5373 = vpack.c.b16 %v5352, %v5351
      %v5374 = vpack.c.b16 %v5354, %v5353
      %v5375 = vpack.c.b16 %v5356, %v5355
      %v5376 = vpack.c.b16 %v5358, %v5357
      %v5377 = vpack.c.b16 %v5360, %v5359
      %v5378 = vpack.c.b16 %v5362, %v5361
      %v5411 = vunpack.c.l.b16 %v5315
      %v5412 = vunpack.c.l.b16 %v5316
      %v5413 = vunpack.c.l.b16 %v5317
      %v5414 = vunpack.c.l.b16 %v5318
      %v5415 = vunpack.c.l.b16 %v5319
      %v5416 = vunpack.c.l.b16 %v5320
      %v5417 = vunpack.c.l.b16 %v5321
      %v5418 = vunpack.c.l.b16 %v5322
      %v5419 = vunpack.c.l.b16 %v5323
      %v5420 = vunpack.c.l.b16 %v5324
      %v5421 = vunpack.c.l.b16 %v5325
      %v5422 = vunpack.c.l.b16 %v5326
      %v5423 = vunpack.c.l.b16 %v5327
      %v5424 = vunpack.c.l.b16 %v5328
      %v5425 = vunpack.c.l.b16 %v5329
      %v5426 = vunpack.c.l.b16 %v5330
      %v5427 = vpack.c.b16 %v5412, %v5411
      %v5428 = vpack.c.b16 %v5414, %v5413
      %v5429 = vpack.c.b16 %v5416, %v5415
      %v5430 = vpack.c.b16 %v5418, %v5417
      %v5431 = vpack.c.b16 %v5420, %v5419
      %v5432 = vpack.c.b16 %v5422, %v5421
      %v5433 = vpack.c.b16 %v5424, %v5423
      %v5434 = vpack.c.b16 %v5426, %v5425
      %5443 = vmatpush.bf16.msra.mxu0 %v5434
      %5444 = vmatpush.bf16.msra.mxu0 %v5433
      %5445 = vmatpush.bf16.msra.mxu0 %v5432
      %5446 = vmatpush.bf16.msra.mxu0 %v5431
      %5447 = vmatpush.bf16.msra.mxu0 %v5430
      %5448 = vmatpush.bf16.msra.mxu0 %v5429
      %5449 = vmatpush.bf16.msra.mxu0 %v5428
      %5450 = vmatpush.bf16.msra.mxu0 %v5427
      %5451 = vmatmul.bf16.gmra.mxu0 %v5363
      %v5452 = vpop.f32.mrf.mxu0
      %v5453 = vadd.f32 0.0, %v5452
      %v5454 = vpop.f32.mrf.mxu0
      %v5455 = vadd.f32 0.0, %v5454
      %5456 = vmatmul.bf16.gmra.mxu0 %v5364
      %v5457 = vpop.f32.mrf.mxu0
      %v5458 = vadd.f32 0.0, %v5457
      %v5459 = vpop.f32.mrf.mxu0
      %v5460 = vadd.f32 0.0, %v5459
      %5461 = vmatmul.bf16.gmra.mxu0 %v5365
      %v5462 = vpop.f32.mrf.mxu0
      %v5463 = vadd.f32 0.0, %v5462
      %v5464 = vpop.f32.mrf.mxu0
      %v5465 = vadd.f32 0.0, %v5464
      %5466 = vmatmul.bf16.gmra.mxu0 %v5366
      %v5467 = vpop.f32.mrf.mxu0
      %v5468 = vadd.f32 0.0, %v5467
      %v5469 = vpop.f32.mrf.mxu0
      %v5470 = vadd.f32 0.0, %v5469
      %5471 = vmatmul.bf16.gmra.mxu0 %v5367
      %v5472 = vpop.f32.mrf.mxu0
      %v5473 = vadd.f32 0.0, %v5472
      %v5474 = vpop.f32.mrf.mxu0
      %v5475 = vadd.f32 0.0, %v5474
      %5476 = vmatmul.bf16.gmra.mxu0 %v5368
      %v5477 = vpop.f32.mrf.mxu0
      %v5478 = vadd.f32 0.0, %v5477
      %v5479 = vpop.f32.mrf.mxu0
      %v5480 = vadd.f32 0.0, %v5479
      %5481 = vmatmul.bf16.gmra.mxu0 %v5369
      %v5482 = vpop.f32.mrf.mxu0
      %v5483 = vadd.f32 0.0, %v5482
      %v5484 = vpop.f32.mrf.mxu0
      %v5485 = vadd.f32 0.0, %v5484
      %5486 = vmatmul.bf16.gmra.mxu0 %v5370
      %v5487 = vpop.f32.mrf.mxu0
      %v5488 = vadd.f32 0.0, %v5487
      %v5489 = vpop.f32.mrf.mxu0
      %v5490 = vadd.f32 0.0, %v5489
      %5491 = vmatmul.bf16.gmra.mxu0 %v5371
      %v5492 = vpop.f32.mrf.mxu0
      %v5493 = vadd.f32 0.0, %v5492
      %v5494 = vpop.f32.mrf.mxu0
      %v5495 = vadd.f32 0.0, %v5494
      %5496 = vmatmul.bf16.gmra.mxu0 %v5372
      %v5497 = vpop.f32.mrf.mxu0
      %v5498 = vadd.f32 0.0, %v5497
      %v5499 = vpop.f32.mrf.mxu0
      %v5500 = vadd.f32 0.0, %v5499
      %5501 = vmatmul.bf16.gmra.mxu0 %v5373
      %v5502 = vpop.f32.mrf.mxu0
      %v5503 = vadd.f32 0.0, %v5502
      %v5504 = vpop.f32.mrf.mxu0
      %v5505 = vadd.f32 0.0, %v5504
      %5506 = vmatmul.bf16.gmra.mxu0 %v5374
      %v5507 = vpop.f32.mrf.mxu0
      %v5508 = vadd.f32 0.0, %v5507
      %v5509 = vpop.f32.mrf.mxu0
      %v5510 = vadd.f32 0.0, %v5509
      %5511 = vmatmul.bf16.gmra.mxu0 %v5375
      %v5512 = vpop.f32.mrf.mxu0
      %v5513 = vadd.f32 0.0, %v5512
      %v5514 = vpop.f32.mrf.mxu0
      %v5515 = vadd.f32 0.0, %v5514
      %5516 = vmatmul.bf16.gmra.mxu0 %v5376
      %v5517 = vpop.f32.mrf.mxu0
      %v5518 = vadd.f32 0.0, %v5517
      %v5519 = vpop.f32.mrf.mxu0
      %v5520 = vadd.f32 0.0, %v5519
      %5521 = vmatmul.bf16.gmra.mxu0 %v5377
      %v5522 = vpop.f32.mrf.mxu0
      %v5523 = vadd.f32 0.0, %v5522
      %v5524 = vpop.f32.mrf.mxu0
      %v5525 = vadd.f32 0.0, %v5524
      %5526 = vmatmul.bf16.gmra.mxu0 %v5378
      %v5527 = vpop.f32.mrf.mxu0
      %v5528 = vadd.f32 0.0, %v5527
      %v5529 = vpop.f32.mrf.mxu0
      %v5530 = vadd.f32 0.0, %v5529
      %5531 = vdwg.mxu0
      %v5532 = vadd.f32 %v4850, %v5453
      %v5533 = vadd.f32 %v4851, %v5455
      %v5534 = vadd.f32 %v4852, %v5458
      %v5535 = vadd.f32 %v4853, %v5460
      %v5536 = vadd.f32 %v4854, %v5463
      %v5537 = vadd.f32 %v4855, %v5465
      %v5538 = vadd.f32 %v4856, %v5468
      %v5539 = vadd.f32 %v4857, %v5470
      %v5540 = vadd.f32 %v4858, %v5473
      %v5541 = vadd.f32 %v4859, %v5475
      %v5542 = vadd.f32 %v4860, %v5478
      %v5543 = vadd.f32 %v4861, %v5480
      %v5544 = vadd.f32 %v4862, %v5483
      %v5545 = vadd.f32 %v4863, %v5485
      %v5546 = vadd.f32 %v4864, %v5488
      %v5547 = vadd.f32 %v4865, %v5490
      %v5548 = vadd.f32 %v4866, %v5493
      %v5549 = vadd.f32 %v4867, %v5495
      %v5550 = vadd.f32 %v4868, %v5498
      %v5551 = vadd.f32 %v4869, %v5500
      %v5552 = vadd.f32 %v4870, %v5503
      %v5553 = vadd.f32 %v4871, %v5505
      %v5554 = vadd.f32 %v4872, %v5508
      %v5555 = vadd.f32 %v4873, %v5510
      %v5556 = vadd.f32 %v4874, %v5513
      %v5557 = vadd.f32 %v4875, %v5515
      %v5558 = vadd.f32 %v4876, %v5518
      %v5559 = vadd.f32 %v4877, %v5520
      %v5560 = vadd.f32 %v4878, %v5523
      %v5561 = vadd.f32 %v4879, %v5525
      %v5562 = vadd.f32 %v4880, %v5528
      %v5563 = vadd.f32 %v4881, %v5530
      %v5564 = vld [vmem:[%s4] sm:$0x1]
      %v5566 = vperm.slane %v5564, 0
      %v5568 = vadd.f32 %v5532, %v5566
      %v5569 = vadd.f32 %v5533, %v5566
      %v5570 = vadd.f32 %v5534, %v5566
      %v5571 = vadd.f32 %v5535, %v5566
      %v5572 = vadd.f32 %v5536, %v5566
      %v5573 = vadd.f32 %v5537, %v5566
      %v5574 = vadd.f32 %v5538, %v5566
      %v5575 = vadd.f32 %v5539, %v5566
      %v5576 = vadd.f32 %v5540, %v5566
      %v5577 = vadd.f32 %v5541, %v5566
      %v5578 = vadd.f32 %v5542, %v5566
      %v5579 = vadd.f32 %v5543, %v5566
      %v5580 = vadd.f32 %v5544, %v5566
      %v5581 = vadd.f32 %v5545, %v5566
      %v5582 = vadd.f32 %v5546, %v5566
      %v5583 = vadd.f32 %v5547, %v5566
      %v5584 = vadd.f32 %v5548, %v5566
      %v5585 = vadd.f32 %v5549, %v5566
      %v5586 = vadd.f32 %v5550, %v5566
      %v5587 = vadd.f32 %v5551, %v5566
      %v5588 = vadd.f32 %v5552, %v5566
      %v5589 = vadd.f32 %v5553, %v5566
      %v5590 = vadd.f32 %v5554, %v5566
      %v5591 = vadd.f32 %v5555, %v5566
      %v5592 = vadd.f32 %v5556, %v5566
      %v5593 = vadd.f32 %v5557, %v5566
      %v5594 = vadd.f32 %v5558, %v5566
      %v5595 = vadd.f32 %v5559, %v5566
      %v5596 = vadd.f32 %v5560, %v5566
      %v5597 = vadd.f32 %v5561, %v5566
      %v5598 = vadd.f32 %v5562, %v5566
      %v5599 = vadd.f32 %v5563, %v5566
      %v5600 = vpack.c.bf16 %v5569, %v5568
      %v5601 = vpack.c.bf16 %v5571, %v5570
      %v5602 = vpack.c.bf16 %v5573, %v5572
      %v5603 = vpack.c.bf16 %v5575, %v5574
      %v5604 = vpack.c.bf16 %v5577, %v5576
      %v5605 = vpack.c.bf16 %v5579, %v5578
      %v5606 = vpack.c.bf16 %v5581, %v5580
      %v5607 = vpack.c.bf16 %v5583, %v5582
      %v5608 = vpack.c.bf16 %v5585, %v5584
      %v5609 = vpack.c.bf16 %v5587, %v5586
      %v5610 = vpack.c.bf16 %v5589, %v5588
      %v5611 = vpack.c.bf16 %v5591, %v5590
      %v5612 = vpack.c.bf16 %v5593, %v5592
      %v5613 = vpack.c.bf16 %v5595, %v5594
      %v5614 = vpack.c.bf16 %v5597, %v5596
      %v5615 = vpack.c.bf16 %v5599, %v5598
      %v5616 = vld [vmem:[%s5] sm:$0xf]
      %v5617 = vld [vmem:[%s5 + $0x4] sm:$0xf]
      %v5618 = vld [vmem:[%s5 + $0x8] sm:$0xf]
      %v5619 = vld [vmem:[%s5 + $0xc] sm:$0xf]
      %v5620 = vld [vmem:[%s5 + $0x10] sm:$0xf]
      %v5621 = vld [vmem:[%s5 + $0x14] sm:$0xf]
      %v5622 = vld [vmem:[%s5 + $0x18] sm:$0xf]
      %v5623 = vld [vmem:[%s5 + $0x1c] sm:$0xf]
      %v5624 = vld [vmem:[%s5 + $0x20] sm:$0xf]
      %v5625 = vld [vmem:[%s5 + $0x24] sm:$0xf]
      %v5626 = vld [vmem:[%s5 + $0x28] sm:$0xf]
      %v5627 = vld [vmem:[%s5 + $0x2c] sm:$0xf]
      %v5628 = vld [vmem:[%s5 + $0x30] sm:$0xf]
      %v5629 = vld [vmem:[%s5 + $0x34] sm:$0xf]
      %v5630 = vld [vmem:[%s5 + $0x38] sm:$0xf]
      %v5631 = vld [vmem:[%s5 + $0x3c] sm:$0xf]
      %v5632 = vld [vmem:[%s6] sm:$0x1]
      %v5634 = vperm.slane %v5632, 0
      %v5652 = vunpack.c.l.b16 %v5616
      %v5653 = vunpack.c.l.b16 %v5617
      %v5654 = vunpack.c.l.b16 %v5618
      %v5655 = vunpack.c.l.b16 %v5619
      %v5656 = vunpack.c.l.b16 %v5620
      %v5657 = vunpack.c.l.b16 %v5621
      %v5658 = vunpack.c.l.b16 %v5622
      %v5659 = vunpack.c.l.b16 %v5623
      %v5660 = vunpack.c.l.b16 %v5624
      %v5661 = vunpack.c.l.b16 %v5625
      %v5662 = vunpack.c.l.b16 %v5626
      %v5663 = vunpack.c.l.b16 %v5627
      %v5664 = vunpack.c.l.b16 %v5628
      %v5665 = vunpack.c.l.b16 %v5629
      %v5666 = vunpack.c.l.b16 %v5630
      %v5667 = vunpack.c.l.b16 %v5631
      %v5668 = vpack.c.b16 %v5653, %v5652
      %v5669 = vpack.c.b16 %v5655, %v5654
      %v5670 = vpack.c.b16 %v5657, %v5656
      %v5671 = vpack.c.b16 %v5659, %v5658
      %v5672 = vpack.c.b16 %v5661, %v5660
      %v5673 = vpack.c.b16 %v5663, %v5662
      %v5674 = vpack.c.b16 %v5665, %v5664
      %v5675 = vpack.c.b16 %v5667, %v5666
      %5684 = vmatpush.bf16.msra.mxu0 %v5675
      %5685 = vmatpush.bf16.msra.mxu0 %v5674
      %5686 = vmatpush.bf16.msra.mxu0 %v5673
      %5687 = vmatpush.bf16.msra.mxu0 %v5672
      %5688 = vmatpush.bf16.msra.mxu0 %v5671
      %5689 = vmatpush.bf16.msra.mxu0 %v5670
      %5690 = vmatpush.bf16.msra.mxu0 %v5669
      %5691 = vmatpush.bf16.msra.mxu0 %v5668
      %5692 = vmatmul.bf16.gmra.mxu0 %v5600
      %v5693 = vpop.f32.mrf.mxu0
      %v5694 = vadd.f32 %v5634, %v5693
      %v5695 = vpop.f32.mrf.mxu0
      %v5696 = vadd.f32 %v5634, %v5695
      %5697 = vmatmul.bf16.gmra.mxu0 %v5601
      %v5698 = vpop.f32.mrf.mxu0
      %v5699 = vadd.f32 %v5634, %v5698
      %v5700 = vpop.f32.mrf.mxu0
      %v5701 = vadd.f32 %v5634, %v5700
      %5702 = vmatmul.bf16.gmra.mxu0 %v5602
      %v5703 = vpop.f32.mrf.mxu0
      %v5704 = vadd.f32 %v5634, %v5703
      %v5705 = vpop.f32.mrf.mxu0
      %v5706 = vadd.f32 %v5634, %v5705
      %5707 = vmatmul.bf16.gmra.mxu0 %v5603
      %v5708 = vpop.f32.mrf.mxu0
      %v5709 = vadd.f32 %v5634, %v5708
      %v5710 = vpop.f32.mrf.mxu0
      %v5711 = vadd.f32 %v5634, %v5710
      %5712 = vmatmul.bf16.gmra.mxu0 %v5604
      %v5713 = vpop.f32.mrf.mxu0
      %v5714 = vadd.f32 %v5634, %v5713
      %v5715 = vpop.f32.mrf.mxu0
      %v5716 = vadd.f32 %v5634, %v5715
      %5717 = vmatmul.bf16.gmra.mxu0 %v5605
      %v5718 = vpop.f32.mrf.mxu0
      %v5719 = vadd.f32 %v5634, %v5718
      %v5720 = vpop.f32.mrf.mxu0
      %v5721 = vadd.f32 %v5634, %v5720
      %5722 = vmatmul.bf16.gmra.mxu0 %v5606
      %v5723 = vpop.f32.mrf.mxu0
      %v5724 = vadd.f32 %v5634, %v5723
      %v5725 = vpop.f32.mrf.mxu0
      %v5726 = vadd.f32 %v5634, %v5725
      %5727 = vmatmul.bf16.gmra.mxu0 %v5607
      %v5728 = vpop.f32.mrf.mxu0
      %v5729 = vadd.f32 %v5634, %v5728
      %v5730 = vpop.f32.mrf.mxu0
      %v5731 = vadd.f32 %v5634, %v5730
      %5732 = vmatmul.bf16.gmra.mxu0 %v5608
      %v5733 = vpop.f32.mrf.mxu0
      %v5734 = vadd.f32 %v5634, %v5733
      %v5735 = vpop.f32.mrf.mxu0
      %v5736 = vadd.f32 %v5634, %v5735
      %5737 = vmatmul.bf16.gmra.mxu0 %v5609
      %v5738 = vpop.f32.mrf.mxu0
      %v5739 = vadd.f32 %v5634, %v5738
      %v5740 = vpop.f32.mrf.mxu0
      %v5741 = vadd.f32 %v5634, %v5740
      %5742 = vmatmul.bf16.gmra.mxu0 %v5610
      %v5743 = vpop.f32.mrf.mxu0
      %v5744 = vadd.f32 %v5634, %v5743
      %v5745 = vpop.f32.mrf.mxu0
      %v5746 = vadd.f32 %v5634, %v5745
      %5747 = vmatmul.bf16.gmra.mxu0 %v5611
      %v5748 = vpop.f32.mrf.mxu0
      %v5749 = vadd.f32 %v5634, %v5748
      %v5750 = vpop.f32.mrf.mxu0
      %v5751 = vadd.f32 %v5634, %v5750
      %5752 = vmatmul.bf16.gmra.mxu0 %v5612
      %v5753 = vpop.f32.mrf.mxu0
      %v5754 = vadd.f32 %v5634, %v5753
      %v5755 = vpop.f32.mrf.mxu0
      %v5756 = vadd.f32 %v5634, %v5755
      %5757 = vmatmul.bf16.gmra.mxu0 %v5613
      %v5758 = vpop.f32.mrf.mxu0
      %v5759 = vadd.f32 %v5634, %v5758
      %v5760 = vpop.f32.mrf.mxu0
      %v5761 = vadd.f32 %v5634, %v5760
      %5762 = vmatmul.bf16.gmra.mxu0 %v5614
      %v5763 = vpop.f32.mrf.mxu0
      %v5764 = vadd.f32 %v5634, %v5763
      %v5765 = vpop.f32.mrf.mxu0
      %v5766 = vadd.f32 %v5634, %v5765
      %5767 = vmatmul.bf16.gmra.mxu0 %v5615
      %v5768 = vpop.f32.mrf.mxu0
      %v5769 = vadd.f32 %v5634, %v5768
      %v5770 = vpop.f32.mrf.mxu0
      %v5771 = vadd.f32 %v5634, %v5770
      %5772 = vdwg.mxu0
      %v5773 = vld [vmem:[%s273] sm:$0xf]
      %v5774 = vld [vmem:[%s273 + $0x4] sm:$0xf]
      %v5775 = vld [vmem:[%s273 + $0x8] sm:$0xf]
      %v5776 = vld [vmem:[%s273 + $0xc] sm:$0xf]
      %v5777 = vld [vmem:[%s273 + $0x10] sm:$0xf]
      %v5778 = vld [vmem:[%s273 + $0x14] sm:$0xf]
      %v5779 = vld [vmem:[%s273 + $0x18] sm:$0xf]
      %v5780 = vld [vmem:[%s273 + $0x1c] sm:$0xf]
      %v5781 = vld [vmem:[%s273 + $0x20] sm:$0xf]
      %v5782 = vld [vmem:[%s273 + $0x24] sm:$0xf]
      %v5783 = vld [vmem:[%s273 + $0x28] sm:$0xf]
      %v5784 = vld [vmem:[%s273 + $0x2c] sm:$0xf]
      %v5785 = vld [vmem:[%s273 + $0x30] sm:$0xf]
      %v5786 = vld [vmem:[%s273 + $0x34] sm:$0xf]
      %v5787 = vld [vmem:[%s273 + $0x38] sm:$0xf]
      %v5788 = vld [vmem:[%s273 + $0x3c] sm:$0xf]
      %v5789 = vld [vmem:[%s273 + $0x40] sm:$0xf]
      %v5790 = vld [vmem:[%s273 + $0x44] sm:$0xf]
      %v5791 = vld [vmem:[%s273 + $0x48] sm:$0xf]
      %v5792 = vld [vmem:[%s273 + $0x4c] sm:$0xf]
      %v5793 = vld [vmem:[%s273 + $0x50] sm:$0xf]
      %v5794 = vld [vmem:[%s273 + $0x54] sm:$0xf]
      %v5795 = vld [vmem:[%s273 + $0x58] sm:$0xf]
      %v5796 = vld [vmem:[%s273 + $0x5c] sm:$0xf]
      %v5797 = vld [vmem:[%s273 + $0x60] sm:$0xf]
      %v5798 = vld [vmem:[%s273 + $0x64] sm:$0xf]
      %v5799 = vld [vmem:[%s273 + $0x68] sm:$0xf]
      %v5800 = vld [vmem:[%s273 + $0x6c] sm:$0xf]
      %v5801 = vld [vmem:[%s273 + $0x70] sm:$0xf]
      %v5802 = vld [vmem:[%s273 + $0x74] sm:$0xf]
      %v5803 = vld [vmem:[%s273 + $0x78] sm:$0xf]
      %v5804 = vld [vmem:[%s273 + $0x7c] sm:$0xf]
      %v5805 = vunpack.c.l.bf16 %v5773
      %v5806 = vunpack.c.l.bf16 %v5774
      %v5807 = vunpack.c.l.bf16 %v5775
      %v5808 = vunpack.c.l.bf16 %v5776
      %v5809 = vunpack.c.l.bf16 %v5777
      %v5810 = vunpack.c.l.bf16 %v5778
      %v5811 = vunpack.c.l.bf16 %v5779
      %v5812 = vunpack.c.l.bf16 %v5780
      %v5813 = vunpack.c.l.bf16 %v5781
      %v5814 = vunpack.c.l.bf16 %v5782
      %v5815 = vunpack.c.l.bf16 %v5783
      %v5816 = vunpack.c.l.bf16 %v5784
      %v5817 = vunpack.c.l.bf16 %v5785
      %v5818 = vunpack.c.l.bf16 %v5786
      %v5819 = vunpack.c.l.bf16 %v5787
      %v5820 = vunpack.c.l.bf16 %v5788
      %v5821 = vunpack.c.l.bf16 %v5789
      %v5822 = vunpack.c.l.bf16 %v5790
      %v5823 = vunpack.c.l.bf16 %v5791
      %v5824 = vunpack.c.l.bf16 %v5792
      %v5825 = vunpack.c.l.bf16 %v5793
      %v5826 = vunpack.c.l.bf16 %v5794
      %v5827 = vunpack.c.l.bf16 %v5795
      %v5828 = vunpack.c.l.bf16 %v5796
      %v5829 = vunpack.c.l.bf16 %v5797
      %v5830 = vunpack.c.l.bf16 %v5798
      %v5831 = vunpack.c.l.bf16 %v5799
      %v5832 = vunpack.c.l.bf16 %v5800
      %v5833 = vunpack.c.l.bf16 %v5801
      %v5834 = vunpack.c.l.bf16 %v5802
      %v5835 = vunpack.c.l.bf16 %v5803
      %v5836 = vunpack.c.l.bf16 %v5804
      %v5837 = vadd.f32 %v5694, %v5805
      %v5838 = vadd.f32 %v5696, %v5806
      %v5839 = vadd.f32 %v5699, %v5807
      %v5840 = vadd.f32 %v5701, %v5808
      %v5841 = vadd.f32 %v5704, %v5809
      %v5842 = vadd.f32 %v5706, %v5810
      %v5843 = vadd.f32 %v5709, %v5811
      %v5844 = vadd.f32 %v5711, %v5812
      %v5845 = vadd.f32 %v5714, %v5813
      %v5846 = vadd.f32 %v5716, %v5814
      %v5847 = vadd.f32 %v5719, %v5815
      %v5848 = vadd.f32 %v5721, %v5816
      %v5849 = vadd.f32 %v5724, %v5817
      %v5850 = vadd.f32 %v5726, %v5818
      %v5851 = vadd.f32 %v5729, %v5819
      %v5852 = vadd.f32 %v5731, %v5820
      %v5853 = vadd.f32 %v5734, %v5821
      %v5854 = vadd.f32 %v5736, %v5822
      %v5855 = vadd.f32 %v5739, %v5823
      %v5856 = vadd.f32 %v5741, %v5824
      %v5857 = vadd.f32 %v5744, %v5825
      %v5858 = vadd.f32 %v5746, %v5826
      %v5859 = vadd.f32 %v5749, %v5827
      %v5860 = vadd.f32 %v5751, %v5828
      %v5861 = vadd.f32 %v5754, %v5829
      %v5862 = vadd.f32 %v5756, %v5830
      %v5863 = vadd.f32 %v5759, %v5831
      %v5864 = vadd.f32 %v5761, %v5832
      %v5865 = vadd.f32 %v5764, %v5833
      %v5866 = vadd.f32 %v5766, %v5834
      %v5867 = vadd.f32 %v5769, %v5835
      %v5868 = vadd.f32 %v5771, %v5836
      %v5869 = vmax.f32 %v5837, 0.0
      %v5870 = vmax.f32 %v5838, 0.0
      %v5871 = vmax.f32 %v5839, 0.0
      %v5872 = vmax.f32 %v5840, 0.0
      %v5873 = vmax.f32 %v5841, 0.0
      %v5874 = vmax.f32 %v5842, 0.0
      %v5875 = vmax.f32 %v5843, 0.0
      %v5876 = vmax.f32 %v5844, 0.0
      %v5877 = vmax.f32 %v5845, 0.0
      %v5878 = vmax.f32 %v5846, 0.0
      %v5879 = vmax.f32 %v5847, 0.0
      %v5880 = vmax.f32 %v5848, 0.0
      %v5881 = vmax.f32 %v5849, 0.0
      %v5882 = vmax.f32 %v5850, 0.0
      %v5883 = vmax.f32 %v5851, 0.0
      %v5884 = vmax.f32 %v5852, 0.0
      %v5885 = vmax.f32 %v5853, 0.0
      %v5886 = vmax.f32 %v5854, 0.0
      %v5887 = vmax.f32 %v5855, 0.0
      %v5888 = vmax.f32 %v5856, 0.0
      %v5889 = vmax.f32 %v5857, 0.0
      %v5890 = vmax.f32 %v5858, 0.0
      %v5891 = vmax.f32 %v5859, 0.0
      %v5892 = vmax.f32 %v5860, 0.0
      %v5893 = vmax.f32 %v5861, 0.0
      %v5894 = vmax.f32 %v5862, 0.0
      %v5895 = vmax.f32 %v5863, 0.0
      %v5896 = vmax.f32 %v5864, 0.0
      %v5897 = vmax.f32 %v5865, 0.0
      %v5898 = vmax.f32 %v5866, 0.0
      %v5899 = vmax.f32 %v5867, 0.0
      %v5900 = vmax.f32 %v5868, 0.0
      %v5901 = vpack.c.bf16 %v5869, %v5869
      %v5902 = vpack.c.bf16 %v5870, %v5870
      %v5903 = vpack.c.bf16 %v5871, %v5871
      %v5904 = vpack.c.bf16 %v5872, %v5872
      %v5905 = vpack.c.bf16 %v5873, %v5873
      %v5906 = vpack.c.bf16 %v5874, %v5874
      %v5907 = vpack.c.bf16 %v5875, %v5875
      %v5908 = vpack.c.bf16 %v5876, %v5876
      %v5909 = vpack.c.bf16 %v5877, %v5877
      %v5910 = vpack.c.bf16 %v5878, %v5878
      %v5911 = vpack.c.bf16 %v5879, %v5879
      %v5912 = vpack.c.bf16 %v5880, %v5880
      %v5913 = vpack.c.bf16 %v5881, %v5881
      %v5914 = vpack.c.bf16 %v5882, %v5882
      %v5915 = vpack.c.bf16 %v5883, %v5883
      %v5916 = vpack.c.bf16 %v5884, %v5884
      %v5917 = vpack.c.bf16 %v5885, %v5885
      %v5918 = vpack.c.bf16 %v5886, %v5886
      %v5919 = vpack.c.bf16 %v5887, %v5887
      %v5920 = vpack.c.bf16 %v5888, %v5888
      %v5921 = vpack.c.bf16 %v5889, %v5889
      %v5922 = vpack.c.bf16 %v5890, %v5890
      %v5923 = vpack.c.bf16 %v5891, %v5891
      %v5924 = vpack.c.bf16 %v5892, %v5892
      %v5925 = vpack.c.bf16 %v5893, %v5893
      %v5926 = vpack.c.bf16 %v5894, %v5894
      %v5927 = vpack.c.bf16 %v5895, %v5895
      %v5928 = vpack.c.bf16 %v5896, %v5896
      %v5929 = vpack.c.bf16 %v5897, %v5897
      %v5930 = vpack.c.bf16 %v5898, %v5898
      %v5931 = vpack.c.bf16 %v5899, %v5899
      %v5932 = vpack.c.bf16 %v5900, %v5900
      %5933 = vst [vmem:[%s278] sm:$0xf] %v5901
      %5934 = vst [vmem:[%s278 + $0x4] sm:$0xf] %v5902
      %5935 = vst [vmem:[%s278 + $0x8] sm:$0xf] %v5903
      %5936 = vst [vmem:[%s278 + $0xc] sm:$0xf] %v5904
      %5937 = vst [vmem:[%s278 + $0x10] sm:$0xf] %v5905
      %5938 = vst [vmem:[%s278 + $0x14] sm:$0xf] %v5906
      %5939 = vst [vmem:[%s278 + $0x18] sm:$0xf] %v5907
      %5940 = vst [vmem:[%s278 + $0x1c] sm:$0xf] %v5908
      %5941 = vst [vmem:[%s278 + $0x20] sm:$0xf] %v5909
      %5942 = vst [vmem:[%s278 + $0x24] sm:$0xf] %v5910
      %5943 = vst [vmem:[%s278 + $0x28] sm:$0xf] %v5911
      %5944 = vst [vmem:[%s278 + $0x2c] sm:$0xf] %v5912
      %5945 = vst [vmem:[%s278 + $0x30] sm:$0xf] %v5913
      %5946 = vst [vmem:[%s278 + $0x34] sm:$0xf] %v5914
      %5947 = vst [vmem:[%s278 + $0x38] sm:$0xf] %v5915
      %5948 = vst [vmem:[%s278 + $0x3c] sm:$0xf] %v5916
      %5949 = vst [vmem:[%s278 + $0x40] sm:$0xf] %v5917
      %5950 = vst [vmem:[%s278 + $0x44] sm:$0xf] %v5918
      %5951 = vst [vmem:[%s278 + $0x48] sm:$0xf] %v5919
      %5952 = vst [vmem:[%s278 + $0x4c] sm:$0xf] %v5920
      %5953 = vst [vmem:[%s278 + $0x50] sm:$0xf] %v5921
      %5954 = vst [vmem:[%s278 + $0x54] sm:$0xf] %v5922
      %5955 = vst [vmem:[%s278 + $0x58] sm:$0xf] %v5923
      %5956 = vst [vmem:[%s278 + $0x5c] sm:$0xf] %v5924
      %5957 = vst [vmem:[%s278 + $0x60] sm:$0xf] %v5925
      %5958 = vst [vmem:[%s278 + $0x64] sm:$0xf] %v5926
      %5959 = vst [vmem:[%s278 + $0x68] sm:$0xf] %v5927
      %5960 = vst [vmem:[%s278 + $0x6c] sm:$0xf] %v5928
      %5961 = vst [vmem:[%s278 + $0x70] sm:$0xf] %v5929
      %5962 = vst [vmem:[%s278 + $0x74] sm:$0xf] %v5930
      %5963 = vst [vmem:[%s278 + $0x78] sm:$0xf] %v5931
      %5964 = vst [vmem:[%s278 + $0x7c] sm:$0xf] %v5932
      %p5965 = scmp.lt.s32.totalorder %s18, 1
      %s5966 = scalar_select %p5965, %s18, 1
      %s5967 = smul.addr %s5966, 32
      %s5968 = smul.addr %s5967, 4
      %s5969 = scalar_lea.vmem %s7, %s5968
      // Predicated region
      $region49: #{bottleneck_forward.1} parent=47 // pred_check
        %p5970 = pneg %p188
      $region50: #{bottleneck_forward.1} parent=47 // pred_check_branch
        %5972 = sbr.rel (%p5970) target = $region52
      $region51: #{bottleneck_forward.1} parent=47 // pred_region
        _
      $region52: #{bottleneck_forward.1} parent=47 // pred_fallthru
        _
    $region48: #{bottleneck_forward.1} parent=5 // pred_fallthru
      _
    %p5973 = scmp.le.s32.totalorder 2, %s13
    // Predicated region
    $region53: #{bottleneck_forward.1} parent=5 // pred_check
      %p5974 = pneg %p5973
    $region54: #{bottleneck_forward.1} parent=5 // pred_check_branch
      %5976 = sbr.rel (%p5974) target = $region56
    $region55: #{bottleneck_forward.1} parent=5 // pred_region
      %s5977 = ssub.s32 %s13, 2
      // Predicated region
      $region57: #{bottleneck_forward.1} parent=55 // pred_check
        %p5978 = pneg %p194
      $region58: #{bottleneck_forward.1} parent=55 // pred_check_branch
        %5980 = sbr.rel (%p5978) target = $region60
      $region59: #{bottleneck_forward.1} parent=55 // pred_region
        %p5981 = scmp.lt.s32.totalorder %s19, 1
        %s5982 = scalar_select %p5981, %s19, 1
        %s5983 = smul.addr %s5982, 32
        %s5984 = smul.addr %s5983, 4
        %s5985 = scalar_lea.vmem %s7, %s5984
      $region60: #{bottleneck_forward.1} parent=55 // pred_fallthru
        _
    $region56: #{bottleneck_forward.1} parent=5 // pred_fallthru
      _
  $region6: #{bottleneck_forward.1} parent=0 // loop_footer
    %s17 = sadd.s32 1, %s13
  $region7: #{bottleneck_forward.1} parent=0 // loop_footer_branch
    %12 = sbr.rel target = $region3
  $region8: #{bottleneck_forward.1} parent=0 // loop_exit
    _

</llo_original>
